<compile_context>
chip_gen: v7x
topology: tpu7x:2x2x1
jax: 0.10.0
libtpu: 0.0.40
codegen_flags: <defaults>
</compile_context>

<pallas_src>
import functools
import math

import jax
import jax.numpy as jnp
from jax.experimental import pallas as pl
from jax.experimental.pallas import tpu as pltpu

# ----- small synthetic BERT config -----
VOCAB = 100
HIDDEN = 32
N_LAYERS = 2
N_HEADS = 4
HEAD_DIM = HIDDEN // N_HEADS
FFN = 64
MAX_POS = 16
TYPE_VOCAB = 2
LN_EPS = 1e-12


# ---------------- fused per-batch encoder kernel ----------------

def _bert_kernel(ids_ref, msk_ref,                       # SMEM (B,S) int32 (scalar prefetch)
                 word_emb_ref, pos_emb_ref, type_emb_ref,
                 eg_ref, eb_ref,
                 wqkv_ref, bqkv_ref, wo_ref, bo_ref,
                 ln1g_ref, ln1b_ref, w1_ref, b1_ref,
                 w2_ref, b2_ref, ln2g_ref, ln2b_ref,
                 o_ref,                                  # VMEM (1,1,HIDDEN) CLS row
                 ctx_ref,                                # VMEM (HIDDEN, S) scratch
                 *, seq):
    b = pl.program_id(0)

    def layer_norm(x, g, bb):
        mu = jnp.mean(x, axis=-1, keepdims=True)
        xc = x - mu
        var = jnp.mean(xc * xc, axis=-1, keepdims=True)
        return xc * jax.lax.rsqrt(var + LN_EPS) * g + bb

    def gelu(y):
        # TODO(synk): HF BERT uses erf-GELU; tanh approximation is ~1e-3 close.
        return 0.5 * y * (1.0 + jnp.tanh(
            0.7978845608028654 * (y + 0.044715 * y * y * y)))

    # ---- embeddings: one-hot matmul gather (no dynamic VMEM indexing) ----
    row_idx = jax.lax.broadcasted_iota(jnp.int32, (seq, VOCAB), 0)
    col_idx = jax.lax.broadcasted_iota(jnp.int32, (seq, VOCAB), 1)
    key_pos = jax.lax.broadcasted_iota(jnp.int32, (1, seq), 1)
    ids_b = jnp.zeros((seq, VOCAB), jnp.int32)
    bias = jnp.zeros((1, seq), jnp.float32)
    for s in range(seq):                                  # seq == 8, tiny unroll
        tok = ids_ref[b, s]
        ids_b = jnp.where(row_idx == s, tok, ids_b)
        mval = jnp.where(msk_ref[b, s] > 0, 0.0, -1e9)    # additive key mask
        bias = jnp.where(key_pos == s, mval, bias)
    onehot = (col_idx == ids_b).astype(jnp.float32)       # (S, VOCAB)

    emb = jnp.dot(onehot, word_emb_ref[...],
                  preferred_element_type=jnp.float32)     # (S, H)
    # TODO(synk): token_type_ids hard-coded to 0 (reference never passes them).
    emb = emb + pos_emb_ref[0:seq, :] + type_emb_ref[0:1, :]
    h = layer_norm(emb, eg_ref[...], eb_ref[...])         # (S, H) f32

    scale = 1.0 / math.sqrt(HEAD_DIM)

    for l in range(N_LAYERS):                             # N_LAYERS == 2
        # ---- fused QKV projection -> transposed activations (3H, S) ----
        # weights stored (out, in); trans-B contraction, bf16 operands, f32 acc.
        hb = h.astype(jnp.bfloat16)
        qkv_t = jnp.einsum('od,sd->os', wqkv_ref[l], hb,
                           preferred_element_type=jnp.float32) + bqkv_ref[l]

        # ---- per-head attention; slices are 8-aligned sublane slices ----
        for hd in range(N_HEADS):
            r0 = hd * HEAD_DIM
            q_t = qkv_t[r0:r0 + HEAD_DIM, :]                          # (HD, S) f32
            k_t = qkv_t[HIDDEN + r0:HIDDEN + r0 + HEAD_DIM, :]
            v_t = qkv_t[2 * HIDDEN + r0:2 * HIDDEN + r0 + HEAD_DIM, :]

            s_ = jnp.einsum('dq,dk->qk', q_t, k_t,
                            preferred_element_type=jnp.float32) * scale
            s_ = s_ + bias                                            # mask keys
            m = jnp.max(s_, axis=-1, keepdims=True)
            p = jnp.exp(s_ - m)
            p = p / jnp.sum(p, axis=-1, keepdims=True)                # exact divide

            ctx_ref[r0:r0 + HEAD_DIM, :] = jnp.einsum(
                'dk,qk->dq', v_t.astype(jnp.bfloat16), p.astype(jnp.bfloat16),
                preferred_element_type=jnp.float32)                   # (HD, S)

        # ---- output projection + residual + LN ----
        attn = jnp.einsum('ds,do->so', ctx_ref[...], wo_ref[l],
                          preferred_element_type=jnp.float32) + bo_ref[l]
        h = layer_norm(attn + h, ln1g_ref[l], ln1b_ref[l])

        # ---- FFN ----
        ffn = gelu(jnp.dot(h.astype(jnp.bfloat16), w1_ref[l],
                           preferred_element_type=jnp.float32) + b1_ref[l])
        ffn = jnp.dot(ffn.astype(jnp.bfloat16), w2_ref[l],
                      preferred_element_type=jnp.float32) + b2_ref[l]
        h = layer_norm(ffn + h, ln2g_ref[l], ln2b_ref[l])

    # Pooler(pooler_type='cls'): emit only the CLS (first token) row.
    o_ref[0] = h[0:1, :]


# ---------------- parameter init (deterministic, synthetic) ----------------

def init_params(key):
    def lin(k, fan_in, fan_out):
        return jax.random.normal(k, (fan_in, fan_out), jnp.float32) * 0.02

    keys = jax.random.split(key, 3 + N_LAYERS)
    params = {
        "word_emb": jax.random.normal(keys[0], (VOCAB, HIDDEN), jnp.float32) * 0.02,
        "pos_emb": jax.random.normal(keys[1], (MAX_POS, HIDDEN), jnp.float32) * 0.02,
        "type_emb": jax.random.normal(keys[2], (TYPE_VOCAB, HIDDEN), jnp.float32) * 0.02,
        "emb_ln_g": jnp.ones((1, HIDDEN), jnp.float32),
        "emb_ln_b": jnp.zeros((1, HIDDEN), jnp.float32),
    }

    wqkv_t, bqkv_t, wo, bo = [], [], [], []
    ln1g, ln1b, w1, b1, w2, b2, ln2g, ln2b = [], [], [], [], [], [], [], []
    for li in range(N_LAYERS):
        lk = jax.random.split(keys[3 + li], 6)
        wq, wk, wv = lin(lk[0], HIDDEN, HIDDEN), lin(lk[1], HIDDEN, HIDDEN), lin(lk[2], HIDDEN, HIDDEN)
        wo_l, w1_l, w2_l = lin(lk[3], HIDDEN, HIDDEN), lin(lk[4], HIDDEN, FFN), lin(lk[5], FFN, HIDDEN)
        # QKV fused and stored transposed (out, in) so the kernel's projection
        # directly yields head-major (3H, S) activations (sublane head slices).
        wqkv_t.append(jnp.concatenate([wq, wk, wv], axis=1).T)       # (3H, H)
        bqkv_t.append(jnp.zeros((3 * HIDDEN, 1), jnp.float32))
        wo.append(wo_l); bo.append(jnp.zeros((1, HIDDEN), jnp.float32))
        w1.append(w1_l); b1.append(jnp.zeros((1, FFN), jnp.float32))
        w2.append(w2_l); b2.append(jnp.zeros((1, HIDDEN), jnp.float32))
        ln1g.append(jnp.ones((1, HIDDEN), jnp.float32)); ln1b.append(jnp.zeros((1, HIDDEN), jnp.float32))
        ln2g.append(jnp.ones((1, HIDDEN), jnp.float32)); ln2b.append(jnp.zeros((1, HIDDEN), jnp.float32))

    params.update({
        "wqkv_t": jnp.stack(wqkv_t).astype(jnp.bfloat16),
        "bqkv_t": jnp.stack(bqkv_t),
        "wo": jnp.stack(wo),                        # f32 (trans-A contraction kept f32)
        "bo": jnp.stack(bo),
        "ln1_g": jnp.stack(ln1g), "ln1_b": jnp.stack(ln1b),
        "w1": jnp.stack(w1).astype(jnp.bfloat16), "b1": jnp.stack(b1),
        "w2": jnp.stack(w2).astype(jnp.bfloat16), "b2": jnp.stack(b2),
        "ln2_g": jnp.stack(ln2g), "ln2_b": jnp.stack(ln2b),
    })
    return params


# ---------------- forward: MyBert(input_ids, attention_mask) ----------------

def mybert_forward(params, input_ids, attention_mask):
    B_, S_ = input_ids.shape

    weights = [
        params["word_emb"], params["pos_emb"], params["type_emb"],
        params["emb_ln_g"], params["emb_ln_b"],
        params["wqkv_t"], params["bqkv_t"], params["wo"], params["bo"],
        params["ln1_g"], params["ln1_b"], params["w1"], params["b1"],
        params["w2"], params["b2"], params["ln2_g"], params["ln2_b"],
    ]

    def _const_spec(a):
        nd = a.ndim
        return pl.BlockSpec(a.shape, lambda b, ids, msk, _n=nd: (0,) * _n)

    grid_spec = pltpu.PrefetchScalarGridSpec(
        num_scalar_prefetch=2,                 # input_ids, attention_mask -> SMEM
        grid=(B_,),
        in_specs=[_const_spec(w) for w in weights],
        out_specs=pl.BlockSpec((1, 1, HIDDEN), lambda b, ids, msk: (b, 0, 0)),
        scratch_shapes=[pltpu.VMEM((HIDDEN, S_), jnp.float32)],
    )

    out = pl.pallas_call(
        functools.partial(_bert_kernel, seq=S_),
        out_shape=jax.ShapeDtypeStruct((B_, 1, HIDDEN), jnp.float32),
        grid_spec=grid_spec,
        compiler_params=pltpu.CompilerParams(
            dimension_semantics=("parallel",)),   # batch rows across TCs on v7x
    )(input_ids.astype(jnp.int32), attention_mask.astype(jnp.int32), *weights)

    # Pooler(pooler_type='cls') -> last_hidden[:, 0]; kernel already emitted it.
    return out.reshape(B_, HIDDEN)


if __name__ == "__main__":
    B, S = 2, 8
    key = jax.random.PRNGKey(0)
    pkey, ikey = jax.random.split(key)
    params = init_params(pkey)

    input_ids = jax.random.randint(ikey, (B, S), 0, VOCAB, dtype=jnp.int32)
    attention_mask = jnp.array(
        [[1, 1, 1, 1, 1, 1, 1, 1],
         [1, 1, 1, 1, 1, 1, 0, 0]], dtype=jnp.int32)

    fwd = jax.jit(mybert_forward)
    out = jax.block_until_ready(fwd(params, input_ids, attention_mask))

    assert out.shape == (B, HIDDEN) and out.dtype == jnp.float32
    assert bool(jnp.all(jnp.isfinite(out)))
    print("KERNEL_OK")
</pallas_src>

<mosaic_0001>
module attributes {stable_mosaic.version = 11 : i64} {
  func.func @_bert_kernel(%arg0: i32, %arg1: memref<2x8xi32, #tpu.memory_space<smem>>, %arg2: memref<2x8xi32, #tpu.memory_space<smem>>, %arg3: memref<100x32xf32, #tpu.memory_space<vmem>>, %arg4: memref<16x32xf32, #tpu.memory_space<vmem>>, %arg5: memref<2x32xf32, #tpu.memory_space<vmem>>, %arg6: memref<1x32xf32, #tpu.memory_space<vmem>>, %arg7: memref<1x32xf32, #tpu.memory_space<vmem>>, %arg8: memref<2x96x32xbf16, #tpu.memory_space<vmem>>, %arg9: memref<2x96x1xf32, #tpu.memory_space<vmem>>, %arg10: memref<2x32x32xf32, #tpu.memory_space<vmem>>, %arg11: memref<2x1x32xf32, #tpu.memory_space<vmem>>, %arg12: memref<2x1x32xf32, #tpu.memory_space<vmem>>, %arg13: memref<2x1x32xf32, #tpu.memory_space<vmem>>, %arg14: memref<2x32x64xbf16, #tpu.memory_space<vmem>>, %arg15: memref<2x1x64xf32, #tpu.memory_space<vmem>>, %arg16: memref<2x64x32xbf16, #tpu.memory_space<vmem>>, %arg17: memref<2x1x32xf32, #tpu.memory_space<vmem>>, %arg18: memref<2x1x32xf32, #tpu.memory_space<vmem>>, %arg19: memref<2x1x32xf32, #tpu.memory_space<vmem>>, %arg20: memref<1x1x32xf32, #tpu.memory_space<vmem>>, %arg21: memref<32x8xf32, #tpu.memory_space<vmem>>) attributes {dimension_semantics = [#tpu.dimension_semantics<parallel>], iteration_bounds = array<i64: 2>, scalar_prefetch = 2 : i64, scratch_operands = 1 : i64, tpu.core_type = #tpu.core_type<tc>, window_params = [{pipeline_mode = #tpu.pipeline_mode<synchronous>, transform_indices = @transform_0, window_bounds = array<i64: 100, 32>}, {pipeline_mode = #tpu.pipeline_mode<synchronous>, transform_indices = @transform_1, window_bounds = array<i64: 16, 32>}, {pipeline_mode = #tpu.pipeline_mode<synchronous>, transform_indices = @transform_2, window_bounds = array<i64: 2, 32>}, {pipeline_mode = #tpu.pipeline_mode<synchronous>, transform_indices = @transform_3, window_bounds = array<i64: 1, 32>}, {pipeline_mode = #tpu.pipeline_mode<synchronous>, transform_indices = @transform_4, window_bounds = array<i64: 1, 32>}, {pipeline_mode = #tpu.pipeline_mode<synchronous>, transform_indices = @transform_5, window_bounds = array<i64: 2, 96, 32>}, {pipeline_mode = #tpu.pipeline_mode<synchronous>, transform_indices = @transform_6, window_bounds = array<i64: 2, 96, 1>}, {pipeline_mode = #tpu.pipeline_mode<synchronous>, transform_indices = @transform_7, window_bounds = array<i64: 2, 32, 32>}, {pipeline_mode = #tpu.pipeline_mode<synchronous>, transform_indices = @transform_8, window_bounds = array<i64: 2, 1, 32>}, {pipeline_mode = #tpu.pipeline_mode<synchronous>, transform_indices = @transform_9, window_bounds = array<i64: 2, 1, 32>}, {pipeline_mode = #tpu.pipeline_mode<synchronous>, transform_indices = @transform_10, window_bounds = array<i64: 2, 1, 32>}, {pipeline_mode = #tpu.pipeline_mode<synchronous>, transform_indices = @transform_11, window_bounds = array<i64: 2, 32, 64>}, {pipeline_mode = #tpu.pipeline_mode<synchronous>, transform_indices = @transform_12, window_bounds = array<i64: 2, 1, 64>}, {pipeline_mode = #tpu.pipeline_mode<synchronous>, transform_indices = @transform_13, window_bounds = array<i64: 2, 64, 32>}, {pipeline_mode = #tpu.pipeline_mode<synchronous>, transform_indices = @transform_14, window_bounds = array<i64: 2, 1, 32>}, {pipeline_mode = #tpu.pipeline_mode<synchronous>, transform_indices = @transform_15, window_bounds = array<i64: 2, 1, 32>}, {pipeline_mode = #tpu.pipeline_mode<synchronous>, transform_indices = @transform_16, window_bounds = array<i64: 2, 1, 32>}, {transform_indices = @transform_17, window_bounds = array<i64: 1, 1, 32>}]} {
    %0 = tpu.iota {dimensions = array<i32: 0>} : vector<8x100xi32>
    %1 = tpu.iota {dimensions = array<i32: 1>} : vector<8x100xi32>
    %2 = tpu.iota {dimensions = array<i32: 1>} : vector<1x8xi32>
    %c0_i32 = arith.constant 0 : i32
    %3 = vector.broadcast %c0_i32 : i32 to vector<8x100xi32>
    %cst = arith.constant 0.000000e+00 : f32
    %4 = vector.broadcast %cst : f32 to vector<1x8xf32>
    %5 = arith.index_cast %arg0 : i32 to index
    %c0 = arith.constant 0 : index
    %6 = memref.load %arg1[%5, %c0] : memref<2x8xi32, #tpu.memory_space<smem>>
    %c0_i32_0 = arith.constant 0 : i32
    %7 = vector.broadcast %c0_i32_0 : i32 to vector<8x100xi32>
    %8 = arith.cmpi eq, %0, %7 : vector<8x100xi32>
    %9 = vector.broadcast %6 : i32 to vector<8x100xi32>
    %10 = arith.select %8, %9, %3 : vector<8x100xi1>, vector<8x100xi32>
    %11 = arith.index_cast %arg0 : i32 to index
    %c0_1 = arith.constant 0 : index
    %12 = memref.load %arg2[%11, %c0_1] : memref<2x8xi32, #tpu.memory_space<smem>>
    %c0_i32_2 = arith.constant 0 : i32
    %13 = arith.cmpi sgt, %12, %c0_i32_2 : i32
    %cst_3 = arith.constant 0.000000e+00 : f32
    %cst_4 = arith.constant -1.000000e+09 : f32
    %14 = arith.select %13, %cst_3, %cst_4 : f32
    %c0_i32_5 = arith.constant 0 : i32
    %15 = vector.broadcast %c0_i32_5 : i32 to vector<1x8xi32>
    %16 = arith.cmpi eq, %2, %15 : vector<1x8xi32>
    %17 = vector.broadcast %14 : f32 to vector<1x8xf32>
    %18 = arith.select %16, %17, %4 : vector<1x8xi1>, vector<1x8xf32>
    %19 = arith.index_cast %arg0 : i32 to index
    %c1 = arith.constant 1 : index
    %20 = memref.load %arg1[%19, %c1] : memref<2x8xi32, #tpu.memory_space<smem>>
    %c1_i32 = arith.constant 1 : i32
    %21 = vector.broadcast %c1_i32 : i32 to vector<8x100xi32>
    %22 = arith.cmpi eq, %0, %21 : vector<8x100xi32>
    %23 = vector.broadcast %20 : i32 to vector<8x100xi32>
    %24 = arith.select %22, %23, %10 : vector<8x100xi1>, vector<8x100xi32>
    %25 = arith.index_cast %arg0 : i32 to index
    %c1_6 = arith.constant 1 : index
    %26 = memref.load %arg2[%25, %c1_6] : memref<2x8xi32, #tpu.memory_space<smem>>
    %c0_i32_7 = arith.constant 0 : i32
    %27 = arith.cmpi sgt, %26, %c0_i32_7 : i32
    %cst_8 = arith.constant 0.000000e+00 : f32
    %cst_9 = arith.constant -1.000000e+09 : f32
    %28 = arith.select %27, %cst_8, %cst_9 : f32
    %c1_i32_10 = arith.constant 1 : i32
    %29 = vector.broadcast %c1_i32_10 : i32 to vector<1x8xi32>
    %30 = arith.cmpi eq, %2, %29 : vector<1x8xi32>
    %31 = vector.broadcast %28 : f32 to vector<1x8xf32>
    %32 = arith.select %30, %31, %18 : vector<1x8xi1>, vector<1x8xf32>
    %33 = arith.index_cast %arg0 : i32 to index
    %c2 = arith.constant 2 : index
    %34 = memref.load %arg1[%33, %c2] : memref<2x8xi32, #tpu.memory_space<smem>>
    %c2_i32 = arith.constant 2 : i32
    %35 = vector.broadcast %c2_i32 : i32 to vector<8x100xi32>
    %36 = arith.cmpi eq, %0, %35 : vector<8x100xi32>
    %37 = vector.broadcast %34 : i32 to vector<8x100xi32>
    %38 = arith.select %36, %37, %24 : vector<8x100xi1>, vector<8x100xi32>
    %39 = arith.index_cast %arg0 : i32 to index
    %c2_11 = arith.constant 2 : index
    %40 = memref.load %arg2[%39, %c2_11] : memref<2x8xi32, #tpu.memory_space<smem>>
    %c0_i32_12 = arith.constant 0 : i32
    %41 = arith.cmpi sgt, %40, %c0_i32_12 : i32
    %cst_13 = arith.constant 0.000000e+00 : f32
    %cst_14 = arith.constant -1.000000e+09 : f32
    %42 = arith.select %41, %cst_13, %cst_14 : f32
    %c2_i32_15 = arith.constant 2 : i32
    %43 = vector.broadcast %c2_i32_15 : i32 to vector<1x8xi32>
    %44 = arith.cmpi eq, %2, %43 : vector<1x8xi32>
    %45 = vector.broadcast %42 : f32 to vector<1x8xf32>
    %46 = arith.select %44, %45, %32 : vector<1x8xi1>, vector<1x8xf32>
    %47 = arith.index_cast %arg0 : i32 to index
    %c3 = arith.constant 3 : index
    %48 = memref.load %arg1[%47, %c3] : memref<2x8xi32, #tpu.memory_space<smem>>
    %c3_i32 = arith.constant 3 : i32
    %49 = vector.broadcast %c3_i32 : i32 to vector<8x100xi32>
    %50 = arith.cmpi eq, %0, %49 : vector<8x100xi32>
    %51 = vector.broadcast %48 : i32 to vector<8x100xi32>
    %52 = arith.select %50, %51, %38 : vector<8x100xi1>, vector<8x100xi32>
    %53 = arith.index_cast %arg0 : i32 to index
    %c3_16 = arith.constant 3 : index
    %54 = memref.load %arg2[%53, %c3_16] : memref<2x8xi32, #tpu.memory_space<smem>>
    %c0_i32_17 = arith.constant 0 : i32
    %55 = arith.cmpi sgt, %54, %c0_i32_17 : i32
    %cst_18 = arith.constant 0.000000e+00 : f32
    %cst_19 = arith.constant -1.000000e+09 : f32
    %56 = arith.select %55, %cst_18, %cst_19 : f32
    %c3_i32_20 = arith.constant 3 : i32
    %57 = vector.broadcast %c3_i32_20 : i32 to vector<1x8xi32>
    %58 = arith.cmpi eq, %2, %57 : vector<1x8xi32>
    %59 = vector.broadcast %56 : f32 to vector<1x8xf32>
    %60 = arith.select %58, %59, %46 : vector<1x8xi1>, vector<1x8xf32>
    %61 = arith.index_cast %arg0 : i32 to index
    %c4 = arith.constant 4 : index
    %62 = memref.load %arg1[%61, %c4] : memref<2x8xi32, #tpu.memory_space<smem>>
    %c4_i32 = arith.constant 4 : i32
    %63 = vector.broadcast %c4_i32 : i32 to vector<8x100xi32>
    %64 = arith.cmpi eq, %0, %63 : vector<8x100xi32>
    %65 = vector.broadcast %62 : i32 to vector<8x100xi32>
    %66 = arith.select %64, %65, %52 : vector<8x100xi1>, vector<8x100xi32>
    %67 = arith.index_cast %arg0 : i32 to index
    %c4_21 = arith.constant 4 : index
    %68 = memref.load %arg2[%67, %c4_21] : memref<2x8xi32, #tpu.memory_space<smem>>
    %c0_i32_22 = arith.constant 0 : i32
    %69 = arith.cmpi sgt, %68, %c0_i32_22 : i32
    %cst_23 = arith.constant 0.000000e+00 : f32
    %cst_24 = arith.constant -1.000000e+09 : f32
    %70 = arith.select %69, %cst_23, %cst_24 : f32
    %c4_i32_25 = arith.constant 4 : i32
    %71 = vector.broadcast %c4_i32_25 : i32 to vector<1x8xi32>
    %72 = arith.cmpi eq, %2, %71 : vector<1x8xi32>
    %73 = vector.broadcast %70 : f32 to vector<1x8xf32>
    %74 = arith.select %72, %73, %60 : vector<1x8xi1>, vector<1x8xf32>
    %75 = arith.index_cast %arg0 : i32 to index
    %c5 = arith.constant 5 : index
    %76 = memref.load %arg1[%75, %c5] : memref<2x8xi32, #tpu.memory_space<smem>>
    %c5_i32 = arith.constant 5 : i32
    %77 = vector.broadcast %c5_i32 : i32 to vector<8x100xi32>
    %78 = arith.cmpi eq, %0, %77 : vector<8x100xi32>
    %79 = vector.broadcast %76 : i32 to vector<8x100xi32>
    %80 = arith.select %78, %79, %66 : vector<8x100xi1>, vector<8x100xi32>
    %81 = arith.index_cast %arg0 : i32 to index
    %c5_26 = arith.constant 5 : index
    %82 = memref.load %arg2[%81, %c5_26] : memref<2x8xi32, #tpu.memory_space<smem>>
    %c0_i32_27 = arith.constant 0 : i32
    %83 = arith.cmpi sgt, %82, %c0_i32_27 : i32
    %cst_28 = arith.constant 0.000000e+00 : f32
    %cst_29 = arith.constant -1.000000e+09 : f32
    %84 = arith.select %83, %cst_28, %cst_29 : f32
    %c5_i32_30 = arith.constant 5 : i32
    %85 = vector.broadcast %c5_i32_30 : i32 to vector<1x8xi32>
    %86 = arith.cmpi eq, %2, %85 : vector<1x8xi32>
    %87 = vector.broadcast %84 : f32 to vector<1x8xf32>
    %88 = arith.select %86, %87, %74 : vector<1x8xi1>, vector<1x8xf32>
    %89 = arith.index_cast %arg0 : i32 to index
    %c6 = arith.constant 6 : index
    %90 = memref.load %arg1[%89, %c6] : memref<2x8xi32, #tpu.memory_space<smem>>
    %c6_i32 = arith.constant 6 : i32
    %91 = vector.broadcast %c6_i32 : i32 to vector<8x100xi32>
    %92 = arith.cmpi eq, %0, %91 : vector<8x100xi32>
    %93 = vector.broadcast %90 : i32 to vector<8x100xi32>
    %94 = arith.select %92, %93, %80 : vector<8x100xi1>, vector<8x100xi32>
    %95 = arith.index_cast %arg0 : i32 to index
    %c6_31 = arith.constant 6 : index
    %96 = memref.load %arg2[%95, %c6_31] : memref<2x8xi32, #tpu.memory_space<smem>>
    %c0_i32_32 = arith.constant 0 : i32
    %97 = arith.cmpi sgt, %96, %c0_i32_32 : i32
    %cst_33 = arith.constant 0.000000e+00 : f32
    %cst_34 = arith.constant -1.000000e+09 : f32
    %98 = arith.select %97, %cst_33, %cst_34 : f32
    %c6_i32_35 = arith.constant 6 : i32
    %99 = vector.broadcast %c6_i32_35 : i32 to vector<1x8xi32>
    %100 = arith.cmpi eq, %2, %99 : vector<1x8xi32>
    %101 = vector.broadcast %98 : f32 to vector<1x8xf32>
    %102 = arith.select %100, %101, %88 : vector<1x8xi1>, vector<1x8xf32>
    %103 = arith.index_cast %arg0 : i32 to index
    %c7 = arith.constant 7 : index
    %104 = memref.load %arg1[%103, %c7] : memref<2x8xi32, #tpu.memory_space<smem>>
    %c7_i32 = arith.constant 7 : i32
    %105 = vector.broadcast %c7_i32 : i32 to vector<8x100xi32>
    %106 = arith.cmpi eq, %0, %105 : vector<8x100xi32>
    %107 = vector.broadcast %104 : i32 to vector<8x100xi32>
    %108 = arith.select %106, %107, %94 : vector<8x100xi1>, vector<8x100xi32>
    %109 = arith.index_cast %arg0 : i32 to index
    %c7_36 = arith.constant 7 : index
    %110 = memref.load %arg2[%109, %c7_36] : memref<2x8xi32, #tpu.memory_space<smem>>
    %c0_i32_37 = arith.constant 0 : i32
    %111 = arith.cmpi sgt, %110, %c0_i32_37 : i32
    %cst_38 = arith.constant 0.000000e+00 : f32
    %cst_39 = arith.constant -1.000000e+09 : f32
    %112 = arith.select %111, %cst_38, %cst_39 : f32
    %c7_i32_40 = arith.constant 7 : i32
    %113 = vector.broadcast %c7_i32_40 : i32 to vector<1x8xi32>
    %114 = arith.cmpi eq, %2, %113 : vector<1x8xi32>
    %115 = vector.broadcast %112 : f32 to vector<1x8xf32>
    %116 = arith.select %114, %115, %102 : vector<1x8xi1>, vector<1x8xf32>
    %117 = arith.cmpi eq, %1, %108 : vector<8x100xi32>
    %118 = arith.extui %117 : vector<8x100xi1> to vector<8x100xi32>
    %119 = arith.sitofp %118 : vector<8x100xi32> to vector<8x100xf32>
    %c0_41 = arith.constant 0 : index
    %c0_42 = arith.constant 0 : index
    %120 = vector.load %arg3[%c0_41, %c0_42] : memref<100x32xf32, #tpu.memory_space<vmem>>, vector<100x32xf32>
    %cst_43 = arith.constant dense<0.000000e+00> : vector<8x32xf32>
    %121 = tpu.matmul %119, %120, %cst_43 {dimension_numbers = #tpu.dot_dimension_numbers<[1], [0], [0], [1], [0, 0, 1, 1], [], []>} : vector<8x100xf32>, vector<100x32xf32>, vector<8x32xf32> -> vector<8x32xf32>
    %c0_44 = arith.constant 0 : index
    %c0_45 = arith.constant 0 : index
    %122 = vector.load %arg4[%c0_44, %c0_45] : memref<16x32xf32, #tpu.memory_space<vmem>>, vector<8x32xf32>
    %123 = arith.addf %121, %122 : vector<8x32xf32>
    %c0_46 = arith.constant 0 : index
    %c0_47 = arith.constant 0 : index
    %124 = vector.load %arg5[%c0_46, %c0_47] : memref<2x32xf32, #tpu.memory_space<vmem>>, vector<1x32xf32>
    %125 = vector.broadcast %124 : vector<1x32xf32> to vector<8x32xf32>
    %126 = arith.addf %123, %125 : vector<8x32xf32>
    %c0_48 = arith.constant 0 : index
    %c0_49 = arith.constant 0 : index
    %127 = vector.load %arg6[%c0_48, %c0_49] : memref<1x32xf32, #tpu.memory_space<vmem>>, vector<1x32xf32>
    %c0_50 = arith.constant 0 : index
    %c0_51 = arith.constant 0 : index
    %128 = vector.load %arg7[%c0_50, %c0_51] : memref<1x32xf32, #tpu.memory_space<vmem>>, vector<1x32xf32>
    %cst_52 = arith.constant dense<0.000000e+00> : vector<8xf32>
    %129 = vector.multi_reduction <add>, %126, %cst_52 [1] : vector<8x32xf32> to vector<8xf32>
    %130 = vector.shape_cast %129 : vector<8xf32> to vector<8x1xf32>
    %cst_53 = arith.constant 3.200000e+01 : f32
    %131 = vector.broadcast %cst_53 : f32 to vector<8x1xf32>
    %132 = arith.divf %130, %131 : vector<8x1xf32>
    %133 = vector.broadcast %132 : vector<8x1xf32> to vector<8x32xf32>
    %134 = arith.subf %126, %133 : vector<8x32xf32>
    %135 = arith.mulf %134, %134 : vector<8x32xf32>
    %cst_54 = arith.constant dense<0.000000e+00> : vector<8xf32>
    %136 = vector.multi_reduction <add>, %135, %cst_54 [1] : vector<8x32xf32> to vector<8xf32>
    %137 = vector.shape_cast %136 : vector<8xf32> to vector<8x1xf32>
    %cst_55 = arith.constant 3.200000e+01 : f32
    %138 = vector.broadcast %cst_55 : f32 to vector<8x1xf32>
    %139 = arith.divf %137, %138 : vector<8x1xf32>
    %cst_56 = arith.constant 9.99999996E-13 : f32
    %140 = vector.broadcast %cst_56 : f32 to vector<8x1xf32>
    %141 = arith.addf %139, %140 : vector<8x1xf32>
    %142 = math.rsqrt %141 : vector<8x1xf32>
    %143 = vector.broadcast %142 : vector<8x1xf32> to vector<8x32xf32>
    %144 = arith.mulf %134, %143 : vector<8x32xf32>
    %145 = vector.broadcast %127 : vector<1x32xf32> to vector<8x32xf32>
    %146 = arith.mulf %144, %145 : vector<8x32xf32>
    %147 = vector.broadcast %128 : vector<1x32xf32> to vector<8x32xf32>
    %148 = arith.addf %146, %147 : vector<8x32xf32>
    %149 = arith.truncf %148 : vector<8x32xf32> to vector<8x32xbf16>
    %c0_57 = arith.constant 0 : index
    %c0_58 = arith.constant 0 : index
    %c0_59 = arith.constant 0 : index
    %150 = vector.load %arg8[%c0_57, %c0_58, %c0_59] : memref<2x96x32xbf16, #tpu.memory_space<vmem>>, vector<1x96x32xbf16>
    %151 = vector.shape_cast %150 : vector<1x96x32xbf16> to vector<96x32xbf16>
    "tpu.trace_start"() <{level = 10 : i32, message = "od,sd->os"}> : () -> ()
    %cst_60 = arith.constant dense<0.000000e+00> : vector<96x8xf32>
    %152 = tpu.matmul %151, %149, %cst_60 {dimension_numbers = #tpu.dot_dimension_numbers<[1], [1], [0], [0], [0, 0, 1, 0], [], []>} : vector<96x32xbf16>, vector<8x32xbf16>, vector<96x8xf32> -> vector<96x8xf32>
    "tpu.trace_stop"() : () -> ()
    %c0_61 = arith.constant 0 : index
    %c0_62 = arith.constant 0 : index
    %c0_63 = arith.constant 0 : index
    %153 = vector.load %arg9[%c0_61, %c0_62, %c0_63] : memref<2x96x1xf32, #tpu.memory_space<vmem>>, vector<1x96x1xf32>
    %154 = vector.shape_cast %153 : vector<1x96x1xf32> to vector<96x1xf32>
    %155 = vector.broadcast %154 : vector<96x1xf32> to vector<96x8xf32>
    %156 = arith.addf %152, %155 : vector<96x8xf32>
    %157 = vector.extract_strided_slice %156 {offsets = [0, 0], sizes = [8, 8], strides = [1, 1]} : vector<96x8xf32> to vector<8x8xf32>
    %158 = vector.extract_strided_slice %156 {offsets = [32, 0], sizes = [8, 8], strides = [1, 1]} : vector<96x8xf32> to vector<8x8xf32>
    %159 = vector.extract_strided_slice %156 {offsets = [64, 0], sizes = [8, 8], strides = [1, 1]} : vector<96x8xf32> to vector<8x8xf32>
    "tpu.trace_start"() <{level = 10 : i32, message = "dq,dk->qk"}> : () -> ()
    %cst_64 = arith.constant dense<0.000000e+00> : vector<8x8xf32>
    %160 = tpu.matmul %157, %158, %cst_64 {dimension_numbers = #tpu.dot_dimension_numbers<[0], [0], [1], [1], [0, 1, 1, 1], [], []>} : vector<8x8xf32>, vector<8x8xf32>, vector<8x8xf32> -> vector<8x8xf32>
    "tpu.trace_stop"() : () -> ()
    %cst_65 = arith.constant 0.353553385 : f32
    %161 = vector.broadcast %cst_65 : f32 to vector<8x8xf32>
    %162 = arith.mulf %160, %161 : vector<8x8xf32>
    %163 = vector.broadcast %116 : vector<1x8xf32> to vector<8x8xf32>
    %164 = arith.addf %162, %163 : vector<8x8xf32>
    %cst_66 = arith.constant dense<0xFF800000> : vector<8xf32>
    %165 = vector.multi_reduction <maximumf>, %164, %cst_66 [1] : vector<8x8xf32> to vector<8xf32>
    %166 = vector.shape_cast %165 : vector<8xf32> to vector<8x1xf32>
    %167 = vector.broadcast %166 : vector<8x1xf32> to vector<8x8xf32>
    %168 = arith.subf %164, %167 : vector<8x8xf32>
    %169 = math.exp %168 : vector<8x8xf32>
    %cst_67 = arith.constant dense<0.000000e+00> : vector<8xf32>
    %170 = vector.multi_reduction <add>, %169, %cst_67 [1] : vector<8x8xf32> to vector<8xf32>
    %171 = vector.shape_cast %170 : vector<8xf32> to vector<8x1xf32>
    %172 = vector.broadcast %171 : vector<8x1xf32> to vector<8x8xf32>
    %173 = arith.divf %169, %172 : vector<8x8xf32>
    %174 = arith.truncf %159 : vector<8x8xf32> to vector<8x8xbf16>
    %175 = arith.truncf %173 : vector<8x8xf32> to vector<8x8xbf16>
    "tpu.trace_start"() <{level = 10 : i32, message = "dk,qk->dq"}> : () -> ()
    %cst_68 = arith.constant dense<0.000000e+00> : vector<8x8xf32>
    %176 = tpu.matmul %174, %175, %cst_68 {dimension_numbers = #tpu.dot_dimension_numbers<[1], [1], [0], [0], [0, 0, 1, 0], [], []>} : vector<8x8xbf16>, vector<8x8xbf16>, vector<8x8xf32> -> vector<8x8xf32>
    "tpu.trace_stop"() : () -> ()
    %c0_69 = arith.constant 0 : index
    %c0_70 = arith.constant 0 : index
    %177 = vector.load %arg21[%c0_69, %c0_70] : memref<32x8xf32, #tpu.memory_space<vmem>>, vector<8x8xf32>
    tpu.vector_store %arg21[%c0_69, %c0_70], %176 {strides = array<i32>} : memref<32x8xf32, #tpu.memory_space<vmem>>, vector<8x8xf32>,
    %178 = vector.extract_strided_slice %156 {offsets = [8, 0], sizes = [8, 8], strides = [1, 1]} : vector<96x8xf32> to vector<8x8xf32>
    %179 = vector.extract_strided_slice %156 {offsets = [40, 0], sizes = [8, 8], strides = [1, 1]} : vector<96x8xf32> to vector<8x8xf32>
    %180 = vector.extract_strided_slice %156 {offsets = [72, 0], sizes = [8, 8], strides = [1, 1]} : vector<96x8xf32> to vector<8x8xf32>
    "tpu.trace_start"() <{level = 10 : i32, message = "dq,dk->qk"}> : () -> ()
    %cst_71 = arith.constant dense<0.000000e+00> : vector<8x8xf32>
    %181 = tpu.matmul %178, %179, %cst_71 {dimension_numbers = #tpu.dot_dimension_numbers<[0], [0], [1], [1], [0, 1, 1, 1], [], []>} : vector<8x8xf32>, vector<8x8xf32>, vector<8x8xf32> -> vector<8x8xf32>
    "tpu.trace_stop"() : () -> ()
    %cst_72 = arith.constant 0.353553385 : f32
    %182 = vector.broadcast %cst_72 : f32 to vector<8x8xf32>
    %183 = arith.mulf %181, %182 : vector<8x8xf32>
    %184 = vector.broadcast %116 : vector<1x8xf32> to vector<8x8xf32>
    %185 = arith.addf %183, %184 : vector<8x8xf32>
    %cst_73 = arith.constant dense<0xFF800000> : vector<8xf32>
    %186 = vector.multi_reduction <maximumf>, %185, %cst_73 [1] : vector<8x8xf32> to vector<8xf32>
    %187 = vector.shape_cast %186 : vector<8xf32> to vector<8x1xf32>
    %188 = vector.broadcast %187 : vector<8x1xf32> to vector<8x8xf32>
    %189 = arith.subf %185, %188 : vector<8x8xf32>
    %190 = math.exp %189 : vector<8x8xf32>
    %cst_74 = arith.constant dense<0.000000e+00> : vector<8xf32>
    %191 = vector.multi_reduction <add>, %190, %cst_74 [1] : vector<8x8xf32> to vector<8xf32>
    %192 = vector.shape_cast %191 : vector<8xf32> to vector<8x1xf32>
    %193 = vector.broadcast %192 : vector<8x1xf32> to vector<8x8xf32>
    %194 = arith.divf %190, %193 : vector<8x8xf32>
    %195 = arith.truncf %180 : vector<8x8xf32> to vector<8x8xbf16>
    %196 = arith.truncf %194 : vector<8x8xf32> to vector<8x8xbf16>
    "tpu.trace_start"() <{level = 10 : i32, message = "dk,qk->dq"}> : () -> ()
    %cst_75 = arith.constant dense<0.000000e+00> : vector<8x8xf32>
    %197 = tpu.matmul %195, %196, %cst_75 {dimension_numbers = #tpu.dot_dimension_numbers<[1], [1], [0], [0], [0, 0, 1, 0], [], []>} : vector<8x8xbf16>, vector<8x8xbf16>, vector<8x8xf32> -> vector<8x8xf32>
    "tpu.trace_stop"() : () -> ()
    %c8 = arith.constant 8 : index
    %c0_76 = arith.constant 0 : index
    %198 = vector.load %arg21[%c8, %c0_76] : memref<32x8xf32, #tpu.memory_space<vmem>>, vector<8x8xf32>
    tpu.vector_store %arg21[%c8, %c0_76], %197 {strides = array<i32>} : memref<32x8xf32, #tpu.memory_space<vmem>>, vector<8x8xf32>,
    %199 = vector.extract_strided_slice %156 {offsets = [16, 0], sizes = [8, 8], strides = [1, 1]} : vector<96x8xf32> to vector<8x8xf32>
    %200 = vector.extract_strided_slice %156 {offsets = [48, 0], sizes = [8, 8], strides = [1, 1]} : vector<96x8xf32> to vector<8x8xf32>
    %201 = vector.extract_strided_slice %156 {offsets = [80, 0], sizes = [8, 8], strides = [1, 1]} : vector<96x8xf32> to vector<8x8xf32>
    "tpu.trace_start"() <{level = 10 : i32, message = "dq,dk->qk"}> : () -> ()
    %cst_77 = arith.constant dense<0.000000e+00> : vector<8x8xf32>
    %202 = tpu.matmul %199, %200, %cst_77 {dimension_numbers = #tpu.dot_dimension_numbers<[0], [0], [1], [1], [0, 1, 1, 1], [], []>} : vector<8x8xf32>, vector<8x8xf32>, vector<8x8xf32> -> vector<8x8xf32>
    "tpu.trace_stop"() : () -> ()
    %cst_78 = arith.constant 0.353553385 : f32
    %203 = vector.broadcast %cst_78 : f32 to vector<8x8xf32>
    %204 = arith.mulf %202, %203 : vector<8x8xf32>
    %205 = vector.broadcast %116 : vector<1x8xf32> to vector<8x8xf32>
    %206 = arith.addf %204, %205 : vector<8x8xf32>
    %cst_79 = arith.constant dense<0xFF800000> : vector<8xf32>
    %207 = vector.multi_reduction <maximumf>, %206, %cst_79 [1] : vector<8x8xf32> to vector<8xf32>
    %208 = vector.shape_cast %207 : vector<8xf32> to vector<8x1xf32>
    %209 = vector.broadcast %208 : vector<8x1xf32> to vector<8x8xf32>
    %210 = arith.subf %206, %209 : vector<8x8xf32>
    %211 = math.exp %210 : vector<8x8xf32>
    %cst_80 = arith.constant dense<0.000000e+00> : vector<8xf32>
    %212 = vector.multi_reduction <add>, %211, %cst_80 [1] : vector<8x8xf32> to vector<8xf32>
    %213 = vector.shape_cast %212 : vector<8xf32> to vector<8x1xf32>
    %214 = vector.broadcast %213 : vector<8x1xf32> to vector<8x8xf32>
    %215 = arith.divf %211, %214 : vector<8x8xf32>
    %216 = arith.truncf %201 : vector<8x8xf32> to vector<8x8xbf16>
    %217 = arith.truncf %215 : vector<8x8xf32> to vector<8x8xbf16>
    "tpu.trace_start"() <{level = 10 : i32, message = "dk,qk->dq"}> : () -> ()
    %cst_81 = arith.constant dense<0.000000e+00> : vector<8x8xf32>
    %218 = tpu.matmul %216, %217, %cst_81 {dimension_numbers = #tpu.dot_dimension_numbers<[1], [1], [0], [0], [0, 0, 1, 0], [], []>} : vector<8x8xbf16>, vector<8x8xbf16>, vector<8x8xf32> -> vector<8x8xf32>
    "tpu.trace_stop"() : () -> ()
    %c16 = arith.constant 16 : index
    %c0_82 = arith.constant 0 : index
    %219 = vector.load %arg21[%c16, %c0_82] : memref<32x8xf32, #tpu.memory_space<vmem>>, vector<8x8xf32>
    tpu.vector_store %arg21[%c16, %c0_82], %218 {strides = array<i32>} : memref<32x8xf32, #tpu.memory_space<vmem>>, vector<8x8xf32>,
    %220 = vector.extract_strided_slice %156 {offsets = [24, 0], sizes = [8, 8], strides = [1, 1]} : vector<96x8xf32> to vector<8x8xf32>
    %221 = vector.extract_strided_slice %156 {offsets = [56, 0], sizes = [8, 8], strides = [1, 1]} : vector<96x8xf32> to vector<8x8xf32>
    %222 = vector.extract_strided_slice %156 {offsets = [88, 0], sizes = [8, 8], strides = [1, 1]} : vector<96x8xf32> to vector<8x8xf32>
    "tpu.trace_start"() <{level = 10 : i32, message = "dq,dk->qk"}> : () -> ()
    %cst_83 = arith.constant dense<0.000000e+00> : vector<8x8xf32>
    %223 = tpu.matmul %220, %221, %cst_83 {dimension_numbers = #tpu.dot_dimension_numbers<[0], [0], [1], [1], [0, 1, 1, 1], [], []>} : vector<8x8xf32>, vector<8x8xf32>, vector<8x8xf32> -> vector<8x8xf32>
    "tpu.trace_stop"() : () -> ()
    %cst_84 = arith.constant 0.353553385 : f32
    %224 = vector.broadcast %cst_84 : f32 to vector<8x8xf32>
    %225 = arith.mulf %223, %224 : vector<8x8xf32>
    %226 = vector.broadcast %116 : vector<1x8xf32> to vector<8x8xf32>
    %227 = arith.addf %225, %226 : vector<8x8xf32>
    %cst_85 = arith.constant dense<0xFF800000> : vector<8xf32>
    %228 = vector.multi_reduction <maximumf>, %227, %cst_85 [1] : vector<8x8xf32> to vector<8xf32>
    %229 = vector.shape_cast %228 : vector<8xf32> to vector<8x1xf32>
    %230 = vector.broadcast %229 : vector<8x1xf32> to vector<8x8xf32>
    %231 = arith.subf %227, %230 : vector<8x8xf32>
    %232 = math.exp %231 : vector<8x8xf32>
    %cst_86 = arith.constant dense<0.000000e+00> : vector<8xf32>
    %233 = vector.multi_reduction <add>, %232, %cst_86 [1] : vector<8x8xf32> to vector<8xf32>
    %234 = vector.shape_cast %233 : vector<8xf32> to vector<8x1xf32>
    %235 = vector.broadcast %234 : vector<8x1xf32> to vector<8x8xf32>
    %236 = arith.divf %232, %235 : vector<8x8xf32>
    %237 = arith.truncf %222 : vector<8x8xf32> to vector<8x8xbf16>
    %238 = arith.truncf %236 : vector<8x8xf32> to vector<8x8xbf16>
    "tpu.trace_start"() <{level = 10 : i32, message = "dk,qk->dq"}> : () -> ()
    %cst_87 = arith.constant dense<0.000000e+00> : vector<8x8xf32>
    %239 = tpu.matmul %237, %238, %cst_87 {dimension_numbers = #tpu.dot_dimension_numbers<[1], [1], [0], [0], [0, 0, 1, 0], [], []>} : vector<8x8xbf16>, vector<8x8xbf16>, vector<8x8xf32> -> vector<8x8xf32>
    "tpu.trace_stop"() : () -> ()
    %c24 = arith.constant 24 : index
    %c0_88 = arith.constant 0 : index
    %240 = vector.load %arg21[%c24, %c0_88] : memref<32x8xf32, #tpu.memory_space<vmem>>, vector<8x8xf32>
    tpu.vector_store %arg21[%c24, %c0_88], %239 {strides = array<i32>} : memref<32x8xf32, #tpu.memory_space<vmem>>, vector<8x8xf32>,
    %c0_89 = arith.constant 0 : index
    %c0_90 = arith.constant 0 : index
    %241 = vector.load %arg21[%c0_89, %c0_90] : memref<32x8xf32, #tpu.memory_space<vmem>>, vector<32x8xf32>
    %c0_91 = arith.constant 0 : index
    %c0_92 = arith.constant 0 : index
    %c0_93 = arith.constant 0 : index
    %242 = vector.load %arg10[%c0_91, %c0_92, %c0_93] : memref<2x32x32xf32, #tpu.memory_space<vmem>>, vector<1x32x32xf32>
    %243 = vector.shape_cast %242 : vector<1x32x32xf32> to vector<32x32xf32>
    "tpu.trace_start"() <{level = 10 : i32, message = "ds,do->so"}> : () -> ()
    %cst_94 = arith.constant dense<0.000000e+00> : vector<8x32xf32>
    %244 = tpu.matmul %241, %243, %cst_94 {dimension_numbers = #tpu.dot_dimension_numbers<[0], [0], [1], [1], [0, 1, 1, 1], [], []>} : vector<32x8xf32>, vector<32x32xf32>, vector<8x32xf32> -> vector<8x32xf32>
    "tpu.trace_stop"() : () -> ()
    %c0_95 = arith.constant 0 : index
    %c0_96 = arith.constant 0 : index
    %c0_97 = arith.constant 0 : index
    %245 = vector.load %arg11[%c0_95, %c0_96, %c0_97] : memref<2x1x32xf32, #tpu.memory_space<vmem>>, vector<1x1x32xf32>
    %246 = vector.shape_cast %245 : vector<1x1x32xf32> to vector<1x32xf32>
    %247 = vector.broadcast %246 : vector<1x32xf32> to vector<8x32xf32>
    %248 = arith.addf %244, %247 : vector<8x32xf32>
    %249 = arith.addf %248, %148 : vector<8x32xf32>
    %c0_98 = arith.constant 0 : index
    %c0_99 = arith.constant 0 : index
    %c0_100 = arith.constant 0 : index
    %250 = vector.load %arg12[%c0_98, %c0_99, %c0_100] : memref<2x1x32xf32, #tpu.memory_space<vmem>>, vector<1x1x32xf32>
    %251 = vector.shape_cast %250 : vector<1x1x32xf32> to vector<1x32xf32>
    %c0_101 = arith.constant 0 : index
    %c0_102 = arith.constant 0 : index
    %c0_103 = arith.constant 0 : index
    %252 = vector.load %arg13[%c0_101, %c0_102, %c0_103] : memref<2x1x32xf32, #tpu.memory_space<vmem>>, vector<1x1x32xf32>
    %253 = vector.shape_cast %252 : vector<1x1x32xf32> to vector<1x32xf32>
    %cst_104 = arith.constant dense<0.000000e+00> : vector<8xf32>
    %254 = vector.multi_reduction <add>, %249, %cst_104 [1] : vector<8x32xf32> to vector<8xf32>
    %255 = vector.shape_cast %254 : vector<8xf32> to vector<8x1xf32>
    %cst_105 = arith.constant 3.200000e+01 : f32
    %256 = vector.broadcast %cst_105 : f32 to vector<8x1xf32>
    %257 = arith.divf %255, %256 : vector<8x1xf32>
    %258 = vector.broadcast %257 : vector<8x1xf32> to vector<8x32xf32>
    %259 = arith.subf %249, %258 : vector<8x32xf32>
    %260 = arith.mulf %259, %259 : vector<8x32xf32>
    %cst_106 = arith.constant dense<0.000000e+00> : vector<8xf32>
    %261 = vector.multi_reduction <add>, %260, %cst_106 [1] : vector<8x32xf32> to vector<8xf32>
    %262 = vector.shape_cast %261 : vector<8xf32> to vector<8x1xf32>
    %cst_107 = arith.constant 3.200000e+01 : f32
    %263 = vector.broadcast %cst_107 : f32 to vector<8x1xf32>
    %264 = arith.divf %262, %263 : vector<8x1xf32>
    %cst_108 = arith.constant 9.99999996E-13 : f32
    %265 = vector.broadcast %cst_108 : f32 to vector<8x1xf32>
    %266 = arith.addf %264, %265 : vector<8x1xf32>
    %267 = math.rsqrt %266 : vector<8x1xf32>
    %268 = vector.broadcast %267 : vector<8x1xf32> to vector<8x32xf32>
    %269 = arith.mulf %259, %268 : vector<8x32xf32>
    %270 = vector.broadcast %251 : vector<1x32xf32> to vector<8x32xf32>
    %271 = arith.mulf %269, %270 : vector<8x32xf32>
    %272 = vector.broadcast %253 : vector<1x32xf32> to vector<8x32xf32>
    %273 = arith.addf %271, %272 : vector<8x32xf32>
    %274 = arith.truncf %273 : vector<8x32xf32> to vector<8x32xbf16>
    %c0_109 = arith.constant 0 : index
    %c0_110 = arith.constant 0 : index
    %c0_111 = arith.constant 0 : index
    %275 = vector.load %arg14[%c0_109, %c0_110, %c0_111] : memref<2x32x64xbf16, #tpu.memory_space<vmem>>, vector<1x32x64xbf16>
    %276 = vector.shape_cast %275 : vector<1x32x64xbf16> to vector<32x64xbf16>
    %cst_112 = arith.constant dense<0.000000e+00> : vector<8x64xf32>
    %277 = tpu.matmul %274, %276, %cst_112 {dimension_numbers = #tpu.dot_dimension_numbers<[1], [0], [0], [1], [0, 0, 1, 1], [], []>} : vector<8x32xbf16>, vector<32x64xbf16>, vector<8x64xf32> -> vector<8x64xf32>
    %c0_113 = arith.constant 0 : index
    %c0_114 = arith.constant 0 : index
    %c0_115 = arith.constant 0 : index
    %278 = vector.load %arg15[%c0_113, %c0_114, %c0_115] : memref<2x1x64xf32, #tpu.memory_space<vmem>>, vector<1x1x64xf32>
    %279 = vector.shape_cast %278 : vector<1x1x64xf32> to vector<1x64xf32>
    %280 = vector.broadcast %279 : vector<1x64xf32> to vector<8x64xf32>
    %281 = arith.addf %277, %280 : vector<8x64xf32>
    %cst_116 = arith.constant 5.000000e-01 : f32
    %282 = vector.broadcast %cst_116 : f32 to vector<8x64xf32>
    %283 = arith.mulf %282, %281 : vector<8x64xf32>
    %cst_117 = arith.constant 4.471500e-02 : f32
    %284 = vector.broadcast %cst_117 : f32 to vector<8x64xf32>
    %285 = arith.mulf %284, %281 : vector<8x64xf32>
    %286 = arith.mulf %285, %281 : vector<8x64xf32>
    %287 = arith.mulf %286, %281 : vector<8x64xf32>
    %288 = arith.addf %281, %287 : vector<8x64xf32>
    %cst_118 = arith.constant 0.797884583 : f32
    %289 = vector.broadcast %cst_118 : f32 to vector<8x64xf32>
    %290 = arith.mulf %289, %288 : vector<8x64xf32>
    %291 = math.tanh %290 : vector<8x64xf32>
    %cst_119 = arith.constant 1.000000e+00 : f32
    %292 = vector.broadcast %cst_119 : f32 to vector<8x64xf32>
    %293 = arith.addf %292, %291 : vector<8x64xf32>
    %294 = arith.mulf %283, %293 : vector<8x64xf32>
    %295 = arith.truncf %294 : vector<8x64xf32> to vector<8x64xbf16>
    %c0_120 = arith.constant 0 : index
    %c0_121 = arith.constant 0 : index
    %c0_122 = arith.constant 0 : index
    %296 = vector.load %arg16[%c0_120, %c0_121, %c0_122] : memref<2x64x32xbf16, #tpu.memory_space<vmem>>, vector<1x64x32xbf16>
    %297 = vector.shape_cast %296 : vector<1x64x32xbf16> to vector<64x32xbf16>
    %cst_123 = arith.constant dense<0.000000e+00> : vector<8x32xf32>
    %298 = tpu.matmul %295, %297, %cst_123 {dimension_numbers = #tpu.dot_dimension_numbers<[1], [0], [0], [1], [0, 0, 1, 1], [], []>} : vector<8x64xbf16>, vector<64x32xbf16>, vector<8x32xf32> -> vector<8x32xf32>
    %c0_124 = arith.constant 0 : index
    %c0_125 = arith.constant 0 : index
    %c0_126 = arith.constant 0 : index
    %299 = vector.load %arg17[%c0_124, %c0_125, %c0_126] : memref<2x1x32xf32, #tpu.memory_space<vmem>>, vector<1x1x32xf32>
    %300 = vector.shape_cast %299 : vector<1x1x32xf32> to vector<1x32xf32>
    %301 = vector.broadcast %300 : vector<1x32xf32> to vector<8x32xf32>
    %302 = arith.addf %298, %301 : vector<8x32xf32>
    %303 = arith.addf %302, %273 : vector<8x32xf32>
    %c0_127 = arith.constant 0 : index
    %c0_128 = arith.constant 0 : index
    %c0_129 = arith.constant 0 : index
    %304 = vector.load %arg18[%c0_127, %c0_128, %c0_129] : memref<2x1x32xf32, #tpu.memory_space<vmem>>, vector<1x1x32xf32>
    %305 = vector.shape_cast %304 : vector<1x1x32xf32> to vector<1x32xf32>
    %c0_130 = arith.constant 0 : index
    %c0_131 = arith.constant 0 : index
    %c0_132 = arith.constant 0 : index
    %306 = vector.load %arg19[%c0_130, %c0_131, %c0_132] : memref<2x1x32xf32, #tpu.memory_space<vmem>>, vector<1x1x32xf32>
    %307 = vector.shape_cast %306 : vector<1x1x32xf32> to vector<1x32xf32>
    %cst_133 = arith.constant dense<0.000000e+00> : vector<8xf32>
    %308 = vector.multi_reduction <add>, %303, %cst_133 [1] : vector<8x32xf32> to vector<8xf32>
    %309 = vector.shape_cast %308 : vector<8xf32> to vector<8x1xf32>
    %cst_134 = arith.constant 3.200000e+01 : f32
    %310 = vector.broadcast %cst_134 : f32 to vector<8x1xf32>
    %311 = arith.divf %309, %310 : vector<8x1xf32>
    %312 = vector.broadcast %311 : vector<8x1xf32> to vector<8x32xf32>
    %313 = arith.subf %303, %312 : vector<8x32xf32>
    %314 = arith.mulf %313, %313 : vector<8x32xf32>
    %cst_135 = arith.constant dense<0.000000e+00> : vector<8xf32>
    %315 = vector.multi_reduction <add>, %314, %cst_135 [1] : vector<8x32xf32> to vector<8xf32>
    %316 = vector.shape_cast %315 : vector<8xf32> to vector<8x1xf32>
    %cst_136 = arith.constant 3.200000e+01 : f32
    %317 = vector.broadcast %cst_136 : f32 to vector<8x1xf32>
    %318 = arith.divf %316, %317 : vector<8x1xf32>
    %cst_137 = arith.constant 9.99999996E-13 : f32
    %319 = vector.broadcast %cst_137 : f32 to vector<8x1xf32>
    %320 = arith.addf %318, %319 : vector<8x1xf32>
    %321 = math.rsqrt %320 : vector<8x1xf32>
    %322 = vector.broadcast %321 : vector<8x1xf32> to vector<8x32xf32>
    %323 = arith.mulf %313, %322 : vector<8x32xf32>
    %324 = vector.broadcast %305 : vector<1x32xf32> to vector<8x32xf32>
    %325 = arith.mulf %323, %324 : vector<8x32xf32>
    %326 = vector.broadcast %307 : vector<1x32xf32> to vector<8x32xf32>
    %327 = arith.addf %325, %326 : vector<8x32xf32>
    %328 = arith.truncf %327 : vector<8x32xf32> to vector<8x32xbf16>
    %c1_138 = arith.constant 1 : index
    %c0_139 = arith.constant 0 : index
    %c0_140 = arith.constant 0 : index
    %329 = vector.load %arg8[%c1_138, %c0_139, %c0_140] : memref<2x96x32xbf16, #tpu.memory_space<vmem>>, vector<1x96x32xbf16>
    %330 = vector.shape_cast %329 : vector<1x96x32xbf16> to vector<96x32xbf16>
    "tpu.trace_start"() <{level = 10 : i32, message = "od,sd->os"}> : () -> ()
    %cst_141 = arith.constant dense<0.000000e+00> : vector<96x8xf32>
    %331 = tpu.matmul %330, %328, %cst_141 {dimension_numbers = #tpu.dot_dimension_numbers<[1], [1], [0], [0], [0, 0, 1, 0], [], []>} : vector<96x32xbf16>, vector<8x32xbf16>, vector<96x8xf32> -> vector<96x8xf32>
    "tpu.trace_stop"() : () -> ()
    %c1_142 = arith.constant 1 : index
    %c0_143 = arith.constant 0 : index
    %c0_144 = arith.constant 0 : index
    %332 = vector.load %arg9[%c1_142, %c0_143, %c0_144] : memref<2x96x1xf32, #tpu.memory_space<vmem>>, vector<1x96x1xf32>
    %333 = vector.shape_cast %332 : vector<1x96x1xf32> to vector<96x1xf32>
    %334 = vector.broadcast %333 : vector<96x1xf32> to vector<96x8xf32>
    %335 = arith.addf %331, %334 : vector<96x8xf32>
    %336 = vector.extract_strided_slice %335 {offsets = [0, 0], sizes = [8, 8], strides = [1, 1]} : vector<96x8xf32> to vector<8x8xf32>
    %337 = vector.extract_strided_slice %335 {offsets = [32, 0], sizes = [8, 8], strides = [1, 1]} : vector<96x8xf32> to vector<8x8xf32>
    %338 = vector.extract_strided_slice %335 {offsets = [64, 0], sizes = [8, 8], strides = [1, 1]} : vector<96x8xf32> to vector<8x8xf32>
    "tpu.trace_start"() <{level = 10 : i32, message = "dq,dk->qk"}> : () -> ()
    %cst_145 = arith.constant dense<0.000000e+00> : vector<8x8xf32>
    %339 = tpu.matmul %336, %337, %cst_145 {dimension_numbers = #tpu.dot_dimension_numbers<[0], [0], [1], [1], [0, 1, 1, 1], [], []>} : vector<8x8xf32>, vector<8x8xf32>, vector<8x8xf32> -> vector<8x8xf32>
    "tpu.trace_stop"() : () -> ()
    %cst_146 = arith.constant 0.353553385 : f32
    %340 = vector.broadcast %cst_146 : f32 to vector<8x8xf32>
    %341 = arith.mulf %339, %340 : vector<8x8xf32>
    %342 = vector.broadcast %116 : vector<1x8xf32> to vector<8x8xf32>
    %343 = arith.addf %341, %342 : vector<8x8xf32>
    %cst_147 = arith.constant dense<0xFF800000> : vector<8xf32>
    %344 = vector.multi_reduction <maximumf>, %343, %cst_147 [1] : vector<8x8xf32> to vector<8xf32>
    %345 = vector.shape_cast %344 : vector<8xf32> to vector<8x1xf32>
    %346 = vector.broadcast %345 : vector<8x1xf32> to vector<8x8xf32>
    %347 = arith.subf %343, %346 : vector<8x8xf32>
    %348 = math.exp %347 : vector<8x8xf32>
    %cst_148 = arith.constant dense<0.000000e+00> : vector<8xf32>
    %349 = vector.multi_reduction <add>, %348, %cst_148 [1] : vector<8x8xf32> to vector<8xf32>
    %350 = vector.shape_cast %349 : vector<8xf32> to vector<8x1xf32>
    %351 = vector.broadcast %350 : vector<8x1xf32> to vector<8x8xf32>
    %352 = arith.divf %348, %351 : vector<8x8xf32>
    %353 = arith.truncf %338 : vector<8x8xf32> to vector<8x8xbf16>
    %354 = arith.truncf %352 : vector<8x8xf32> to vector<8x8xbf16>
    "tpu.trace_start"() <{level = 10 : i32, message = "dk,qk->dq"}> : () -> ()
    %cst_149 = arith.constant dense<0.000000e+00> : vector<8x8xf32>
    %355 = tpu.matmul %353, %354, %cst_149 {dimension_numbers = #tpu.dot_dimension_numbers<[1], [1], [0], [0], [0, 0, 1, 0], [], []>} : vector<8x8xbf16>, vector<8x8xbf16>, vector<8x8xf32> -> vector<8x8xf32>
    "tpu.trace_stop"() : () -> ()
    %c0_150 = arith.constant 0 : index
    %c0_151 = arith.constant 0 : index
    %356 = vector.load %arg21[%c0_150, %c0_151] : memref<32x8xf32, #tpu.memory_space<vmem>>, vector<8x8xf32>
    tpu.vector_store %arg21[%c0_150, %c0_151], %355 {strides = array<i32>} : memref<32x8xf32, #tpu.memory_space<vmem>>, vector<8x8xf32>,
    %357 = vector.extract_strided_slice %335 {offsets = [8, 0], sizes = [8, 8], strides = [1, 1]} : vector<96x8xf32> to vector<8x8xf32>
    %358 = vector.extract_strided_slice %335 {offsets = [40, 0], sizes = [8, 8], strides = [1, 1]} : vector<96x8xf32> to vector<8x8xf32>
    %359 = vector.extract_strided_slice %335 {offsets = [72, 0], sizes = [8, 8], strides = [1, 1]} : vector<96x8xf32> to vector<8x8xf32>
    "tpu.trace_start"() <{level = 10 : i32, message = "dq,dk->qk"}> : () -> ()
    %cst_152 = arith.constant dense<0.000000e+00> : vector<8x8xf32>
    %360 = tpu.matmul %357, %358, %cst_152 {dimension_numbers = #tpu.dot_dimension_numbers<[0], [0], [1], [1], [0, 1, 1, 1], [], []>} : vector<8x8xf32>, vector<8x8xf32>, vector<8x8xf32> -> vector<8x8xf32>
    "tpu.trace_stop"() : () -> ()
    %cst_153 = arith.constant 0.353553385 : f32
    %361 = vector.broadcast %cst_153 : f32 to vector<8x8xf32>
    %362 = arith.mulf %360, %361 : vector<8x8xf32>
    %363 = vector.broadcast %116 : vector<1x8xf32> to vector<8x8xf32>
    %364 = arith.addf %362, %363 : vector<8x8xf32>
    %cst_154 = arith.constant dense<0xFF800000> : vector<8xf32>
    %365 = vector.multi_reduction <maximumf>, %364, %cst_154 [1] : vector<8x8xf32> to vector<8xf32>
    %366 = vector.shape_cast %365 : vector<8xf32> to vector<8x1xf32>
    %367 = vector.broadcast %366 : vector<8x1xf32> to vector<8x8xf32>
    %368 = arith.subf %364, %367 : vector<8x8xf32>
    %369 = math.exp %368 : vector<8x8xf32>
    %cst_155 = arith.constant dense<0.000000e+00> : vector<8xf32>
    %370 = vector.multi_reduction <add>, %369, %cst_155 [1] : vector<8x8xf32> to vector<8xf32>
    %371 = vector.shape_cast %370 : vector<8xf32> to vector<8x1xf32>
    %372 = vector.broadcast %371 : vector<8x1xf32> to vector<8x8xf32>
    %373 = arith.divf %369, %372 : vector<8x8xf32>
    %374 = arith.truncf %359 : vector<8x8xf32> to vector<8x8xbf16>
    %375 = arith.truncf %373 : vector<8x8xf32> to vector<8x8xbf16>
    "tpu.trace_start"() <{level = 10 : i32, message = "dk,qk->dq"}> : () -> ()
    %cst_156 = arith.constant dense<0.000000e+00> : vector<8x8xf32>
    %376 = tpu.matmul %374, %375, %cst_156 {dimension_numbers = #tpu.dot_dimension_numbers<[1], [1], [0], [0], [0, 0, 1, 0], [], []>} : vector<8x8xbf16>, vector<8x8xbf16>, vector<8x8xf32> -> vector<8x8xf32>
    "tpu.trace_stop"() : () -> ()
    %c8_157 = arith.constant 8 : index
    %c0_158 = arith.constant 0 : index
    %377 = vector.load %arg21[%c8_157, %c0_158] : memref<32x8xf32, #tpu.memory_space<vmem>>, vector<8x8xf32>
    tpu.vector_store %arg21[%c8_157, %c0_158], %376 {strides = array<i32>} : memref<32x8xf32, #tpu.memory_space<vmem>>, vector<8x8xf32>,
    %378 = vector.extract_strided_slice %335 {offsets = [16, 0], sizes = [8, 8], strides = [1, 1]} : vector<96x8xf32> to vector<8x8xf32>
    %379 = vector.extract_strided_slice %335 {offsets = [48, 0], sizes = [8, 8], strides = [1, 1]} : vector<96x8xf32> to vector<8x8xf32>
    %380 = vector.extract_strided_slice %335 {offsets = [80, 0], sizes = [8, 8], strides = [1, 1]} : vector<96x8xf32> to vector<8x8xf32>
    "tpu.trace_start"() <{level = 10 : i32, message = "dq,dk->qk"}> : () -> ()
    %cst_159 = arith.constant dense<0.000000e+00> : vector<8x8xf32>
    %381 = tpu.matmul %378, %379, %cst_159 {dimension_numbers = #tpu.dot_dimension_numbers<[0], [0], [1], [1], [0, 1, 1, 1], [], []>} : vector<8x8xf32>, vector<8x8xf32>, vector<8x8xf32> -> vector<8x8xf32>
    "tpu.trace_stop"() : () -> ()
    %cst_160 = arith.constant 0.353553385 : f32
    %382 = vector.broadcast %cst_160 : f32 to vector<8x8xf32>
    %383 = arith.mulf %381, %382 : vector<8x8xf32>
    %384 = vector.broadcast %116 : vector<1x8xf32> to vector<8x8xf32>
    %385 = arith.addf %383, %384 : vector<8x8xf32>
    %cst_161 = arith.constant dense<0xFF800000> : vector<8xf32>
    %386 = vector.multi_reduction <maximumf>, %385, %cst_161 [1] : vector<8x8xf32> to vector<8xf32>
    %387 = vector.shape_cast %386 : vector<8xf32> to vector<8x1xf32>
    %388 = vector.broadcast %387 : vector<8x1xf32> to vector<8x8xf32>
    %389 = arith.subf %385, %388 : vector<8x8xf32>
    %390 = math.exp %389 : vector<8x8xf32>
    %cst_162 = arith.constant dense<0.000000e+00> : vector<8xf32>
    %391 = vector.multi_reduction <add>, %390, %cst_162 [1] : vector<8x8xf32> to vector<8xf32>
    %392 = vector.shape_cast %391 : vector<8xf32> to vector<8x1xf32>
    %393 = vector.broadcast %392 : vector<8x1xf32> to vector<8x8xf32>
    %394 = arith.divf %390, %393 : vector<8x8xf32>
    %395 = arith.truncf %380 : vector<8x8xf32> to vector<8x8xbf16>
    %396 = arith.truncf %394 : vector<8x8xf32> to vector<8x8xbf16>
    "tpu.trace_start"() <{level = 10 : i32, message = "dk,qk->dq"}> : () -> ()
    %cst_163 = arith.constant dense<0.000000e+00> : vector<8x8xf32>
    %397 = tpu.matmul %395, %396, %cst_163 {dimension_numbers = #tpu.dot_dimension_numbers<[1], [1], [0], [0], [0, 0, 1, 0], [], []>} : vector<8x8xbf16>, vector<8x8xbf16>, vector<8x8xf32> -> vector<8x8xf32>
    "tpu.trace_stop"() : () -> ()
    %c16_164 = arith.constant 16 : index
    %c0_165 = arith.constant 0 : index
    %398 = vector.load %arg21[%c16_164, %c0_165] : memref<32x8xf32, #tpu.memory_space<vmem>>, vector<8x8xf32>
    tpu.vector_store %arg21[%c16_164, %c0_165], %397 {strides = array<i32>} : memref<32x8xf32, #tpu.memory_space<vmem>>, vector<8x8xf32>,
    %399 = vector.extract_strided_slice %335 {offsets = [24, 0], sizes = [8, 8], strides = [1, 1]} : vector<96x8xf32> to vector<8x8xf32>
    %400 = vector.extract_strided_slice %335 {offsets = [56, 0], sizes = [8, 8], strides = [1, 1]} : vector<96x8xf32> to vector<8x8xf32>
    %401 = vector.extract_strided_slice %335 {offsets = [88, 0], sizes = [8, 8], strides = [1, 1]} : vector<96x8xf32> to vector<8x8xf32>
    "tpu.trace_start"() <{level = 10 : i32, message = "dq,dk->qk"}> : () -> ()
    %cst_166 = arith.constant dense<0.000000e+00> : vector<8x8xf32>
    %402 = tpu.matmul %399, %400, %cst_166 {dimension_numbers = #tpu.dot_dimension_numbers<[0], [0], [1], [1], [0, 1, 1, 1], [], []>} : vector<8x8xf32>, vector<8x8xf32>, vector<8x8xf32> -> vector<8x8xf32>
    "tpu.trace_stop"() : () -> ()
    %cst_167 = arith.constant 0.353553385 : f32
    %403 = vector.broadcast %cst_167 : f32 to vector<8x8xf32>
    %404 = arith.mulf %402, %403 : vector<8x8xf32>
    %405 = vector.broadcast %116 : vector<1x8xf32> to vector<8x8xf32>
    %406 = arith.addf %404, %405 : vector<8x8xf32>
    %cst_168 = arith.constant dense<0xFF800000> : vector<8xf32>
    %407 = vector.multi_reduction <maximumf>, %406, %cst_168 [1] : vector<8x8xf32> to vector<8xf32>
    %408 = vector.shape_cast %407 : vector<8xf32> to vector<8x1xf32>
    %409 = vector.broadcast %408 : vector<8x1xf32> to vector<8x8xf32>
    %410 = arith.subf %406, %409 : vector<8x8xf32>
    %411 = math.exp %410 : vector<8x8xf32>
    %cst_169 = arith.constant dense<0.000000e+00> : vector<8xf32>
    %412 = vector.multi_reduction <add>, %411, %cst_169 [1] : vector<8x8xf32> to vector<8xf32>
    %413 = vector.shape_cast %412 : vector<8xf32> to vector<8x1xf32>
    %414 = vector.broadcast %413 : vector<8x1xf32> to vector<8x8xf32>
    %415 = arith.divf %411, %414 : vector<8x8xf32>
    %416 = arith.truncf %401 : vector<8x8xf32> to vector<8x8xbf16>
    %417 = arith.truncf %415 : vector<8x8xf32> to vector<8x8xbf16>
    "tpu.trace_start"() <{level = 10 : i32, message = "dk,qk->dq"}> : () -> ()
    %cst_170 = arith.constant dense<0.000000e+00> : vector<8x8xf32>
    %418 = tpu.matmul %416, %417, %cst_170 {dimension_numbers = #tpu.dot_dimension_numbers<[1], [1], [0], [0], [0, 0, 1, 0], [], []>} : vector<8x8xbf16>, vector<8x8xbf16>, vector<8x8xf32> -> vector<8x8xf32>
    "tpu.trace_stop"() : () -> ()
    %c24_171 = arith.constant 24 : index
    %c0_172 = arith.constant 0 : index
    %419 = vector.load %arg21[%c24_171, %c0_172] : memref<32x8xf32, #tpu.memory_space<vmem>>, vector<8x8xf32>
    tpu.vector_store %arg21[%c24_171, %c0_172], %418 {strides = array<i32>} : memref<32x8xf32, #tpu.memory_space<vmem>>, vector<8x8xf32>,
    %c0_173 = arith.constant 0 : index
    %c0_174 = arith.constant 0 : index
    %420 = vector.load %arg21[%c0_173, %c0_174] : memref<32x8xf32, #tpu.memory_space<vmem>>, vector<32x8xf32>
    %c1_175 = arith.constant 1 : index
    %c0_176 = arith.constant 0 : index
    %c0_177 = arith.constant 0 : index
    %421 = vector.load %arg10[%c1_175, %c0_176, %c0_177] : memref<2x32x32xf32, #tpu.memory_space<vmem>>, vector<1x32x32xf32>
    %422 = vector.shape_cast %421 : vector<1x32x32xf32> to vector<32x32xf32>
    "tpu.trace_start"() <{level = 10 : i32, message = "ds,do->so"}> : () -> ()
    %cst_178 = arith.constant dense<0.000000e+00> : vector<8x32xf32>
    %423 = tpu.matmul %420, %422, %cst_178 {dimension_numbers = #tpu.dot_dimension_numbers<[0], [0], [1], [1], [0, 1, 1, 1], [], []>} : vector<32x8xf32>, vector<32x32xf32>, vector<8x32xf32> -> vector<8x32xf32>
    "tpu.trace_stop"() : () -> ()
    %c1_179 = arith.constant 1 : index
    %c0_180 = arith.constant 0 : index
    %c0_181 = arith.constant 0 : index
    %424 = vector.load %arg11[%c1_179, %c0_180, %c0_181] : memref<2x1x32xf32, #tpu.memory_space<vmem>>, vector<1x1x32xf32>
    %425 = vector.shape_cast %424 : vector<1x1x32xf32> to vector<1x32xf32>
    %426 = vector.broadcast %425 : vector<1x32xf32> to vector<8x32xf32>
    %427 = arith.addf %423, %426 : vector<8x32xf32>
    %428 = arith.addf %427, %327 : vector<8x32xf32>
    %c1_182 = arith.constant 1 : index
    %c0_183 = arith.constant 0 : index
    %c0_184 = arith.constant 0 : index
    %429 = vector.load %arg12[%c1_182, %c0_183, %c0_184] : memref<2x1x32xf32, #tpu.memory_space<vmem>>, vector<1x1x32xf32>
    %430 = vector.shape_cast %429 : vector<1x1x32xf32> to vector<1x32xf32>
    %c1_185 = arith.constant 1 : index
    %c0_186 = arith.constant 0 : index
    %c0_187 = arith.constant 0 : index
    %431 = vector.load %arg13[%c1_185, %c0_186, %c0_187] : memref<2x1x32xf32, #tpu.memory_space<vmem>>, vector<1x1x32xf32>
    %432 = vector.shape_cast %431 : vector<1x1x32xf32> to vector<1x32xf32>
    %cst_188 = arith.constant dense<0.000000e+00> : vector<8xf32>
    %433 = vector.multi_reduction <add>, %428, %cst_188 [1] : vector<8x32xf32> to vector<8xf32>
    %434 = vector.shape_cast %433 : vector<8xf32> to vector<8x1xf32>
    %cst_189 = arith.constant 3.200000e+01 : f32
    %435 = vector.broadcast %cst_189 : f32 to vector<8x1xf32>
    %436 = arith.divf %434, %435 : vector<8x1xf32>
    %437 = vector.broadcast %436 : vector<8x1xf32> to vector<8x32xf32>
    %438 = arith.subf %428, %437 : vector<8x32xf32>
    %439 = arith.mulf %438, %438 : vector<8x32xf32>
    %cst_190 = arith.constant dense<0.000000e+00> : vector<8xf32>
    %440 = vector.multi_reduction <add>, %439, %cst_190 [1] : vector<8x32xf32> to vector<8xf32>
    %441 = vector.shape_cast %440 : vector<8xf32> to vector<8x1xf32>
    %cst_191 = arith.constant 3.200000e+01 : f32
    %442 = vector.broadcast %cst_191 : f32 to vector<8x1xf32>
    %443 = arith.divf %441, %442 : vector<8x1xf32>
    %cst_192 = arith.constant 9.99999996E-13 : f32
    %444 = vector.broadcast %cst_192 : f32 to vector<8x1xf32>
    %445 = arith.addf %443, %444 : vector<8x1xf32>
    %446 = math.rsqrt %445 : vector<8x1xf32>
    %447 = vector.broadcast %446 : vector<8x1xf32> to vector<8x32xf32>
    %448 = arith.mulf %438, %447 : vector<8x32xf32>
    %449 = vector.broadcast %430 : vector<1x32xf32> to vector<8x32xf32>
    %450 = arith.mulf %448, %449 : vector<8x32xf32>
    %451 = vector.broadcast %432 : vector<1x32xf32> to vector<8x32xf32>
    %452 = arith.addf %450, %451 : vector<8x32xf32>
    %453 = arith.truncf %452 : vector<8x32xf32> to vector<8x32xbf16>
    %c1_193 = arith.constant 1 : index
    %c0_194 = arith.constant 0 : index
    %c0_195 = arith.constant 0 : index
    %454 = vector.load %arg14[%c1_193, %c0_194, %c0_195] : memref<2x32x64xbf16, #tpu.memory_space<vmem>>, vector<1x32x64xbf16>
    %455 = vector.shape_cast %454 : vector<1x32x64xbf16> to vector<32x64xbf16>
    %cst_196 = arith.constant dense<0.000000e+00> : vector<8x64xf32>
    %456 = tpu.matmul %453, %455, %cst_196 {dimension_numbers = #tpu.dot_dimension_numbers<[1], [0], [0], [1], [0, 0, 1, 1], [], []>} : vector<8x32xbf16>, vector<32x64xbf16>, vector<8x64xf32> -> vector<8x64xf32>
    %c1_197 = arith.constant 1 : index
    %c0_198 = arith.constant 0 : index
    %c0_199 = arith.constant 0 : index
    %457 = vector.load %arg15[%c1_197, %c0_198, %c0_199] : memref<2x1x64xf32, #tpu.memory_space<vmem>>, vector<1x1x64xf32>
    %458 = vector.shape_cast %457 : vector<1x1x64xf32> to vector<1x64xf32>
    %459 = vector.broadcast %458 : vector<1x64xf32> to vector<8x64xf32>
    %460 = arith.addf %456, %459 : vector<8x64xf32>
    %cst_200 = arith.constant 5.000000e-01 : f32
    %461 = vector.broadcast %cst_200 : f32 to vector<8x64xf32>
    %462 = arith.mulf %461, %460 : vector<8x64xf32>
    %cst_201 = arith.constant 4.471500e-02 : f32
    %463 = vector.broadcast %cst_201 : f32 to vector<8x64xf32>
    %464 = arith.mulf %463, %460 : vector<8x64xf32>
    %465 = arith.mulf %464, %460 : vector<8x64xf32>
    %466 = arith.mulf %465, %460 : vector<8x64xf32>
    %467 = arith.addf %460, %466 : vector<8x64xf32>
    %cst_202 = arith.constant 0.797884583 : f32
    %468 = vector.broadcast %cst_202 : f32 to vector<8x64xf32>
    %469 = arith.mulf %468, %467 : vector<8x64xf32>
    %470 = math.tanh %469 : vector<8x64xf32>
    %cst_203 = arith.constant 1.000000e+00 : f32
    %471 = vector.broadcast %cst_203 : f32 to vector<8x64xf32>
    %472 = arith.addf %471, %470 : vector<8x64xf32>
    %473 = arith.mulf %462, %472 : vector<8x64xf32>
    %474 = arith.truncf %473 : vector<8x64xf32> to vector<8x64xbf16>
    %c1_204 = arith.constant 1 : index
    %c0_205 = arith.constant 0 : index
    %c0_206 = arith.constant 0 : index
    %475 = vector.load %arg16[%c1_204, %c0_205, %c0_206] : memref<2x64x32xbf16, #tpu.memory_space<vmem>>, vector<1x64x32xbf16>
    %476 = vector.shape_cast %475 : vector<1x64x32xbf16> to vector<64x32xbf16>
    %cst_207 = arith.constant dense<0.000000e+00> : vector<8x32xf32>
    %477 = tpu.matmul %474, %476, %cst_207 {dimension_numbers = #tpu.dot_dimension_numbers<[1], [0], [0], [1], [0, 0, 1, 1], [], []>} : vector<8x64xbf16>, vector<64x32xbf16>, vector<8x32xf32> -> vector<8x32xf32>
    %c1_208 = arith.constant 1 : index
    %c0_209 = arith.constant 0 : index
    %c0_210 = arith.constant 0 : index
    %478 = vector.load %arg17[%c1_208, %c0_209, %c0_210] : memref<2x1x32xf32, #tpu.memory_space<vmem>>, vector<1x1x32xf32>
    %479 = vector.shape_cast %478 : vector<1x1x32xf32> to vector<1x32xf32>
    %480 = vector.broadcast %479 : vector<1x32xf32> to vector<8x32xf32>
    %481 = arith.addf %477, %480 : vector<8x32xf32>
    %482 = arith.addf %481, %452 : vector<8x32xf32>
    %c1_211 = arith.constant 1 : index
    %c0_212 = arith.constant 0 : index
    %c0_213 = arith.constant 0 : index
    %483 = vector.load %arg18[%c1_211, %c0_212, %c0_213] : memref<2x1x32xf32, #tpu.memory_space<vmem>>, vector<1x1x32xf32>
    %484 = vector.shape_cast %483 : vector<1x1x32xf32> to vector<1x32xf32>
    %c1_214 = arith.constant 1 : index
    %c0_215 = arith.constant 0 : index
    %c0_216 = arith.constant 0 : index
    %485 = vector.load %arg19[%c1_214, %c0_215, %c0_216] : memref<2x1x32xf32, #tpu.memory_space<vmem>>, vector<1x1x32xf32>
    %486 = vector.shape_cast %485 : vector<1x1x32xf32> to vector<1x32xf32>
    %cst_217 = arith.constant dense<0.000000e+00> : vector<8xf32>
    %487 = vector.multi_reduction <add>, %482, %cst_217 [1] : vector<8x32xf32> to vector<8xf32>
    %488 = vector.shape_cast %487 : vector<8xf32> to vector<8x1xf32>
    %cst_218 = arith.constant 3.200000e+01 : f32
    %489 = vector.broadcast %cst_218 : f32 to vector<8x1xf32>
    %490 = arith.divf %488, %489 : vector<8x1xf32>
    %491 = vector.broadcast %490 : vector<8x1xf32> to vector<8x32xf32>
    %492 = arith.subf %482, %491 : vector<8x32xf32>
    %493 = arith.mulf %492, %492 : vector<8x32xf32>
    %cst_219 = arith.constant dense<0.000000e+00> : vector<8xf32>
    %494 = vector.multi_reduction <add>, %493, %cst_219 [1] : vector<8x32xf32> to vector<8xf32>
    %495 = vector.shape_cast %494 : vector<8xf32> to vector<8x1xf32>
    %cst_220 = arith.constant 3.200000e+01 : f32
    %496 = vector.broadcast %cst_220 : f32 to vector<8x1xf32>
    %497 = arith.divf %495, %496 : vector<8x1xf32>
    %cst_221 = arith.constant 9.99999996E-13 : f32
    %498 = vector.broadcast %cst_221 : f32 to vector<8x1xf32>
    %499 = arith.addf %497, %498 : vector<8x1xf32>
    %500 = math.rsqrt %499 : vector<8x1xf32>
    %501 = vector.broadcast %500 : vector<8x1xf32> to vector<8x32xf32>
    %502 = arith.mulf %492, %501 : vector<8x32xf32>
    %503 = vector.broadcast %484 : vector<1x32xf32> to vector<8x32xf32>
    %504 = arith.mulf %502, %503 : vector<8x32xf32>
    %505 = vector.broadcast %486 : vector<1x32xf32> to vector<8x32xf32>
    %506 = arith.addf %504, %505 : vector<8x32xf32>
    %507 = vector.extract_strided_slice %506 {offsets = [0, 0], sizes = [1, 32], strides = [1, 1]} : vector<8x32xf32> to vector<1x32xf32>
    %c0_222 = arith.constant 0 : index
    %c0_223 = arith.constant 0 : index
    %c0_224 = arith.constant 0 : index
    %508 = vector.load %arg20[%c0_222, %c0_223, %c0_224] : memref<1x1x32xf32, #tpu.memory_space<vmem>>, vector<1x1x32xf32>
    %509 = vector.shape_cast %508 : vector<1x1x32xf32> to vector<1x32xf32>
    %510 = vector.shape_cast %507 : vector<1x32xf32> to vector<1x1x32xf32>
    tpu.vector_store %arg20[%c0_222, %c0_223, %c0_224], %510 {strides = array<i32>} : memref<1x1x32xf32, #tpu.memory_space<vmem>>, vector<1x1x32xf32>,
    return
  }
  func.func @transform_0(%arg0: i32, %arg1: memref<2x8xi32, #tpu.memory_space<smem>>, %arg2: memref<2x8xi32, #tpu.memory_space<smem>>) -> (i32, i32) {
    %c0_i32 = arith.constant 0 : i32
    %c0_i32_0 = arith.constant 0 : i32
    %c0_i32_1 = arith.constant 0 : i32
    return %c0_i32, %c0_i32_0 : i32, i32
  }
  func.func @transform_1(%arg0: i32, %arg1: memref<2x8xi32, #tpu.memory_space<smem>>, %arg2: memref<2x8xi32, #tpu.memory_space<smem>>) -> (i32, i32) {
    %c0_i32 = arith.constant 0 : i32
    %c0_i32_0 = arith.constant 0 : i32
    %c0_i32_1 = arith.constant 0 : i32
    return %c0_i32, %c0_i32_0 : i32, i32
  }
  func.func @transform_2(%arg0: i32, %arg1: memref<2x8xi32, #tpu.memory_space<smem>>, %arg2: memref<2x8xi32, #tpu.memory_space<smem>>) -> (i32, i32) {
    %c0_i32 = arith.constant 0 : i32
    %c0_i32_0 = arith.constant 0 : i32
    %c0_i32_1 = arith.constant 0 : i32
    return %c0_i32, %c0_i32_0 : i32, i32
  }
  func.func @transform_3(%arg0: i32, %arg1: memref<2x8xi32, #tpu.memory_space<smem>>, %arg2: memref<2x8xi32, #tpu.memory_space<smem>>) -> (i32, i32) {
    %c0_i32 = arith.constant 0 : i32
    %c0_i32_0 = arith.constant 0 : i32
    %c0_i32_1 = arith.constant 0 : i32
    return %c0_i32, %c0_i32_0 : i32, i32
  }
  func.func @transform_4(%arg0: i32, %arg1: memref<2x8xi32, #tpu.memory_space<smem>>, %arg2: memref<2x8xi32, #tpu.memory_space<smem>>) -> (i32, i32) {
    %c0_i32 = arith.constant 0 : i32
    %c0_i32_0 = arith.constant 0 : i32
    %c0_i32_1 = arith.constant 0 : i32
    return %c0_i32, %c0_i32_0 : i32, i32
  }
  func.func @transform_5(%arg0: i32, %arg1: memref<2x8xi32, #tpu.memory_space<smem>>, %arg2: memref<2x8xi32, #tpu.memory_space<smem>>) -> (i32, i32, i32) {
    %c0_i32 = arith.constant 0 : i32
    %c0_i32_0 = arith.constant 0 : i32
    %c0_i32_1 = arith.constant 0 : i32
    %c0_i32_2 = arith.constant 0 : i32
    return %c0_i32, %c0_i32_0, %c0_i32_1 : i32, i32, i32
  }
  func.func @transform_6(%arg0: i32, %arg1: memref<2x8xi32, #tpu.memory_space<smem>>, %arg2: memref<2x8xi32, #tpu.memory_space<smem>>) -> (i32, i32, i32) {
    %c0_i32 = arith.constant 0 : i32
    %c0_i32_0 = arith.constant 0 : i32
    %c0_i32_1 = arith.constant 0 : i32
    %c0_i32_2 = arith.constant 0 : i32
    return %c0_i32, %c0_i32_0, %c0_i32_1 : i32, i32, i32
  }
  func.func @transform_7(%arg0: i32, %arg1: memref<2x8xi32, #tpu.memory_space<smem>>, %arg2: memref<2x8xi32, #tpu.memory_space<smem>>) -> (i32, i32, i32) {
    %c0_i32 = arith.constant 0 : i32
    %c0_i32_0 = arith.constant 0 : i32
    %c0_i32_1 = arith.constant 0 : i32
    %c0_i32_2 = arith.constant 0 : i32
    return %c0_i32, %c0_i32_0, %c0_i32_1 : i32, i32, i32
  }
  func.func @transform_8(%arg0: i32, %arg1: memref<2x8xi32, #tpu.memory_space<smem>>, %arg2: memref<2x8xi32, #tpu.memory_space<smem>>) -> (i32, i32, i32) {
    %c0_i32 = arith.constant 0 : i32
    %c0_i32_0 = arith.constant 0 : i32
    %c0_i32_1 = arith.constant 0 : i32
    %c0_i32_2 = arith.constant 0 : i32
    return %c0_i32, %c0_i32_0, %c0_i32_1 : i32, i32, i32
  }
  func.func @transform_9(%arg0: i32, %arg1: memref<2x8xi32, #tpu.memory_space<smem>>, %arg2: memref<2x8xi32, #tpu.memory_space<smem>>) -> (i32, i32, i32) {
    %c0_i32 = arith.constant 0 : i32
    %c0_i32_0 = arith.constant 0 : i32
    %c0_i32_1 = arith.constant 0 : i32
    %c0_i32_2 = arith.constant 0 : i32
    return %c0_i32, %c0_i32_0, %c0_i32_1 : i32, i32, i32
  }
  func.func @transform_10(%arg0: i32, %arg1: memref<2x8xi32, #tpu.memory_space<smem>>, %arg2: memref<2x8xi32, #tpu.memory_space<smem>>) -> (i32, i32, i32) {
    %c0_i32 = arith.constant 0 : i32
    %c0_i32_0 = arith.constant 0 : i32
    %c0_i32_1 = arith.constant 0 : i32
    %c0_i32_2 = arith.constant 0 : i32
    return %c0_i32, %c0_i32_0, %c0_i32_1 : i32, i32, i32
  }
  func.func @transform_11(%arg0: i32, %arg1: memref<2x8xi32, #tpu.memory_space<smem>>, %arg2: memref<2x8xi32, #tpu.memory_space<smem>>) -> (i32, i32, i32) {
    %c0_i32 = arith.constant 0 : i32
    %c0_i32_0 = arith.constant 0 : i32
    %c0_i32_1 = arith.constant 0 : i32
    %c0_i32_2 = arith.constant 0 : i32
    return %c0_i32, %c0_i32_0, %c0_i32_1 : i32, i32, i32
  }
  func.func @transform_12(%arg0: i32, %arg1: memref<2x8xi32, #tpu.memory_space<smem>>, %arg2: memref<2x8xi32, #tpu.memory_space<smem>>) -> (i32, i32, i32) {
    %c0_i32 = arith.constant 0 : i32
    %c0_i32_0 = arith.constant 0 : i32
    %c0_i32_1 = arith.constant 0 : i32
    %c0_i32_2 = arith.constant 0 : i32
    return %c0_i32, %c0_i32_0, %c0_i32_1 : i32, i32, i32
  }
  func.func @transform_13(%arg0: i32, %arg1: memref<2x8xi32, #tpu.memory_space<smem>>, %arg2: memref<2x8xi32, #tpu.memory_space<smem>>) -> (i32, i32, i32) {
    %c0_i32 = arith.constant 0 : i32
    %c0_i32_0 = arith.constant 0 : i32
    %c0_i32_1 = arith.constant 0 : i32
    %c0_i32_2 = arith.constant 0 : i32
    return %c0_i32, %c0_i32_0, %c0_i32_1 : i32, i32, i32
  }
  func.func @transform_14(%arg0: i32, %arg1: memref<2x8xi32, #tpu.memory_space<smem>>, %arg2: memref<2x8xi32, #tpu.memory_space<smem>>) -> (i32, i32, i32) {
    %c0_i32 = arith.constant 0 : i32
    %c0_i32_0 = arith.constant 0 : i32
    %c0_i32_1 = arith.constant 0 : i32
    %c0_i32_2 = arith.constant 0 : i32
    return %c0_i32, %c0_i32_0, %c0_i32_1 : i32, i32, i32
  }
  func.func @transform_15(%arg0: i32, %arg1: memref<2x8xi32, #tpu.memory_space<smem>>, %arg2: memref<2x8xi32, #tpu.memory_space<smem>>) -> (i32, i32, i32) {
    %c0_i32 = arith.constant 0 : i32
    %c0_i32_0 = arith.constant 0 : i32
    %c0_i32_1 = arith.constant 0 : i32
    %c0_i32_2 = arith.constant 0 : i32
    return %c0_i32, %c0_i32_0, %c0_i32_1 : i32, i32, i32
  }
  func.func @transform_16(%arg0: i32, %arg1: memref<2x8xi32, #tpu.memory_space<smem>>, %arg2: memref<2x8xi32, #tpu.memory_space<smem>>) -> (i32, i32, i32) {
    %c0_i32 = arith.constant 0 : i32
    %c0_i32_0 = arith.constant 0 : i32
    %c0_i32_1 = arith.constant 0 : i32
    %c0_i32_2 = arith.constant 0 : i32
    return %c0_i32, %c0_i32_0, %c0_i32_1 : i32, i32, i32
  }
  func.func @transform_17(%arg0: i32, %arg1: memref<2x8xi32, #tpu.memory_space<smem>>, %arg2: memref<2x8xi32, #tpu.memory_space<smem>>) -> (i32, i32, i32) {
    %c0_i32 = arith.constant 0 : i32
    %c0_i32_0 = arith.constant 0 : i32
    %c0_i32_1 = arith.constant 0 : i32
    return %arg0, %c0_i32, %c0_i32_0 : i32, i32, i32
  }
}

</mosaic_0001>

<llo_original>
// kernel: mybert_forward.1
$region0: #{mybert_forward.1}
  #allocation0 [shape = 'u32[]', space=smem, size = 0x4, offset = 0x4, fixed_abs, tag = 'smem constant byte address 0x4 - core index']
  #allocation1 [shape = 'u32[144,128]{1,0:T(1,128)}', space=vmem, size = 0x12000, scoped, tag = 'internal scratch']
  #allocation2 [shape = 'f32[32,8]{1,0:T(8,128)}', space=vmem, size = 0x4000, scoped, tag = 'scratch operand']
  #allocation3 [shape = 's32[1]{0}', space=sflag, size = 0x4, scoped, tag = 'scoped memory for mybert_forward.1']
  #allocation4 [shape = 'u8[1024]{0}', space=smem, size = 0x400, scoped, tag = 'prefetched SMEM operand 0']
  #allocation5 [shape = 'u8[1024]{0}', space=smem, size = 0x400, scoped, tag = 'prefetched SMEM operand 1']
  %s0 = inlined_call_operand.vmem [shape: s32[2,8], index: 0, kind: input, shape index: {}]
  %s1 = inlined_call_operand.vmem [shape: s32[2,8], index: 1, kind: input, shape index: {}]
  %s2 = inlined_call_operand.vmem [shape: f32[100,32], index: 2, kind: input, shape index: {}]
  %s3 = inlined_call_operand.vmem [shape: f32[16,32], index: 3, kind: input, shape index: {}]
  %s4 = inlined_call_operand.vmem [shape: f32[2,32], index: 4, kind: input, shape index: {}]
  %s5 = inlined_call_operand.vmem [shape: f32[1,32], index: 5, kind: input, shape index: {}]
  %s6 = inlined_call_operand.vmem [shape: f32[1,32], index: 6, kind: input, shape index: {}]
  %s7 = inlined_call_operand.vmem [shape: bf16[2,96,32], index: 7, kind: input, shape index: {}]
  %s8 = inlined_call_operand.vmem [shape: f32[2,96,1], index: 8, kind: input, shape index: {}]
  %s9 = inlined_call_operand.vmem [shape: f32[2,32,32], index: 9, kind: input, shape index: {}]
  %s10 = inlined_call_operand.vmem [shape: f32[2,1,32], index: 10, kind: input, shape index: {}]
  %s11 = inlined_call_operand.vmem [shape: f32[2,1,32], index: 11, kind: input, shape index: {}]
  %s12 = inlined_call_operand.vmem [shape: f32[2,1,32], index: 12, kind: input, shape index: {}]
  %s13 = inlined_call_operand.vmem [shape: bf16[2,32,64], index: 13, kind: input, shape index: {}]
  %s14 = inlined_call_operand.vmem [shape: f32[2,1,64], index: 14, kind: input, shape index: {}]
  %s15 = inlined_call_operand.vmem [shape: bf16[2,64,32], index: 15, kind: input, shape index: {}]
  %s16 = inlined_call_operand.vmem [shape: f32[2,1,32], index: 16, kind: input, shape index: {}]
  %s17 = inlined_call_operand.vmem [shape: f32[2,1,32], index: 17, kind: input, shape index: {}]
  %s18 = inlined_call_operand.vmem [shape: f32[2,1,32], index: 18, kind: input, shape index: {}]
  %s19 = inlined_call_operand.hbm [shape: f32[2,1,32], index: 19, kind: output, shape index: {}]
  %s20 = sld [smem:[#allocation0]]
  $region101: #{mybert_forward.1} parent=0
    _
  %s22 = ssub.s32 1, %s20
  %s23 = scalar_select 0, %s22, %s20
  %s24 = sshll.u32 %s0, 4
  %s25 = int_to_ptr.vmem [resolvable:$true] %s24
  %27 = dma.vmem_to_smem %s25, 32, [#allocation4], [#allocation3]
  %s28 = sshll.u32 %s1, 4
  %s29 = int_to_ptr.vmem [resolvable:$true] %s28
  %31 = dma.vmem_to_smem %s29, 32, [#allocation5], [#allocation3]
  %32 = dma.done [#allocation3], 64
  %33 = sfence
  $region1: #{mybert_forward.1} parent=0
    #allocation6 [shape = 'u8[1024]{0}', space=vmem, size = 0x400, scoped, tag = 'output window, operand 0']
    #allocation7 [shape = 's32[2]{0}', space=sflag, size = 0x8, scoped, tag = 'scoped memory for mybert_forward.1']
    %34 = vsyncpa [#allocation7], 0
    %s35 = scalar_lea.sflag [#allocation7], 1
    %36 = vsyncpa %s35, 0
    loop: start=0, step=1, limit=4
    $region2: #{mybert_forward.1} parent=1 // loop_pre_header
      _
    $region3: #{mybert_forward.1} parent=1 // loop_header
      %s38 = sphi 0, %s42
      %p39 = scmp.ge.s32.totalorder %s38, 4
      %s46 = sphi 0, %s46
      %s48 = sphi 0, %s46
      %s49 = sphi 0, %s48
      %s63 = sphi 0, %s49
      %s67 = sphi 0, %s67
      %s69 = sphi 0, %s67
      %s70 = sphi 0, %s69
      %s84 = sphi 0, %s70
      %s88 = sphi 0, %s88
      %s90 = sphi 0, %s88
      %s91 = sphi 0, %s90
      %s105 = sphi 0, %s91
      %s109 = sphi 0, %s109
      %s111 = sphi 0, %s109
      %s112 = sphi 0, %s111
      %s126 = sphi 0, %s112
      %s130 = sphi 0, %s130
      %s132 = sphi 0, %s130
      %s133 = sphi 0, %s132
      %s147 = sphi 0, %s133
      %s151 = sphi 0, %s151
      %s153 = sphi 0, %s151
      %s154 = sphi 0, %s153
      %s168 = sphi 0, %s154
      %s172 = sphi 0, %s172
      %s174 = sphi 0, %s172
      %s175 = sphi 0, %s174
      %s189 = sphi 0, %s175
      %s193 = sphi 0, %s193
      %s195 = sphi 0, %s193
      %s196 = sphi 0, %s195
      %s210 = sphi 0, %s196
      %s214 = sphi 0, %s214
      %s216 = sphi 0, %s214
      %s217 = sphi 0, %s216
      %s231 = sphi 0, %s217
      %s235 = sphi 0, %s235
      %s237 = sphi 0, %s235
      %s238 = sphi 0, %s237
      %s252 = sphi 0, %s238
      %s256 = sphi 0, %s256
      %s258 = sphi 0, %s256
      %s259 = sphi 0, %s258
      %s273 = sphi 0, %s259
      %s277 = sphi 0, %s277
      %s279 = sphi 0, %s277
      %s280 = sphi 0, %s279
      %s294 = sphi 0, %s280
      %s298 = sphi 0, %s298
      %s300 = sphi 0, %s298
      %s301 = sphi 0, %s300
      %s315 = sphi 0, %s301
      %s319 = sphi 0, %s319
      %s321 = sphi 0, %s319
      %s322 = sphi 0, %s321
      %s336 = sphi 0, %s322
      %s340 = sphi 0, %s340
      %s342 = sphi 0, %s340
      %s343 = sphi 0, %s342
      %s357 = sphi 0, %s343
      %s361 = sphi 0, %s361
      %s363 = sphi 0, %s361
      %s364 = sphi 0, %s363
      %s378 = sphi 0, %s364
      %s382 = sphi 0, %s382
      %s384 = sphi 0, %s382
      %s385 = sphi 0, %s384
      %s399 = sphi 0, %s385
      %s405 = sphi 0, %s407
      %s408 = sphi 0, %s405
      %s409 = sphi 0, %s408
      %s425 = sphi 0, %s409
    $region4: #{mybert_forward.1} parent=1 // loop_header_branch
      %41 = sbr.rel (%p39) target = $region8
    $region5: #{mybert_forward.1} parent=1 // loop_body
      %s43 = ssub.s32 %s38, 1
      %s44 = ssub.s32 %s38, 2
      %s45 = sadd.s32 %s38, 1
      %s47 = sadd.s32 %s46, 1
      %p50 = scmp.eq.s32.totalorder %s38, 1
      %p51 = scmp.ne.s32.totalorder %s46, %s48
      %p52 = scmp.eq.s32.totalorder %s38, 0
      %p53 = por %p51, %p52
      %p54 = scmp.ne.s32.totalorder %s46, %s48
      %p55 = scmp.eq.s32.totalorder %s43, 1
      %p56 = por %p54, %p55
      %p57 = scmp.ne.s32.totalorder %s48, %s49
      %p58 = scmp.eq.s32.totalorder %s43, 0
      %p59 = por %p57, %p58
      %p60 = scmp.ne.s32.totalorder %s48, %s49
      %p61 = scmp.eq.s32.totalorder %s44, 1
      %p62 = por %p60, %p61
      %p64 = scmp.ne.s32.totalorder %s49, %s63
      %p65 = scmp.eq.s32.totalorder %s44, 0
      %p66 = por %p64, %p65
      %s68 = sadd.s32 %s67, 1
      %p71 = scmp.eq.s32.totalorder %s38, 1
      %p72 = scmp.ne.s32.totalorder %s67, %s69
      %p73 = scmp.eq.s32.totalorder %s38, 0
      %p74 = por %p72, %p73
      %p75 = scmp.ne.s32.totalorder %s67, %s69
      %p76 = scmp.eq.s32.totalorder %s43, 1
      %p77 = por %p75, %p76
      %p78 = scmp.ne.s32.totalorder %s69, %s70
      %p79 = scmp.eq.s32.totalorder %s43, 0
      %p80 = por %p78, %p79
      %p81 = scmp.ne.s32.totalorder %s69, %s70
      %p82 = scmp.eq.s32.totalorder %s44, 1
      %p83 = por %p81, %p82
      %p85 = scmp.ne.s32.totalorder %s70, %s84
      %p86 = scmp.eq.s32.totalorder %s44, 0
      %p87 = por %p85, %p86
      %s89 = sadd.s32 %s88, 1
      %p92 = scmp.eq.s32.totalorder %s38, 1
      %p93 = scmp.ne.s32.totalorder %s88, %s90
      %p94 = scmp.eq.s32.totalorder %s38, 0
      %p95 = por %p93, %p94
      %p96 = scmp.ne.s32.totalorder %s88, %s90
      %p97 = scmp.eq.s32.totalorder %s43, 1
      %p98 = por %p96, %p97
      %p99 = scmp.ne.s32.totalorder %s90, %s91
      %p100 = scmp.eq.s32.totalorder %s43, 0
      %p101 = por %p99, %p100
      %p102 = scmp.ne.s32.totalorder %s90, %s91
      %p103 = scmp.eq.s32.totalorder %s44, 1
      %p104 = por %p102, %p103
      %p106 = scmp.ne.s32.totalorder %s91, %s105
      %p107 = scmp.eq.s32.totalorder %s44, 0
      %p108 = por %p106, %p107
      %s110 = sadd.s32 %s109, 1
      %p113 = scmp.eq.s32.totalorder %s38, 1
      %p114 = scmp.ne.s32.totalorder %s109, %s111
      %p115 = scmp.eq.s32.totalorder %s38, 0
      %p116 = por %p114, %p115
      %p117 = scmp.ne.s32.totalorder %s109, %s111
      %p118 = scmp.eq.s32.totalorder %s43, 1
      %p119 = por %p117, %p118
      %p120 = scmp.ne.s32.totalorder %s111, %s112
      %p121 = scmp.eq.s32.totalorder %s43, 0
      %p122 = por %p120, %p121
      %p123 = scmp.ne.s32.totalorder %s111, %s112
      %p124 = scmp.eq.s32.totalorder %s44, 1
      %p125 = por %p123, %p124
      %p127 = scmp.ne.s32.totalorder %s112, %s126
      %p128 = scmp.eq.s32.totalorder %s44, 0
      %p129 = por %p127, %p128
      %s131 = sadd.s32 %s130, 1
      %p134 = scmp.eq.s32.totalorder %s38, 1
      %p135 = scmp.ne.s32.totalorder %s130, %s132
      %p136 = scmp.eq.s32.totalorder %s38, 0
      %p137 = por %p135, %p136
      %p138 = scmp.ne.s32.totalorder %s130, %s132
      %p139 = scmp.eq.s32.totalorder %s43, 1
      %p140 = por %p138, %p139
      %p141 = scmp.ne.s32.totalorder %s132, %s133
      %p142 = scmp.eq.s32.totalorder %s43, 0
      %p143 = por %p141, %p142
      %p144 = scmp.ne.s32.totalorder %s132, %s133
      %p145 = scmp.eq.s32.totalorder %s44, 1
      %p146 = por %p144, %p145
      %p148 = scmp.ne.s32.totalorder %s133, %s147
      %p149 = scmp.eq.s32.totalorder %s44, 0
      %p150 = por %p148, %p149
      %s152 = sadd.s32 %s151, 1
      %p155 = scmp.eq.s32.totalorder %s38, 1
      %p156 = scmp.ne.s32.totalorder %s151, %s153
      %p157 = scmp.eq.s32.totalorder %s38, 0
      %p158 = por %p156, %p157
      %p159 = scmp.ne.s32.totalorder %s151, %s153
      %p160 = scmp.eq.s32.totalorder %s43, 1
      %p161 = por %p159, %p160
      %p162 = scmp.ne.s32.totalorder %s153, %s154
      %p163 = scmp.eq.s32.totalorder %s43, 0
      %p164 = por %p162, %p163
      %p165 = scmp.ne.s32.totalorder %s153, %s154
      %p166 = scmp.eq.s32.totalorder %s44, 1
      %p167 = por %p165, %p166
      %p169 = scmp.ne.s32.totalorder %s154, %s168
      %p170 = scmp.eq.s32.totalorder %s44, 0
      %p171 = por %p169, %p170
      %s173 = sadd.s32 %s172, 1
      %p176 = scmp.eq.s32.totalorder %s38, 1
      %p177 = scmp.ne.s32.totalorder %s172, %s174
      %p178 = scmp.eq.s32.totalorder %s38, 0
      %p179 = por %p177, %p178
      %p180 = scmp.ne.s32.totalorder %s172, %s174
      %p181 = scmp.eq.s32.totalorder %s43, 1
      %p182 = por %p180, %p181
      %p183 = scmp.ne.s32.totalorder %s174, %s175
      %p184 = scmp.eq.s32.totalorder %s43, 0
      %p185 = por %p183, %p184
      %p186 = scmp.ne.s32.totalorder %s174, %s175
      %p187 = scmp.eq.s32.totalorder %s44, 1
      %p188 = por %p186, %p187
      %p190 = scmp.ne.s32.totalorder %s175, %s189
      %p191 = scmp.eq.s32.totalorder %s44, 0
      %p192 = por %p190, %p191
      %s194 = sadd.s32 %s193, 1
      %p197 = scmp.eq.s32.totalorder %s38, 1
      %p198 = scmp.ne.s32.totalorder %s193, %s195
      %p199 = scmp.eq.s32.totalorder %s38, 0
      %p200 = por %p198, %p199
      %p201 = scmp.ne.s32.totalorder %s193, %s195
      %p202 = scmp.eq.s32.totalorder %s43, 1
      %p203 = por %p201, %p202
      %p204 = scmp.ne.s32.totalorder %s195, %s196
      %p205 = scmp.eq.s32.totalorder %s43, 0
      %p206 = por %p204, %p205
      %p207 = scmp.ne.s32.totalorder %s195, %s196
      %p208 = scmp.eq.s32.totalorder %s44, 1
      %p209 = por %p207, %p208
      %p211 = scmp.ne.s32.totalorder %s196, %s210
      %p212 = scmp.eq.s32.totalorder %s44, 0
      %p213 = por %p211, %p212
      %s215 = sadd.s32 %s214, 1
      %p218 = scmp.eq.s32.totalorder %s38, 1
      %p219 = scmp.ne.s32.totalorder %s214, %s216
      %p220 = scmp.eq.s32.totalorder %s38, 0
      %p221 = por %p219, %p220
      %p222 = scmp.ne.s32.totalorder %s214, %s216
      %p223 = scmp.eq.s32.totalorder %s43, 1
      %p224 = por %p222, %p223
      %p225 = scmp.ne.s32.totalorder %s216, %s217
      %p226 = scmp.eq.s32.totalorder %s43, 0
      %p227 = por %p225, %p226
      %p228 = scmp.ne.s32.totalorder %s216, %s217
      %p229 = scmp.eq.s32.totalorder %s44, 1
      %p230 = por %p228, %p229
      %p232 = scmp.ne.s32.totalorder %s217, %s231
      %p233 = scmp.eq.s32.totalorder %s44, 0
      %p234 = por %p232, %p233
      %s236 = sadd.s32 %s235, 1
      %p239 = scmp.eq.s32.totalorder %s38, 1
      %p240 = scmp.ne.s32.totalorder %s235, %s237
      %p241 = scmp.eq.s32.totalorder %s38, 0
      %p242 = por %p240, %p241
      %p243 = scmp.ne.s32.totalorder %s235, %s237
      %p244 = scmp.eq.s32.totalorder %s43, 1
      %p245 = por %p243, %p244
      %p246 = scmp.ne.s32.totalorder %s237, %s238
      %p247 = scmp.eq.s32.totalorder %s43, 0
      %p248 = por %p246, %p247
      %p249 = scmp.ne.s32.totalorder %s237, %s238
      %p250 = scmp.eq.s32.totalorder %s44, 1
      %p251 = por %p249, %p250
      %p253 = scmp.ne.s32.totalorder %s238, %s252
      %p254 = scmp.eq.s32.totalorder %s44, 0
      %p255 = por %p253, %p254
      %s257 = sadd.s32 %s256, 1
      %p260 = scmp.eq.s32.totalorder %s38, 1
      %p261 = scmp.ne.s32.totalorder %s256, %s258
      %p262 = scmp.eq.s32.totalorder %s38, 0
      %p263 = por %p261, %p262
      %p264 = scmp.ne.s32.totalorder %s256, %s258
      %p265 = scmp.eq.s32.totalorder %s43, 1
      %p266 = por %p264, %p265
      %p267 = scmp.ne.s32.totalorder %s258, %s259
      %p268 = scmp.eq.s32.totalorder %s43, 0
      %p269 = por %p267, %p268
      %p270 = scmp.ne.s32.totalorder %s258, %s259
      %p271 = scmp.eq.s32.totalorder %s44, 1
      %p272 = por %p270, %p271
      %p274 = scmp.ne.s32.totalorder %s259, %s273
      %p275 = scmp.eq.s32.totalorder %s44, 0
      %p276 = por %p274, %p275
      %s278 = sadd.s32 %s277, 1
      %p281 = scmp.eq.s32.totalorder %s38, 1
      %p282 = scmp.ne.s32.totalorder %s277, %s279
      %p283 = scmp.eq.s32.totalorder %s38, 0
      %p284 = por %p282, %p283
      %p285 = scmp.ne.s32.totalorder %s277, %s279
      %p286 = scmp.eq.s32.totalorder %s43, 1
      %p287 = por %p285, %p286
      %p288 = scmp.ne.s32.totalorder %s279, %s280
      %p289 = scmp.eq.s32.totalorder %s43, 0
      %p290 = por %p288, %p289
      %p291 = scmp.ne.s32.totalorder %s279, %s280
      %p292 = scmp.eq.s32.totalorder %s44, 1
      %p293 = por %p291, %p292
      %p295 = scmp.ne.s32.totalorder %s280, %s294
      %p296 = scmp.eq.s32.totalorder %s44, 0
      %p297 = por %p295, %p296
      %s299 = sadd.s32 %s298, 1
      %p302 = scmp.eq.s32.totalorder %s38, 1
      %p303 = scmp.ne.s32.totalorder %s298, %s300
      %p304 = scmp.eq.s32.totalorder %s38, 0
      %p305 = por %p303, %p304
      %p306 = scmp.ne.s32.totalorder %s298, %s300
      %p307 = scmp.eq.s32.totalorder %s43, 1
      %p308 = por %p306, %p307
      %p309 = scmp.ne.s32.totalorder %s300, %s301
      %p310 = scmp.eq.s32.totalorder %s43, 0
      %p311 = por %p309, %p310
      %p312 = scmp.ne.s32.totalorder %s300, %s301
      %p313 = scmp.eq.s32.totalorder %s44, 1
      %p314 = por %p312, %p313
      %p316 = scmp.ne.s32.totalorder %s301, %s315
      %p317 = scmp.eq.s32.totalorder %s44, 0
      %p318 = por %p316, %p317
      %s320 = sadd.s32 %s319, 1
      %p323 = scmp.eq.s32.totalorder %s38, 1
      %p324 = scmp.ne.s32.totalorder %s319, %s321
      %p325 = scmp.eq.s32.totalorder %s38, 0
      %p326 = por %p324, %p325
      %p327 = scmp.ne.s32.totalorder %s319, %s321
      %p328 = scmp.eq.s32.totalorder %s43, 1
      %p329 = por %p327, %p328
      %p330 = scmp.ne.s32.totalorder %s321, %s322
      %p331 = scmp.eq.s32.totalorder %s43, 0
      %p332 = por %p330, %p331
      %p333 = scmp.ne.s32.totalorder %s321, %s322
      %p334 = scmp.eq.s32.totalorder %s44, 1
      %p335 = por %p333, %p334
      %p337 = scmp.ne.s32.totalorder %s322, %s336
      %p338 = scmp.eq.s32.totalorder %s44, 0
      %p339 = por %p337, %p338
      %s341 = sadd.s32 %s340, 1
      %p344 = scmp.eq.s32.totalorder %s38, 1
      %p345 = scmp.ne.s32.totalorder %s340, %s342
      %p346 = scmp.eq.s32.totalorder %s38, 0
      %p347 = por %p345, %p346
      %p348 = scmp.ne.s32.totalorder %s340, %s342
      %p349 = scmp.eq.s32.totalorder %s43, 1
      %p350 = por %p348, %p349
      %p351 = scmp.ne.s32.totalorder %s342, %s343
      %p352 = scmp.eq.s32.totalorder %s43, 0
      %p353 = por %p351, %p352
      %p354 = scmp.ne.s32.totalorder %s342, %s343
      %p355 = scmp.eq.s32.totalorder %s44, 1
      %p356 = por %p354, %p355
      %p358 = scmp.ne.s32.totalorder %s343, %s357
      %p359 = scmp.eq.s32.totalorder %s44, 0
      %p360 = por %p358, %p359
      %s362 = sadd.s32 %s361, 1
      %p365 = scmp.eq.s32.totalorder %s38, 1
      %p366 = scmp.ne.s32.totalorder %s361, %s363
      %p367 = scmp.eq.s32.totalorder %s38, 0
      %p368 = por %p366, %p367
      %p369 = scmp.ne.s32.totalorder %s361, %s363
      %p370 = scmp.eq.s32.totalorder %s43, 1
      %p371 = por %p369, %p370
      %p372 = scmp.ne.s32.totalorder %s363, %s364
      %p373 = scmp.eq.s32.totalorder %s43, 0
      %p374 = por %p372, %p373
      %p375 = scmp.ne.s32.totalorder %s363, %s364
      %p376 = scmp.eq.s32.totalorder %s44, 1
      %p377 = por %p375, %p376
      %p379 = scmp.ne.s32.totalorder %s364, %s378
      %p380 = scmp.eq.s32.totalorder %s44, 0
      %p381 = por %p379, %p380
      %s383 = sadd.s32 %s382, 1
      %p386 = scmp.eq.s32.totalorder %s38, 1
      %p387 = scmp.ne.s32.totalorder %s382, %s384
      %p388 = scmp.eq.s32.totalorder %s38, 0
      %p389 = por %p387, %p388
      %p390 = scmp.ne.s32.totalorder %s382, %s384
      %p391 = scmp.eq.s32.totalorder %s43, 1
      %p392 = por %p390, %p391
      %p393 = scmp.ne.s32.totalorder %s384, %s385
      %p394 = scmp.eq.s32.totalorder %s43, 0
      %p395 = por %p393, %p394
      %p396 = scmp.ne.s32.totalorder %s384, %s385
      %p397 = scmp.eq.s32.totalorder %s44, 1
      %p398 = por %p396, %p397
      %p400 = scmp.ne.s32.totalorder %s385, %s399
      %p401 = scmp.eq.s32.totalorder %s44, 0
      %p402 = por %p400, %p401
      %s403 = ssub.s32 %s38, %s45
      %p404 = scmp.eq.s32.totalorder %s403, 0
      %s406 = sadd.s32 %s405, 1
      %s407 = scalar_select %p404, %s405, %s406
      %p410 = pneg %p404
      %p411 = scmp.eq.s32.totalorder %s38, 1
      %p412 = por %p410, %p411
      %p413 = scmp.ne.s32.totalorder %s405, %s408
      %p414 = scmp.eq.s32.totalorder %s38, 0
      %p415 = por %p413, %p414
      %p416 = scmp.ne.s32.totalorder %s405, %s408
      %p417 = scmp.eq.s32.totalorder %s43, 1
      %p418 = por %p416, %p417
      %p419 = scmp.ne.s32.totalorder %s408, %s409
      %p420 = scmp.eq.s32.totalorder %s43, 0
      %p421 = por %p419, %p420
      %p422 = scmp.ne.s32.totalorder %s408, %s409
      %p423 = scmp.eq.s32.totalorder %s44, 1
      %p424 = por %p422, %p423
      %p426 = scmp.ne.s32.totalorder %s409, %s425
      %p427 = scmp.eq.s32.totalorder %s44, 0
      %p428 = por %p426, %p427
      %p429 = scmp.le.s32.totalorder 1, %s38
      %p430 = scmp.lt.s32.totalorder %s38, 3
      %p431 = pnand %p429, %p430
      %p432 = pneg %p431
      // Predicated region
      $region9: #{mybert_forward.1} parent=5 // pred_check
        _
      $region10: #{mybert_forward.1} parent=5 // pred_check_branch
        %434 = sbr.rel (%p431) target = $region12
      $region11: #{mybert_forward.1} parent=5 // pred_region
        %s435 = ssub.s32 %s38, 1
        // Predicated region
        $region13: #{mybert_forward.1} parent=11 // pred_check
          %p436 = pneg %p59
        $region14: #{mybert_forward.1} parent=11 // pred_check_branch
          %438 = sbr.rel (%p436) target = $region16
        $region15: #{mybert_forward.1} parent=11 // pred_region
          _
        $region16: #{mybert_forward.1} parent=11 // pred_fallthru
          _
        // Predicated region
        $region17: #{mybert_forward.1} parent=11 // pred_check
          %p439 = pneg %p80
        $region18: #{mybert_forward.1} parent=11 // pred_check_branch
          %441 = sbr.rel (%p439) target = $region20
        $region19: #{mybert_forward.1} parent=11 // pred_region
          _
        $region20: #{mybert_forward.1} parent=11 // pred_fallthru
          _
        // Predicated region
        $region21: #{mybert_forward.1} parent=11 // pred_check
          %p442 = pneg %p101
        $region22: #{mybert_forward.1} parent=11 // pred_check_branch
          %444 = sbr.rel (%p442) target = $region24
        $region23: #{mybert_forward.1} parent=11 // pred_region
          _
        $region24: #{mybert_forward.1} parent=11 // pred_fallthru
          _
        // Predicated region
        $region25: #{mybert_forward.1} parent=11 // pred_check
          %p445 = pneg %p122
        $region26: #{mybert_forward.1} parent=11 // pred_check_branch
          %447 = sbr.rel (%p445) target = $region28
        $region27: #{mybert_forward.1} parent=11 // pred_region
          _
        $region28: #{mybert_forward.1} parent=11 // pred_fallthru
          _
        // Predicated region
        $region29: #{mybert_forward.1} parent=11 // pred_check
          %p448 = pneg %p143
        $region30: #{mybert_forward.1} parent=11 // pred_check_branch
          %450 = sbr.rel (%p448) target = $region32
        $region31: #{mybert_forward.1} parent=11 // pred_region
          _
        $region32: #{mybert_forward.1} parent=11 // pred_fallthru
          _
        // Predicated region
        $region33: #{mybert_forward.1} parent=11 // pred_check
          %p451 = pneg %p164
        $region34: #{mybert_forward.1} parent=11 // pred_check_branch
          %453 = sbr.rel (%p451) target = $region36
        $region35: #{mybert_forward.1} parent=11 // pred_region
          _
        $region36: #{mybert_forward.1} parent=11 // pred_fallthru
          _
        // Predicated region
        $region37: #{mybert_forward.1} parent=11 // pred_check
          %p454 = pneg %p185
        $region38: #{mybert_forward.1} parent=11 // pred_check_branch
          %456 = sbr.rel (%p454) target = $region40
        $region39: #{mybert_forward.1} parent=11 // pred_region
          _
        $region40: #{mybert_forward.1} parent=11 // pred_fallthru
          _
        // Predicated region
        $region41: #{mybert_forward.1} parent=11 // pred_check
          %p457 = pneg %p206
        $region42: #{mybert_forward.1} parent=11 // pred_check_branch
          %459 = sbr.rel (%p457) target = $region44
        $region43: #{mybert_forward.1} parent=11 // pred_region
          _
        $region44: #{mybert_forward.1} parent=11 // pred_fallthru
          _
        // Predicated region
        $region45: #{mybert_forward.1} parent=11 // pred_check
          %p460 = pneg %p227
        $region46: #{mybert_forward.1} parent=11 // pred_check_branch
          %462 = sbr.rel (%p460) target = $region48
        $region47: #{mybert_forward.1} parent=11 // pred_region
          _
        $region48: #{mybert_forward.1} parent=11 // pred_fallthru
          _
        // Predicated region
        $region49: #{mybert_forward.1} parent=11 // pred_check
          %p463 = pneg %p248
        $region50: #{mybert_forward.1} parent=11 // pred_check_branch
          %465 = sbr.rel (%p463) target = $region52
        $region51: #{mybert_forward.1} parent=11 // pred_region
          _
        $region52: #{mybert_forward.1} parent=11 // pred_fallthru
          _
        // Predicated region
        $region53: #{mybert_forward.1} parent=11 // pred_check
          %p466 = pneg %p269
        $region54: #{mybert_forward.1} parent=11 // pred_check_branch
          %468 = sbr.rel (%p466) target = $region56
        $region55: #{mybert_forward.1} parent=11 // pred_region
          _
        $region56: #{mybert_forward.1} parent=11 // pred_fallthru
          _
        // Predicated region
        $region57: #{mybert_forward.1} parent=11 // pred_check
          %p469 = pneg %p290
        $region58: #{mybert_forward.1} parent=11 // pred_check_branch
          %471 = sbr.rel (%p469) target = $region60
        $region59: #{mybert_forward.1} parent=11 // pred_region
          _
        $region60: #{mybert_forward.1} parent=11 // pred_fallthru
          _
        // Predicated region
        $region61: #{mybert_forward.1} parent=11 // pred_check
          %p472 = pneg %p311
        $region62: #{mybert_forward.1} parent=11 // pred_check_branch
          %474 = sbr.rel (%p472) target = $region64
        $region63: #{mybert_forward.1} parent=11 // pred_region
          _
        $region64: #{mybert_forward.1} parent=11 // pred_fallthru
          _
        // Predicated region
        $region65: #{mybert_forward.1} parent=11 // pred_check
          %p475 = pneg %p332
        $region66: #{mybert_forward.1} parent=11 // pred_check_branch
          %477 = sbr.rel (%p475) target = $region68
        $region67: #{mybert_forward.1} parent=11 // pred_region
          _
        $region68: #{mybert_forward.1} parent=11 // pred_fallthru
          _
        // Predicated region
        $region69: #{mybert_forward.1} parent=11 // pred_check
          %p478 = pneg %p353
        $region70: #{mybert_forward.1} parent=11 // pred_check_branch
          %480 = sbr.rel (%p478) target = $region72
        $region71: #{mybert_forward.1} parent=11 // pred_region
          _
        $region72: #{mybert_forward.1} parent=11 // pred_fallthru
          _
        // Predicated region
        $region73: #{mybert_forward.1} parent=11 // pred_check
          %p481 = pneg %p374
        $region74: #{mybert_forward.1} parent=11 // pred_check_branch
          %483 = sbr.rel (%p481) target = $region76
        $region75: #{mybert_forward.1} parent=11 // pred_region
          _
        $region76: #{mybert_forward.1} parent=11 // pred_fallthru
          _
        // Predicated region
        $region77: #{mybert_forward.1} parent=11 // pred_check
          %p484 = pneg %p395
        $region78: #{mybert_forward.1} parent=11 // pred_check_branch
          %486 = sbr.rel (%p484) target = $region80
        $region79: #{mybert_forward.1} parent=11 // pred_region
          _
        $region80: #{mybert_forward.1} parent=11 // pred_fallthru
          _
      $region12: #{mybert_forward.1} parent=5 // pred_fallthru
        _
      %p487 = scmp.lt.s32.totalorder %s38, 2
      // Predicated region
      $region81: #{mybert_forward.1} parent=5 // pred_check
        %p488 = pneg %p487
      $region82: #{mybert_forward.1} parent=5 // pred_check_branch
        %490 = sbr.rel (%p488) target = $region84
      $region83: #{mybert_forward.1} parent=5 // pred_region
        _
      $region84: #{mybert_forward.1} parent=5 // pred_fallthru
        _
      %p491 = scmp.le.s32.totalorder 1, %s38
      %p492 = scmp.lt.s32.totalorder %s38, 3
      %p493 = pnand %p491, %p492
      %p494 = pneg %p493
      // Predicated region
      $region85: #{mybert_forward.1} parent=5 // pred_check
        _
      $region86: #{mybert_forward.1} parent=5 // pred_check_branch
        %496 = sbr.rel (%p493) target = $region88
      $region87: #{mybert_forward.1} parent=5 // pred_region
        %s497 = ssub.s32 %s38, 1
        %p498 = pneg %p59
        %p499 = pneg %p56
        %p500 = pneg %p80
        %p501 = pneg %p77
        %p502 = pneg %p101
        %p503 = pneg %p98
        %p504 = pneg %p122
        %p505 = pneg %p119
        %p506 = pneg %p143
        %p507 = pneg %p140
        %p508 = pneg %p164
        %p509 = pneg %p161
        %p510 = pneg %p185
        %p511 = pneg %p182
        %p512 = pneg %p206
        %p513 = pneg %p203
        %p514 = pneg %p227
        %p515 = pneg %p224
        %p516 = pneg %p248
        %p517 = pneg %p245
        %p518 = pneg %p269
        %p519 = pneg %p266
        %p520 = pneg %p290
        %p521 = pneg %p287
        %p522 = pneg %p311
        %p523 = pneg %p308
        %p524 = pneg %p332
        %p525 = pneg %p329
        %p526 = pneg %p353
        %p527 = pneg %p350
        %p528 = pneg %p374
        %p529 = pneg %p371
        %p530 = pneg %p395
        %p531 = pneg %p392
        %p532 = pneg %p421
        %p533 = pneg %p418
        %s534 = sand.u32 %s408, 1
        %s535 = scalar_lea.sflag [#allocation7], %s534
        %s536 = sand.u32 %s408, 1
        %s537 = scalar_lea.vmem [#allocation6], %s536
        %v539 = vlaneseq
        %v540 = vshrl.u32 %v539, 7
        %v541 = vlaneseq
        %v542 = vand.u32 %v541, 127
        %s543 = smul.u32 %s43, 128
        %s544 = sld [smem:[#allocation4 + %s543]]
        %vm545 = vcmp.eq.s32.totalorder %v540, 0
        %v546 = vstv %s544
        %v547 = vsel %vm545, %v546, 0
        %s548 = sld [smem:[#allocation5 + %s543]]
        %p549 = scmp.gt.s32.totalorder %s548, 0
        %s550 = scalar_select %p549, 0.0, -1e+09
        %vm551 = vcmp.eq.s32.totalorder %v542, 0
        %v552 = vstv %s550
        %v553 = vsel %vm551, %v552, 0.0
        %s554 = sadd.s32 %s543, 1
        %s555 = sld [smem:[#allocation4 + %s554]]
        %vm556 = vcmp.eq.s32.totalorder %v540, 1
        %v557 = vstv %s555
        %v558 = vsel %vm556, %v557, %v547
        %s559 = sld [smem:[#allocation5 + %s554]]
        %p560 = scmp.gt.s32.totalorder %s559, 0
        %s561 = scalar_select %p560, 0.0, -1e+09
        %vm562 = vcmp.eq.s32.totalorder %v542, 1
        %v563 = vstv %s561
        %v564 = vsel %vm562, %v563, %v553
        %s565 = sadd.s32 %s543, 2
        %s566 = sld [smem:[#allocation4 + %s565]]
        %vm567 = vcmp.eq.s32.totalorder %v540, 2
        %v568 = vstv %s566
        %v569 = vsel %vm567, %v568, %v558
        %s570 = sld [smem:[#allocation5 + %s565]]
        %p571 = scmp.gt.s32.totalorder %s570, 0
        %s572 = scalar_select %p571, 0.0, -1e+09
        %vm573 = vcmp.eq.s32.totalorder %v542, 2
        %v574 = vstv %s572
        %v575 = vsel %vm573, %v574, %v564
        %s576 = sadd.s32 %s543, 3
        %s577 = sld [smem:[#allocation4 + %s576]]
        %vm578 = vcmp.eq.s32.totalorder %v540, 3
        %v579 = vstv %s577
        %v580 = vsel %vm578, %v579, %v569
        %s581 = sld [smem:[#allocation5 + %s576]]
        %p582 = scmp.gt.s32.totalorder %s581, 0
        %s583 = scalar_select %p582, 0.0, -1e+09
        %vm584 = vcmp.eq.s32.totalorder %v542, 3
        %v585 = vstv %s583
        %v586 = vsel %vm584, %v585, %v575
        %s587 = sadd.s32 %s543, 4
        %s588 = sld [smem:[#allocation4 + %s587]]
        %vm589 = vcmp.eq.s32.totalorder %v540, 4
        %v590 = vstv %s588
        %v591 = vsel %vm589, %v590, %v580
        %s592 = sld [smem:[#allocation5 + %s587]]
        %p593 = scmp.gt.s32.totalorder %s592, 0
        %s594 = scalar_select %p593, 0.0, -1e+09
        %vm595 = vcmp.eq.s32.totalorder %v542, 4
        %v596 = vstv %s594
        %v597 = vsel %vm595, %v596, %v586
        %s598 = sadd.s32 %s543, 5
        %s599 = sld [smem:[#allocation4 + %s598]]
        %vm600 = vcmp.eq.s32.totalorder %v540, 5
        %v601 = vstv %s599
        %v602 = vsel %vm600, %v601, %v591
        %s603 = sld [smem:[#allocation5 + %s598]]
        %p604 = scmp.gt.s32.totalorder %s603, 0
        %s605 = scalar_select %p604, 0.0, -1e+09
        %vm606 = vcmp.eq.s32.totalorder %v542, 5
        %v607 = vstv %s605
        %v608 = vsel %vm606, %v607, %v597
        %s609 = sadd.s32 %s543, 6
        %s610 = sld [smem:[#allocation4 + %s609]]
        %vm611 = vcmp.eq.s32.totalorder %v540, 6
        %v612 = vstv %s610
        %v613 = vsel %vm611, %v612, %v602
        %s614 = sld [smem:[#allocation5 + %s609]]
        %p615 = scmp.gt.s32.totalorder %s614, 0
        %s616 = scalar_select %p615, 0.0, -1e+09
        %vm617 = vcmp.eq.s32.totalorder %v542, 6
        %v618 = vstv %s616
        %v619 = vsel %vm617, %v618, %v608
        %s620 = sadd.s32 %s543, 7
        %s621 = sld [smem:[#allocation4 + %s620]]
        %vm622 = vcmp.eq.s32.totalorder %v540, 7
        %v623 = vstv %s621
        %v624 = vsel %vm622, %v623, %v613
        %s625 = sld [smem:[#allocation5 + %s620]]
        %p626 = scmp.gt.s32.totalorder %s625, 0
        %s627 = scalar_select %p626, 0.0, -1e+09
        %vm628 = vcmp.eq.s32.totalorder %v542, 7
        %v629 = vstv %s627
        %v630 = vsel %vm628, %v629, %v619
        %vm631 = vcmp.eq.s32.totalorder %v542, %v624
        %v632 = vsel %vm631, 1, 0
        %v633 = vcvt.s32.f32 %v632
        %v634 = vld [vmem:[%s2] sm:$0xff]
        %v635 = vld [vmem:[%s2 + $0x8] sm:$0xff]
        %v636 = vld [vmem:[%s2 + $0x10] sm:$0xff]
        %v637 = vld [vmem:[%s2 + $0x18] sm:$0xff]
        %v638 = vld [vmem:[%s2 + $0x20] sm:$0xff]
        %v639 = vld [vmem:[%s2 + $0x28] sm:$0xff]
        %v640 = vld [vmem:[%s2 + $0x30] sm:$0xff]
        %v641 = vld [vmem:[%s2 + $0x38] sm:$0xff]
        %v642 = vld [vmem:[%s2 + $0x40] sm:$0xff]
        %v643 = vld [vmem:[%s2 + $0x48] sm:$0xff]
        %v644 = vld [vmem:[%s2 + $0x50] sm:$0xff]
        %v645 = vld [vmem:[%s2 + $0x58] sm:$0xff]
        %v646 = vld [vmem:[%s2 + $0x60] sm:$0xf]
        %v647 = vld [vmem:[%s3] sm:$0xff]
        %vm648 = vcmask 818176
        %v650 = vsel %vm648, %v633, 0
        %vm652 = vcmask 1043456
        %v654 = vsel %vm652, %v646, 0
        %656 = vmatprep.subr.mxu0 0.0
        %657 = vmatpush1.msra.mxu0 %v634
        %658 = vmatprep.subr.mxu0 0.0
        %659 = vmatpush1.msra.mxu0 %v635
        %660 = vmatprep.subr.mxu0 0.0
        %661 = vmatpush1.msra.mxu0 %v636
        %662 = vmatprep.subr.mxu0 0.0
        %663 = vmatpush1.msra.mxu0 %v637
        %664 = vmatprep.subr.mxu0 0.0
        %665 = vmatpush1.msra.mxu0 %v638
        %666 = vmatprep.subr.mxu0 0.0
        %667 = vmatpush1.msra.mxu0 %v639
        %668 = vmatprep.subr.mxu0 0.0
        %669 = vmatpush1.msra.mxu0 %v640
        %670 = vmatprep.subr.mxu0 0.0
        %671 = vmatpush1.msra.mxu0 %v641
        %672 = vmatprep.subr.mxu0 0.0
        %673 = vmatpush1.msra.mxu0 %v642
        %674 = vmatprep.subr.mxu0 0.0
        %675 = vmatpush1.msra.mxu0 %v643
        %676 = vmatprep.subr.mxu0 0.0
        %677 = vmatpush1.msra.mxu0 %v644
        %678 = vmatprep.subr.mxu0 0.0
        %679 = vmatpush1.msra.mxu0 %v645
        %680 = vmatprep.subr.mxu0 0.0
        %681 = vmatpush1.msra.mxu0 %v654
        %682 = vmatprep.subr.mxu0 0.0
        %683 = vmatpush1.msra.mxu0 0.0
        %684 = vmatprep.subr.mxu0 0.0
        %685 = vmatpush1.msra.mxu0 0.0
        %686 = vmatprep.subr.mxu0 0.0
        %687 = vmatpush1.msra.mxu0 0.0
        %688 = vmatprep.subr.mxu0 0.0
        %689 = vmatpush1.msra.mxu0 0.0
        %690 = vmatprep.subr.mxu0 0.0
        %691 = vmatpush1.msra.mxu0 0.0
        %692 = vmatprep.subr.mxu0 0.0
        %693 = vmatpush1.msra.mxu0 0.0
        %694 = vmatprep.subr.mxu0 0.0
        %695 = vmatpush1.msra.mxu0 0.0
        %696 = vmatprep.subr.mxu0 0.0
        %697 = vmatpush1.msra.mxu0 0.0
        %698 = vmatprep.subr.mxu0 0.0
        %699 = vmatpush1.msra.mxu0 0.0
        %700 = vmatprep.subr.mxu0 0.0
        %701 = vmatpush1.msra.mxu0 0.0
        %702 = vmatprep.subr.mxu0 0.0
        %703 = vmatpush1.msra.mxu0 0.0
        %704 = vmatprep.subr.mxu0 0.0
        %705 = vmatpush1.msra.mxu0 0.0
        %706 = vmatprep.subr.mxu0 0.0
        %707 = vmatpush1.msra.mxu0 0.0
        %708 = vmatprep.subr.mxu0 0.0
        %709 = vmatpush1.msra.mxu0 0.0
        %710 = vmatprep.subr.mxu0 0.0
        %711 = vmatpush1.msra.mxu0 0.0
        %712 = vmatprep.subr.mxu0 0.0
        %713 = vmatpush1.msra.mxu0 0.0
        %714 = vmatprep.subr.mxu0 0.0
        %715 = vmatpush1.msra.mxu0 0.0
        %716 = vmatprep.subr.mxu0 0.0
        %717 = vmatpush1.msra.mxu0 0.0
        %718 = vmatprep.subr.mxu0 0.0
        %719 = vmatpush1.msra.mxu0 0.0
        %720 = vmatprep.mubr.f32.mxu0 0.0
        %721 = vmatmul.mubr.f32.gmra.mrb[0].mxu0 %v650
        %v722 = vpop.f32.mrb[0].mxu0
        %v723 = vadd.f32 %v647, %v722
        %v724 = vpop.f32.mrb[0].mxu0
        %725 = vdwg.mxu0
        %v726 = vld [vmem:[%s4] sm:$0x1]
        %v727 = vlaneseq
        %v728 = vshrl.u32 %v727, 7
        %v729 = vsub.s32 0, %v728
        %v730 = vrot.slane %v726, %v729
        %v731 = vadd.f32 %v723, %v730
        %v732 = vld [vmem:[%s5] sm:$0x1]
        %v733 = vld [vmem:[%s6] sm:$0x1]
        %vm734 = vcmask 261120
        %v735 = vsel %vm734, %v731, 0.0
        %736 = vadd.xlane.f32.xlu0 %v735
        %v737 = vpop.xlane.xlu0 %736
        %v738 = vrcp.pop 32.0
        %v739 = vmul.f32 %v737, %v738
        %v740 = vsub.f32 %v731, %v739
        %v741 = vmul.f32 %v740, %v740
        %v742 = vsel %vm734, %v741, 0.0
        %743 = vadd.xlane.f32.xlu0 %v742
        %v744 = vpop.xlane.xlu0 %743
        %v745 = vmul.f32 %v744, %v738
        %v746 = vadd.f32 %v745, 1e-12
        %v747 = vrsqrt.pop %v746
        %v748 = vmul.f32 %v740, %v747
        %v750 = vlaneseq
        %v751 = vshrl.u32 %v750, 7
        %v752 = vsub.s32 0, %v751
        %v753 = vrot.slane %v732, %v752
        %v755 = vmul.f32 %v748, %v753
        %v757 = vlaneseq
        %v758 = vshrl.u32 %v757, 7
        %v759 = vsub.s32 0, %v758
        %v760 = vrot.slane %v733, %v759
        %v762 = vadd.f32 %v755, %v760
        %v763 = vpack.c.bf16 %v762, %v762
        %v764 = vld [vmem:[%s7] sm:$0xf]
        %v765 = vld [vmem:[%s7 + $0x4] sm:$0xf]
        %v766 = vld [vmem:[%s7 + $0x8] sm:$0xf]
        %v767 = vld [vmem:[%s7 + $0xc] sm:$0xf]
        %v768 = vld [vmem:[%s7 + $0x10] sm:$0xf]
        %v769 = vld [vmem:[%s7 + $0x14] sm:$0xf]
        %v770 = vld [vmem:[%s7 + $0x18] sm:$0xf]
        %v771 = vld [vmem:[%s7 + $0x1c] sm:$0xf]
        %v772 = vld [vmem:[%s7 + $0x20] sm:$0xf]
        %v773 = vld [vmem:[%s7 + $0x24] sm:$0xf]
        %v774 = vld [vmem:[%s7 + $0x28] sm:$0xf]
        %v775 = vld [vmem:[%s7 + $0x2c] sm:$0xf]
        %v776 = vld [vmem:[%s8] sm:$0xff]
        %v777 = vld [vmem:[%s8 + $0x8] sm:$0xff]
        %v778 = vld [vmem:[%s8 + $0x10] sm:$0xff]
        %v779 = vld [vmem:[%s8 + $0x18] sm:$0xff]
        %v780 = vld [vmem:[%s8 + $0x20] sm:$0xff]
        %v781 = vld [vmem:[%s8 + $0x28] sm:$0xff]
        %v782 = vld [vmem:[%s8 + $0x30] sm:$0xff]
        %v783 = vld [vmem:[%s8 + $0x38] sm:$0xff]
        %v784 = vld [vmem:[%s8 + $0x40] sm:$0xff]
        %v785 = vld [vmem:[%s8 + $0x48] sm:$0xff]
        %v786 = vld [vmem:[%s8 + $0x50] sm:$0xff]
        %v787 = vld [vmem:[%s8 + $0x58] sm:$0xff]
        %789 = vset.pattern.permute.xlu0 0
        %790 = vperm.xlu0 %789, %v776
        %v791 = vpop.permute.xlu0 %790
        %794 = vset.pattern.permute.xlu0 0
        %795 = vperm.xlu0 %794, %v777
        %v796 = vpop.permute.xlu0 %795
        %799 = vset.pattern.permute.xlu0 0
        %800 = vperm.xlu0 %799, %v778
        %v801 = vpop.permute.xlu0 %800
        %804 = vset.pattern.permute.xlu0 0
        %805 = vperm.xlu0 %804, %v779
        %v806 = vpop.permute.xlu0 %805
        %809 = vset.pattern.permute.xlu0 0
        %810 = vperm.xlu0 %809, %v780
        %v811 = vpop.permute.xlu0 %810
        %814 = vset.pattern.permute.xlu0 0
        %815 = vperm.xlu0 %814, %v781
        %v816 = vpop.permute.xlu0 %815
        %819 = vset.pattern.permute.xlu0 0
        %820 = vperm.xlu0 %819, %v782
        %v821 = vpop.permute.xlu0 %820
        %824 = vset.pattern.permute.xlu0 0
        %825 = vperm.xlu0 %824, %v783
        %v826 = vpop.permute.xlu0 %825
        %829 = vset.pattern.permute.xlu0 0
        %830 = vperm.xlu0 %829, %v784
        %v831 = vpop.permute.xlu0 %830
        %834 = vset.pattern.permute.xlu0 0
        %835 = vperm.xlu0 %834, %v785
        %v836 = vpop.permute.xlu0 %835
        %839 = vset.pattern.permute.xlu0 0
        %840 = vperm.xlu0 %839, %v786
        %v841 = vpop.permute.xlu0 %840
        %844 = vset.pattern.permute.xlu0 0
        %845 = vperm.xlu0 %844, %v787
        %v846 = vpop.permute.xlu0 %845
        %v860 = vunpack.c.l.b16 %v764
        %v861 = vunpack.c.l.b16 %v765
        %v862 = vunpack.c.l.b16 %v766
        %v863 = vunpack.c.l.b16 %v767
        %v864 = vunpack.c.l.b16 %v768
        %v865 = vunpack.c.l.b16 %v769
        %v866 = vunpack.c.l.b16 %v770
        %v867 = vunpack.c.l.b16 %v771
        %v868 = vunpack.c.l.b16 %v772
        %v869 = vunpack.c.l.b16 %v773
        %v870 = vunpack.c.l.b16 %v774
        %v871 = vunpack.c.l.b16 %v775
        %v872 = vpack.c.b16 %v861, %v860
        %v873 = vpack.c.b16 %v863, %v862
        %v874 = vpack.c.b16 %v865, %v864
        %v875 = vpack.c.b16 %v867, %v866
        %v876 = vpack.c.b16 %v869, %v868
        %v877 = vpack.c.b16 %v871, %v870
        %v879 = vsel %vm734, %v872, 0
        %v882 = vsel %vm734, %v873, 0
        %v885 = vsel %vm734, %v874, 0
        %v888 = vsel %vm734, %v875, 0
        %v891 = vsel %vm734, %v876, 0
        %v894 = vsel %vm734, %v877, 0
        %v897 = vsel %vm734, %v763, 0
        %899 = vmatprep.subr.bf16.mxu0 0
        %900 = vmatpush1.bf16.xpose.msra.mxu0 %v897
        %901 = vmatprep.subr.bf16.mxu0 0
        %902 = vmatpush1.bf16.xpose.msra.mxu0 0
        %903 = vmatprep.subr.bf16.mxu0 0
        %904 = vmatpush1.bf16.xpose.msra.mxu0 0
        %905 = vmatprep.subr.bf16.mxu0 0
        %906 = vmatpush1.bf16.xpose.msra.mxu0 0
        %907 = vmatprep.subr.bf16.mxu0 0
        %908 = vmatpush1.bf16.xpose.msra.mxu0 0
        %909 = vmatprep.subr.bf16.mxu0 0
        %910 = vmatpush1.bf16.xpose.msra.mxu0 0
        %911 = vmatprep.subr.bf16.mxu0 0
        %912 = vmatpush1.bf16.xpose.msra.mxu0 0
        %913 = vmatprep.subr.bf16.mxu0 0
        %914 = vmatpush1.bf16.xpose.msra.mxu0 0
        %915 = vmatprep.subr.bf16.mxu0 0
        %916 = vmatpush1.bf16.xpose.msra.mxu0 0
        %917 = vmatprep.subr.bf16.mxu0 0
        %918 = vmatpush1.bf16.xpose.msra.mxu0 0
        %919 = vmatprep.subr.bf16.mxu0 0
        %920 = vmatpush1.bf16.xpose.msra.mxu0 0
        %921 = vmatprep.subr.bf16.mxu0 0
        %922 = vmatpush1.bf16.xpose.msra.mxu0 0
        %923 = vmatprep.subr.bf16.mxu0 0
        %924 = vmatpush1.bf16.xpose.msra.mxu0 0
        %925 = vmatprep.subr.bf16.mxu0 0
        %926 = vmatpush1.bf16.xpose.msra.mxu0 0
        %927 = vmatprep.subr.bf16.mxu0 0
        %928 = vmatpush1.bf16.xpose.msra.mxu0 0
        %929 = vmatprep.subr.bf16.mxu0 0
        %930 = vmatpush1.bf16.xpose.msra.mxu0 0
        %931 = vmatprep.mubr.bf16.mxu0 0
        %932 = vmatmul.mubr.bf16.gmra.mrb[0].mxu0 %v879
        %v933 = vpop.f32.mrb[0].mxu0
        %v934 = vadd.f32 %v791, %v933
        %v935 = vpop.f32.mrb[0].mxu0
        %v936 = vpop.f32.mrb[0].mxu0
        %v937 = vadd.f32 %v796, %v936
        %v938 = vpop.f32.mrb[0].mxu0
        %939 = vmatprep.mubr.bf16.mxu0 0
        %940 = vmatmul.mubr.bf16.gmra.mrb[0].mxu0 %v882
        %v941 = vpop.f32.mrb[0].mxu0
        %v942 = vadd.f32 %v801, %v941
        %v943 = vpop.f32.mrb[0].mxu0
        %v944 = vpop.f32.mrb[0].mxu0
        %v945 = vadd.f32 %v806, %v944
        %v946 = vpop.f32.mrb[0].mxu0
        %947 = vmatprep.mubr.bf16.mxu0 0
        %948 = vmatmul.mubr.bf16.gmra.mrb[0].mxu0 %v885
        %v949 = vpop.f32.mrb[0].mxu0
        %v950 = vadd.f32 %v811, %v949
        %v951 = vpop.f32.mrb[0].mxu0
        %v952 = vpop.f32.mrb[0].mxu0
        %v953 = vadd.f32 %v816, %v952
        %v954 = vpop.f32.mrb[0].mxu0
        %955 = vmatprep.mubr.bf16.mxu0 0
        %956 = vmatmul.mubr.bf16.gmra.mrb[0].mxu0 %v888
        %v957 = vpop.f32.mrb[0].mxu0
        %v958 = vadd.f32 %v821, %v957
        %v959 = vpop.f32.mrb[0].mxu0
        %v960 = vpop.f32.mrb[0].mxu0
        %v961 = vadd.f32 %v826, %v960
        %v962 = vpop.f32.mrb[0].mxu0
        %963 = vmatprep.mubr.bf16.mxu0 0
        %964 = vmatmul.mubr.bf16.gmra.mrb[0].mxu0 %v891
        %v965 = vpop.f32.mrb[0].mxu0
        %v966 = vadd.f32 %v831, %v965
        %v967 = vpop.f32.mrb[0].mxu0
        %v968 = vpop.f32.mrb[0].mxu0
        %v969 = vadd.f32 %v836, %v968
        %v970 = vpop.f32.mrb[0].mxu0
        %971 = vmatprep.mubr.bf16.mxu0 0
        %972 = vmatmul.mubr.bf16.gmra.mrb[0].mxu0 %v894
        %v973 = vpop.f32.mrb[0].mxu0
        %v974 = vadd.f32 %v841, %v973
        %v975 = vpop.f32.mrb[0].mxu0
        %v976 = vpop.f32.mrb[0].mxu0
        %v977 = vadd.f32 %v846, %v976
        %v978 = vpop.f32.mrb[0].mxu0
        %979 = vdwg.mxu0
        %980 = vxpose.xlu0.b32.start [1/16] %v934, 128
        %981 = vxpose.xlu0.b32.cont [2/16] 0.0, 128
        %982 = vxpose.xlu0.b32.cont [3/16] 0.0, 128
        %983 = vxpose.xlu0.b32.cont [4/16] 0.0, 128
        %984 = vxpose.xlu0.b32.cont [5/16] 0.0, 128
        %985 = vxpose.xlu0.b32.cont [6/16] 0.0, 128
        %986 = vxpose.xlu0.b32.cont [7/16] 0.0, 128
        %987 = vxpose.xlu0.b32.cont [8/16] 0.0, 128
        %988 = vxpose.xlu0.b32.cont [9/16] 0.0, 128
        %989 = vxpose.xlu0.b32.cont [10/16] 0.0, 128
        %990 = vxpose.xlu0.b32.cont [11/16] 0.0, 128
        %991 = vxpose.xlu0.b32.cont [12/16] 0.0, 128
        %992 = vxpose.xlu0.b32.cont [13/16] 0.0, 128
        %993 = vxpose.xlu0.b32.cont [14/16] 0.0, 128
        %994 = vxpose.xlu0.b32.cont [15/16] 0.0, 128
        %995 = vxpose.xlu0.b32.end [16/16] 0.0, 128
        %v996 = vpop.trf.xlu0
        %v997 = vpop.trf.xlu0
        %v998 = vpop.trf.xlu0
        %v999 = vpop.trf.xlu0
        %v1000 = vpop.trf.xlu0
        %v1001 = vpop.trf.xlu0
        %v1002 = vpop.trf.xlu0
        %v1003 = vpop.trf.xlu0
        %v1004 = vpop.trf.xlu0
        %v1005 = vpop.trf.xlu0
        %v1006 = vpop.trf.xlu0
        %v1007 = vpop.trf.xlu0
        %v1008 = vpop.trf.xlu0
        %v1009 = vpop.trf.xlu0
        %v1010 = vpop.trf.xlu0
        %v1011 = vpop.trf.xlu0
        %vm1012 = vcmask 64512
        %v1014 = vsel %vm1012, %v996, 0
        %1016 = vmatprep.subr.mxu0 0.0
        %1017 = vmatpush1.msra.mxu0 %v950
        %1018 = vmatprep.subr.mxu0 0.0
        %1019 = vmatpush1.msra.mxu0 0.0
        %1020 = vmatprep.subr.mxu0 0.0
        %1021 = vmatpush1.msra.mxu0 0.0
        %1022 = vmatprep.subr.mxu0 0.0
        %1023 = vmatpush1.msra.mxu0 0.0
        %1024 = vmatprep.subr.mxu0 0.0
        %1025 = vmatpush1.msra.mxu0 0.0
        %1026 = vmatprep.subr.mxu0 0.0
        %1027 = vmatpush1.msra.mxu0 0.0
        %1028 = vmatprep.subr.mxu0 0.0
        %1029 = vmatpush1.msra.mxu0 0.0
        %1030 = vmatprep.subr.mxu0 0.0
        %1031 = vmatpush1.msra.mxu0 0.0
        %1032 = vmatprep.subr.mxu0 0.0
        %1033 = vmatpush1.msra.mxu0 0.0
        %1034 = vmatprep.subr.mxu0 0.0
        %1035 = vmatpush1.msra.mxu0 0.0
        %1036 = vmatprep.subr.mxu0 0.0
        %1037 = vmatpush1.msra.mxu0 0.0
        %1038 = vmatprep.subr.mxu0 0.0
        %1039 = vmatpush1.msra.mxu0 0.0
        %1040 = vmatprep.subr.mxu0 0.0
        %1041 = vmatpush1.msra.mxu0 0.0
        %1042 = vmatprep.subr.mxu0 0.0
        %1043 = vmatpush1.msra.mxu0 0.0
        %1044 = vmatprep.subr.mxu0 0.0
        %1045 = vmatpush1.msra.mxu0 0.0
        %1046 = vmatprep.subr.mxu0 0.0
        %1047 = vmatpush1.msra.mxu0 0.0
        %1048 = vmatprep.subr.mxu0 0.0
        %1049 = vmatpush1.msra.mxu0 0.0
        %1050 = vmatprep.subr.mxu0 0.0
        %1051 = vmatpush1.msra.mxu0 0.0
        %1052 = vmatprep.subr.mxu0 0.0
        %1053 = vmatpush1.msra.mxu0 0.0
        %1054 = vmatprep.subr.mxu0 0.0
        %1055 = vmatpush1.msra.mxu0 0.0
        %1056 = vmatprep.subr.mxu0 0.0
        %1057 = vmatpush1.msra.mxu0 0.0
        %1058 = vmatprep.subr.mxu0 0.0
        %1059 = vmatpush1.msra.mxu0 0.0
        %1060 = vmatprep.subr.mxu0 0.0
        %1061 = vmatpush1.msra.mxu0 0.0
        %1062 = vmatprep.subr.mxu0 0.0
        %1063 = vmatpush1.msra.mxu0 0.0
        %1064 = vmatprep.subr.mxu0 0.0
        %1065 = vmatpush1.msra.mxu0 0.0
        %1066 = vmatprep.subr.mxu0 0.0
        %1067 = vmatpush1.msra.mxu0 0.0
        %1068 = vmatprep.subr.mxu0 0.0
        %1069 = vmatpush1.msra.mxu0 0.0
        %1070 = vmatprep.subr.mxu0 0.0
        %1071 = vmatpush1.msra.mxu0 0.0
        %1072 = vmatprep.subr.mxu0 0.0
        %1073 = vmatpush1.msra.mxu0 0.0
        %1074 = vmatprep.subr.mxu0 0.0
        %1075 = vmatpush1.msra.mxu0 0.0
        %1076 = vmatprep.subr.mxu0 0.0
        %1077 = vmatpush1.msra.mxu0 0.0
        %1078 = vmatprep.subr.mxu0 0.0
        %1079 = vmatpush1.msra.mxu0 0.0
        %1080 = vmatprep.mubr.f32.mxu0 0.0
        %1081 = vmatmul.mubr.f32.gmra.mrb[0].mxu0 %v1014
        %v1082 = vpop.f32.mrb[0].mxu0
        %v1083 = vadd.f32 0.0, %v1082
        %v1084 = vpop.f32.mrb[0].mxu0
        %1085 = vdwg.mxu0
        %v1086 = vmul.f32 %v1083, 0.35355338
        %v1087 = vadd.f32 %v1086, %v630
        %v1088 = vsel %vm1012, %v1087, -inf
        %1089 = vmax.xlane.f32.xlu0 %v1088
        %v1090 = vpop.xlane.xlu0 %1089
        %v1091 = vsub.f32 %v1087, %v1090
        %v1092 = vmul.f32 %v1091, 1.442695
        %v1093 = vpow.pop %v1092
        %v1094 = vsel %vm1012, %v1093, 0.0
        %1095 = vadd.xlane.f32.xlu0 %v1094
        %v1096 = vpop.xlane.xlu0 %1095
        %v1097 = vrcp.pop %v1096
        %v1098 = vmul.f32 %v1093, %v1097
        %v1099 = vpack.c.bf16 %v966, %v966
        %v1100 = vpack.c.bf16 %v1098, %v1098
        %v1102 = vsel %vm1012, %v1099, 0
        %v1105 = vsel %vm1012, %v1100, 0
        %1107 = vmatprep.subr.bf16.mxu0 0
        %1108 = vmatpush1.bf16.xpose.msra.mxu0 %v1105
        %1109 = vmatprep.subr.bf16.mxu0 0
        %1110 = vmatpush1.bf16.xpose.msra.mxu0 0
        %1111 = vmatprep.subr.bf16.mxu0 0
        %1112 = vmatpush1.bf16.xpose.msra.mxu0 0
        %1113 = vmatprep.subr.bf16.mxu0 0
        %1114 = vmatpush1.bf16.xpose.msra.mxu0 0
        %1115 = vmatprep.subr.bf16.mxu0 0
        %1116 = vmatpush1.bf16.xpose.msra.mxu0 0
        %1117 = vmatprep.subr.bf16.mxu0 0
        %1118 = vmatpush1.bf16.xpose.msra.mxu0 0
        %1119 = vmatprep.subr.bf16.mxu0 0
        %1120 = vmatpush1.bf16.xpose.msra.mxu0 0
        %1121 = vmatprep.subr.bf16.mxu0 0
        %1122 = vmatpush1.bf16.xpose.msra.mxu0 0
        %1123 = vmatprep.subr.bf16.mxu0 0
        %1124 = vmatpush1.bf16.xpose.msra.mxu0 0
        %1125 = vmatprep.subr.bf16.mxu0 0
        %1126 = vmatpush1.bf16.xpose.msra.mxu0 0
        %1127 = vmatprep.subr.bf16.mxu0 0
        %1128 = vmatpush1.bf16.xpose.msra.mxu0 0
        %1129 = vmatprep.subr.bf16.mxu0 0
        %1130 = vmatpush1.bf16.xpose.msra.mxu0 0
        %1131 = vmatprep.subr.bf16.mxu0 0
        %1132 = vmatpush1.bf16.xpose.msra.mxu0 0
        %1133 = vmatprep.subr.bf16.mxu0 0
        %1134 = vmatpush1.bf16.xpose.msra.mxu0 0
        %1135 = vmatprep.subr.bf16.mxu0 0
        %1136 = vmatpush1.bf16.xpose.msra.mxu0 0
        %1137 = vmatprep.subr.bf16.mxu0 0
        %1138 = vmatpush1.bf16.xpose.msra.mxu0 0
        %1139 = vmatprep.mubr.bf16.mxu0 0
        %1140 = vmatmul.mubr.bf16.gmra.mrb[0].mxu0 %v1102
        %v1141 = vpop.f32.mrb[0].mxu0
        %v1142 = vadd.f32 0.0, %v1141
        %v1143 = vpop.f32.mrb[0].mxu0
        %v1144 = vpop.f32.mrb[0].mxu0
        %v1145 = vpop.f32.mrb[0].mxu0
        %1146 = vdwg.mxu0
        %1147 = vst.msk [vmem:[#allocation2] sm:$0xff] %vm1012, %v1142
        %1148 = vxpose.xlu0.b32.start [1/16] %v937, 128
        %1149 = vxpose.xlu0.b32.cont [2/16] 0.0, 128
        %1150 = vxpose.xlu0.b32.cont [3/16] 0.0, 128
        %1151 = vxpose.xlu0.b32.cont [4/16] 0.0, 128
        %1152 = vxpose.xlu0.b32.cont [5/16] 0.0, 128
        %1153 = vxpose.xlu0.b32.cont [6/16] 0.0, 128
        %1154 = vxpose.xlu0.b32.cont [7/16] 0.0, 128
        %1155 = vxpose.xlu0.b32.cont [8/16] 0.0, 128
        %1156 = vxpose.xlu0.b32.cont [9/16] 0.0, 128
        %1157 = vxpose.xlu0.b32.cont [10/16] 0.0, 128
        %1158 = vxpose.xlu0.b32.cont [11/16] 0.0, 128
        %1159 = vxpose.xlu0.b32.cont [12/16] 0.0, 128
        %1160 = vxpose.xlu0.b32.cont [13/16] 0.0, 128
        %1161 = vxpose.xlu0.b32.cont [14/16] 0.0, 128
        %1162 = vxpose.xlu0.b32.cont [15/16] 0.0, 128
        %1163 = vxpose.xlu0.b32.end [16/16] 0.0, 128
        %v1164 = vpop.trf.xlu0
        %v1165 = vpop.trf.xlu0
        %v1166 = vpop.trf.xlu0
        %v1167 = vpop.trf.xlu0
        %v1168 = vpop.trf.xlu0
        %v1169 = vpop.trf.xlu0
        %v1170 = vpop.trf.xlu0
        %v1171 = vpop.trf.xlu0
        %v1172 = vpop.trf.xlu0
        %v1173 = vpop.trf.xlu0
        %v1174 = vpop.trf.xlu0
        %v1175 = vpop.trf.xlu0
        %v1176 = vpop.trf.xlu0
        %v1177 = vpop.trf.xlu0
        %v1178 = vpop.trf.xlu0
        %v1179 = vpop.trf.xlu0
        %v1181 = vsel %vm1012, %v1164, 0
        %1183 = vmatprep.subr.mxu0 0.0
        %1184 = vmatpush1.msra.mxu0 %v953
        %1185 = vmatprep.subr.mxu0 0.0
        %1186 = vmatpush1.msra.mxu0 0.0
        %1187 = vmatprep.subr.mxu0 0.0
        %1188 = vmatpush1.msra.mxu0 0.0
        %1189 = vmatprep.subr.mxu0 0.0
        %1190 = vmatpush1.msra.mxu0 0.0
        %1191 = vmatprep.subr.mxu0 0.0
        %1192 = vmatpush1.msra.mxu0 0.0
        %1193 = vmatprep.subr.mxu0 0.0
        %1194 = vmatpush1.msra.mxu0 0.0
        %1195 = vmatprep.subr.mxu0 0.0
        %1196 = vmatpush1.msra.mxu0 0.0
        %1197 = vmatprep.subr.mxu0 0.0
        %1198 = vmatpush1.msra.mxu0 0.0
        %1199 = vmatprep.subr.mxu0 0.0
        %1200 = vmatpush1.msra.mxu0 0.0
        %1201 = vmatprep.subr.mxu0 0.0
        %1202 = vmatpush1.msra.mxu0 0.0
        %1203 = vmatprep.subr.mxu0 0.0
        %1204 = vmatpush1.msra.mxu0 0.0
        %1205 = vmatprep.subr.mxu0 0.0
        %1206 = vmatpush1.msra.mxu0 0.0
        %1207 = vmatprep.subr.mxu0 0.0
        %1208 = vmatpush1.msra.mxu0 0.0
        %1209 = vmatprep.subr.mxu0 0.0
        %1210 = vmatpush1.msra.mxu0 0.0
        %1211 = vmatprep.subr.mxu0 0.0
        %1212 = vmatpush1.msra.mxu0 0.0
        %1213 = vmatprep.subr.mxu0 0.0
        %1214 = vmatpush1.msra.mxu0 0.0
        %1215 = vmatprep.subr.mxu0 0.0
        %1216 = vmatpush1.msra.mxu0 0.0
        %1217 = vmatprep.subr.mxu0 0.0
        %1218 = vmatpush1.msra.mxu0 0.0
        %1219 = vmatprep.subr.mxu0 0.0
        %1220 = vmatpush1.msra.mxu0 0.0
        %1221 = vmatprep.subr.mxu0 0.0
        %1222 = vmatpush1.msra.mxu0 0.0
        %1223 = vmatprep.subr.mxu0 0.0
        %1224 = vmatpush1.msra.mxu0 0.0
        %1225 = vmatprep.subr.mxu0 0.0
        %1226 = vmatpush1.msra.mxu0 0.0
        %1227 = vmatprep.subr.mxu0 0.0
        %1228 = vmatpush1.msra.mxu0 0.0
        %1229 = vmatprep.subr.mxu0 0.0
        %1230 = vmatpush1.msra.mxu0 0.0
        %1231 = vmatprep.subr.mxu0 0.0
        %1232 = vmatpush1.msra.mxu0 0.0
        %1233 = vmatprep.subr.mxu0 0.0
        %1234 = vmatpush1.msra.mxu0 0.0
        %1235 = vmatprep.subr.mxu0 0.0
        %1236 = vmatpush1.msra.mxu0 0.0
        %1237 = vmatprep.subr.mxu0 0.0
        %1238 = vmatpush1.msra.mxu0 0.0
        %1239 = vmatprep.subr.mxu0 0.0
        %1240 = vmatpush1.msra.mxu0 0.0
        %1241 = vmatprep.subr.mxu0 0.0
        %1242 = vmatpush1.msra.mxu0 0.0
        %1243 = vmatprep.subr.mxu0 0.0
        %1244 = vmatpush1.msra.mxu0 0.0
        %1245 = vmatprep.subr.mxu0 0.0
        %1246 = vmatpush1.msra.mxu0 0.0
        %1247 = vmatprep.mubr.f32.mxu0 0.0
        %1248 = vmatmul.mubr.f32.gmra.mrb[0].mxu0 %v1181
        %v1249 = vpop.f32.mrb[0].mxu0
        %v1250 = vadd.f32 0.0, %v1249
        %v1251 = vpop.f32.mrb[0].mxu0
        %1252 = vdwg.mxu0
        %v1253 = vmul.f32 %v1250, 0.35355338
        %v1254 = vadd.f32 %v1253, %v630
        %v1255 = vsel %vm1012, %v1254, -inf
        %1256 = vmax.xlane.f32.xlu0 %v1255
        %v1257 = vpop.xlane.xlu0 %1256
        %v1258 = vsub.f32 %v1254, %v1257
        %v1259 = vmul.f32 %v1258, 1.442695
        %v1260 = vpow.pop %v1259
        %v1261 = vsel %vm1012, %v1260, 0.0
        %1262 = vadd.xlane.f32.xlu0 %v1261
        %v1263 = vpop.xlane.xlu0 %1262
        %v1264 = vrcp.pop %v1263
        %v1265 = vmul.f32 %v1260, %v1264
        %v1266 = vpack.c.bf16 %v969, %v969
        %v1267 = vpack.c.bf16 %v1265, %v1265
        %v1269 = vsel %vm1012, %v1266, 0
        %v1272 = vsel %vm1012, %v1267, 0
        %1274 = vmatprep.subr.bf16.mxu0 0
        %1275 = vmatpush1.bf16.xpose.msra.mxu0 %v1272
        %1276 = vmatprep.subr.bf16.mxu0 0
        %1277 = vmatpush1.bf16.xpose.msra.mxu0 0
        %1278 = vmatprep.subr.bf16.mxu0 0
        %1279 = vmatpush1.bf16.xpose.msra.mxu0 0
        %1280 = vmatprep.subr.bf16.mxu0 0
        %1281 = vmatpush1.bf16.xpose.msra.mxu0 0
        %1282 = vmatprep.subr.bf16.mxu0 0
        %1283 = vmatpush1.bf16.xpose.msra.mxu0 0
        %1284 = vmatprep.subr.bf16.mxu0 0
        %1285 = vmatpush1.bf16.xpose.msra.mxu0 0
        %1286 = vmatprep.subr.bf16.mxu0 0
        %1287 = vmatpush1.bf16.xpose.msra.mxu0 0
        %1288 = vmatprep.subr.bf16.mxu0 0
        %1289 = vmatpush1.bf16.xpose.msra.mxu0 0
        %1290 = vmatprep.subr.bf16.mxu0 0
        %1291 = vmatpush1.bf16.xpose.msra.mxu0 0
        %1292 = vmatprep.subr.bf16.mxu0 0
        %1293 = vmatpush1.bf16.xpose.msra.mxu0 0
        %1294 = vmatprep.subr.bf16.mxu0 0
        %1295 = vmatpush1.bf16.xpose.msra.mxu0 0
        %1296 = vmatprep.subr.bf16.mxu0 0
        %1297 = vmatpush1.bf16.xpose.msra.mxu0 0
        %1298 = vmatprep.subr.bf16.mxu0 0
        %1299 = vmatpush1.bf16.xpose.msra.mxu0 0
        %1300 = vmatprep.subr.bf16.mxu0 0
        %1301 = vmatpush1.bf16.xpose.msra.mxu0 0
        %1302 = vmatprep.subr.bf16.mxu0 0
        %1303 = vmatpush1.bf16.xpose.msra.mxu0 0
        %1304 = vmatprep.subr.bf16.mxu0 0
        %1305 = vmatpush1.bf16.xpose.msra.mxu0 0
        %1306 = vmatprep.mubr.bf16.mxu0 0
        %1307 = vmatmul.mubr.bf16.gmra.mrb[0].mxu0 %v1269
        %v1308 = vpop.f32.mrb[0].mxu0
        %v1309 = vadd.f32 0.0, %v1308
        %v1310 = vpop.f32.mrb[0].mxu0
        %v1311 = vpop.f32.mrb[0].mxu0
        %v1312 = vpop.f32.mrb[0].mxu0
        %1313 = vdwg.mxu0
        %1314 = vst.msk [vmem:[#allocation2 + $0x8] sm:$0xff] %vm1012, %v1309
        %1315 = vxpose.xlu0.b32.start [1/16] %v942, 128
        %1316 = vxpose.xlu0.b32.cont [2/16] 0.0, 128
        %1317 = vxpose.xlu0.b32.cont [3/16] 0.0, 128
        %1318 = vxpose.xlu0.b32.cont [4/16] 0.0, 128
        %1319 = vxpose.xlu0.b32.cont [5/16] 0.0, 128
        %1320 = vxpose.xlu0.b32.cont [6/16] 0.0, 128
        %1321 = vxpose.xlu0.b32.cont [7/16] 0.0, 128
        %1322 = vxpose.xlu0.b32.cont [8/16] 0.0, 128
        %1323 = vxpose.xlu0.b32.cont [9/16] 0.0, 128
        %1324 = vxpose.xlu0.b32.cont [10/16] 0.0, 128
        %1325 = vxpose.xlu0.b32.cont [11/16] 0.0, 128
        %1326 = vxpose.xlu0.b32.cont [12/16] 0.0, 128
        %1327 = vxpose.xlu0.b32.cont [13/16] 0.0, 128
        %1328 = vxpose.xlu0.b32.cont [14/16] 0.0, 128
        %1329 = vxpose.xlu0.b32.cont [15/16] 0.0, 128
        %1330 = vxpose.xlu0.b32.end [16/16] 0.0, 128
        %v1331 = vpop.trf.xlu0
        %v1332 = vpop.trf.xlu0
        %v1333 = vpop.trf.xlu0
        %v1334 = vpop.trf.xlu0
        %v1335 = vpop.trf.xlu0
        %v1336 = vpop.trf.xlu0
        %v1337 = vpop.trf.xlu0
        %v1338 = vpop.trf.xlu0
        %v1339 = vpop.trf.xlu0
        %v1340 = vpop.trf.xlu0
        %v1341 = vpop.trf.xlu0
        %v1342 = vpop.trf.xlu0
        %v1343 = vpop.trf.xlu0
        %v1344 = vpop.trf.xlu0
        %v1345 = vpop.trf.xlu0
        %v1346 = vpop.trf.xlu0
        %v1348 = vsel %vm1012, %v1331, 0
        %1350 = vmatprep.subr.mxu0 0.0
        %1351 = vmatpush1.msra.mxu0 %v958
        %1352 = vmatprep.subr.mxu0 0.0
        %1353 = vmatpush1.msra.mxu0 0.0
        %1354 = vmatprep.subr.mxu0 0.0
        %1355 = vmatpush1.msra.mxu0 0.0
        %1356 = vmatprep.subr.mxu0 0.0
        %1357 = vmatpush1.msra.mxu0 0.0
        %1358 = vmatprep.subr.mxu0 0.0
        %1359 = vmatpush1.msra.mxu0 0.0
        %1360 = vmatprep.subr.mxu0 0.0
        %1361 = vmatpush1.msra.mxu0 0.0
        %1362 = vmatprep.subr.mxu0 0.0
        %1363 = vmatpush1.msra.mxu0 0.0
        %1364 = vmatprep.subr.mxu0 0.0
        %1365 = vmatpush1.msra.mxu0 0.0
        %1366 = vmatprep.subr.mxu0 0.0
        %1367 = vmatpush1.msra.mxu0 0.0
        %1368 = vmatprep.subr.mxu0 0.0
        %1369 = vmatpush1.msra.mxu0 0.0
        %1370 = vmatprep.subr.mxu0 0.0
        %1371 = vmatpush1.msra.mxu0 0.0
        %1372 = vmatprep.subr.mxu0 0.0
        %1373 = vmatpush1.msra.mxu0 0.0
        %1374 = vmatprep.subr.mxu0 0.0
        %1375 = vmatpush1.msra.mxu0 0.0
        %1376 = vmatprep.subr.mxu0 0.0
        %1377 = vmatpush1.msra.mxu0 0.0
        %1378 = vmatprep.subr.mxu0 0.0
        %1379 = vmatpush1.msra.mxu0 0.0
        %1380 = vmatprep.subr.mxu0 0.0
        %1381 = vmatpush1.msra.mxu0 0.0
        %1382 = vmatprep.subr.mxu0 0.0
        %1383 = vmatpush1.msra.mxu0 0.0
        %1384 = vmatprep.subr.mxu0 0.0
        %1385 = vmatpush1.msra.mxu0 0.0
        %1386 = vmatprep.subr.mxu0 0.0
        %1387 = vmatpush1.msra.mxu0 0.0
        %1388 = vmatprep.subr.mxu0 0.0
        %1389 = vmatpush1.msra.mxu0 0.0
        %1390 = vmatprep.subr.mxu0 0.0
        %1391 = vmatpush1.msra.mxu0 0.0
        %1392 = vmatprep.subr.mxu0 0.0
        %1393 = vmatpush1.msra.mxu0 0.0
        %1394 = vmatprep.subr.mxu0 0.0
        %1395 = vmatpush1.msra.mxu0 0.0
        %1396 = vmatprep.subr.mxu0 0.0
        %1397 = vmatpush1.msra.mxu0 0.0
        %1398 = vmatprep.subr.mxu0 0.0
        %1399 = vmatpush1.msra.mxu0 0.0
        %1400 = vmatprep.subr.mxu0 0.0
        %1401 = vmatpush1.msra.mxu0 0.0
        %1402 = vmatprep.subr.mxu0 0.0
        %1403 = vmatpush1.msra.mxu0 0.0
        %1404 = vmatprep.subr.mxu0 0.0
        %1405 = vmatpush1.msra.mxu0 0.0
        %1406 = vmatprep.subr.mxu0 0.0
        %1407 = vmatpush1.msra.mxu0 0.0
        %1408 = vmatprep.subr.mxu0 0.0
        %1409 = vmatpush1.msra.mxu0 0.0
        %1410 = vmatprep.subr.mxu0 0.0
        %1411 = vmatpush1.msra.mxu0 0.0
        %1412 = vmatprep.subr.mxu0 0.0
        %1413 = vmatpush1.msra.mxu0 0.0
        %1414 = vmatprep.mubr.f32.mxu0 0.0
        %1415 = vmatmul.mubr.f32.gmra.mrb[0].mxu0 %v1348
        %v1416 = vpop.f32.mrb[0].mxu0
        %v1417 = vadd.f32 0.0, %v1416
        %v1418 = vpop.f32.mrb[0].mxu0
        %1419 = vdwg.mxu0
        %v1420 = vmul.f32 %v1417, 0.35355338
        %v1421 = vadd.f32 %v1420, %v630
        %v1422 = vsel %vm1012, %v1421, -inf
        %1423 = vmax.xlane.f32.xlu0 %v1422
        %v1424 = vpop.xlane.xlu0 %1423
        %v1425 = vsub.f32 %v1421, %v1424
        %v1426 = vmul.f32 %v1425, 1.442695
        %v1427 = vpow.pop %v1426
        %v1428 = vsel %vm1012, %v1427, 0.0
        %1429 = vadd.xlane.f32.xlu0 %v1428
        %v1430 = vpop.xlane.xlu0 %1429
        %v1431 = vrcp.pop %v1430
        %v1432 = vmul.f32 %v1427, %v1431
        %v1433 = vpack.c.bf16 %v974, %v974
        %v1434 = vpack.c.bf16 %v1432, %v1432
        %v1436 = vsel %vm1012, %v1433, 0
        %v1439 = vsel %vm1012, %v1434, 0
        %1441 = vmatprep.subr.bf16.mxu0 0
        %1442 = vmatpush1.bf16.xpose.msra.mxu0 %v1439
        %1443 = vmatprep.subr.bf16.mxu0 0
        %1444 = vmatpush1.bf16.xpose.msra.mxu0 0
        %1445 = vmatprep.subr.bf16.mxu0 0
        %1446 = vmatpush1.bf16.xpose.msra.mxu0 0
        %1447 = vmatprep.subr.bf16.mxu0 0
        %1448 = vmatpush1.bf16.xpose.msra.mxu0 0
        %1449 = vmatprep.subr.bf16.mxu0 0
        %1450 = vmatpush1.bf16.xpose.msra.mxu0 0
        %1451 = vmatprep.subr.bf16.mxu0 0
        %1452 = vmatpush1.bf16.xpose.msra.mxu0 0
        %1453 = vmatprep.subr.bf16.mxu0 0
        %1454 = vmatpush1.bf16.xpose.msra.mxu0 0
        %1455 = vmatprep.subr.bf16.mxu0 0
        %1456 = vmatpush1.bf16.xpose.msra.mxu0 0
        %1457 = vmatprep.subr.bf16.mxu0 0
        %1458 = vmatpush1.bf16.xpose.msra.mxu0 0
        %1459 = vmatprep.subr.bf16.mxu0 0
        %1460 = vmatpush1.bf16.xpose.msra.mxu0 0
        %1461 = vmatprep.subr.bf16.mxu0 0
        %1462 = vmatpush1.bf16.xpose.msra.mxu0 0
        %1463 = vmatprep.subr.bf16.mxu0 0
        %1464 = vmatpush1.bf16.xpose.msra.mxu0 0
        %1465 = vmatprep.subr.bf16.mxu0 0
        %1466 = vmatpush1.bf16.xpose.msra.mxu0 0
        %1467 = vmatprep.subr.bf16.mxu0 0
        %1468 = vmatpush1.bf16.xpose.msra.mxu0 0
        %1469 = vmatprep.subr.bf16.mxu0 0
        %1470 = vmatpush1.bf16.xpose.msra.mxu0 0
        %1471 = vmatprep.subr.bf16.mxu0 0
        %1472 = vmatpush1.bf16.xpose.msra.mxu0 0
        %1473 = vmatprep.mubr.bf16.mxu0 0
        %1474 = vmatmul.mubr.bf16.gmra.mrb[0].mxu0 %v1436
        %v1475 = vpop.f32.mrb[0].mxu0
        %v1476 = vadd.f32 0.0, %v1475
        %v1477 = vpop.f32.mrb[0].mxu0
        %v1478 = vpop.f32.mrb[0].mxu0
        %v1479 = vpop.f32.mrb[0].mxu0
        %1480 = vdwg.mxu0
        %1481 = vst.msk [vmem:[#allocation2 + $0x10] sm:$0xff] %vm1012, %v1476
        %1482 = vxpose.xlu0.b32.start [1/16] %v945, 128
        %1483 = vxpose.xlu0.b32.cont [2/16] 0.0, 128
        %1484 = vxpose.xlu0.b32.cont [3/16] 0.0, 128
        %1485 = vxpose.xlu0.b32.cont [4/16] 0.0, 128
        %1486 = vxpose.xlu0.b32.cont [5/16] 0.0, 128
        %1487 = vxpose.xlu0.b32.cont [6/16] 0.0, 128
        %1488 = vxpose.xlu0.b32.cont [7/16] 0.0, 128
        %1489 = vxpose.xlu0.b32.cont [8/16] 0.0, 128
        %1490 = vxpose.xlu0.b32.cont [9/16] 0.0, 128
        %1491 = vxpose.xlu0.b32.cont [10/16] 0.0, 128
        %1492 = vxpose.xlu0.b32.cont [11/16] 0.0, 128
        %1493 = vxpose.xlu0.b32.cont [12/16] 0.0, 128
        %1494 = vxpose.xlu0.b32.cont [13/16] 0.0, 128
        %1495 = vxpose.xlu0.b32.cont [14/16] 0.0, 128
        %1496 = vxpose.xlu0.b32.cont [15/16] 0.0, 128
        %1497 = vxpose.xlu0.b32.end [16/16] 0.0, 128
        %v1498 = vpop.trf.xlu0
        %v1499 = vpop.trf.xlu0
        %v1500 = vpop.trf.xlu0
        %v1501 = vpop.trf.xlu0
        %v1502 = vpop.trf.xlu0
        %v1503 = vpop.trf.xlu0
        %v1504 = vpop.trf.xlu0
        %v1505 = vpop.trf.xlu0
        %v1506 = vpop.trf.xlu0
        %v1507 = vpop.trf.xlu0
        %v1508 = vpop.trf.xlu0
        %v1509 = vpop.trf.xlu0
        %v1510 = vpop.trf.xlu0
        %v1511 = vpop.trf.xlu0
        %v1512 = vpop.trf.xlu0
        %v1513 = vpop.trf.xlu0
        %v1515 = vsel %vm1012, %v1498, 0
        %1517 = vmatprep.subr.mxu0 0.0
        %1518 = vmatpush1.msra.mxu0 %v961
        %1519 = vmatprep.subr.mxu0 0.0
        %1520 = vmatpush1.msra.mxu0 0.0
        %1521 = vmatprep.subr.mxu0 0.0
        %1522 = vmatpush1.msra.mxu0 0.0
        %1523 = vmatprep.subr.mxu0 0.0
        %1524 = vmatpush1.msra.mxu0 0.0
        %1525 = vmatprep.subr.mxu0 0.0
        %1526 = vmatpush1.msra.mxu0 0.0
        %1527 = vmatprep.subr.mxu0 0.0
        %1528 = vmatpush1.msra.mxu0 0.0
        %1529 = vmatprep.subr.mxu0 0.0
        %1530 = vmatpush1.msra.mxu0 0.0
        %1531 = vmatprep.subr.mxu0 0.0
        %1532 = vmatpush1.msra.mxu0 0.0
        %1533 = vmatprep.subr.mxu0 0.0
        %1534 = vmatpush1.msra.mxu0 0.0
        %1535 = vmatprep.subr.mxu0 0.0
        %1536 = vmatpush1.msra.mxu0 0.0
        %1537 = vmatprep.subr.mxu0 0.0
        %1538 = vmatpush1.msra.mxu0 0.0
        %1539 = vmatprep.subr.mxu0 0.0
        %1540 = vmatpush1.msra.mxu0 0.0
        %1541 = vmatprep.subr.mxu0 0.0
        %1542 = vmatpush1.msra.mxu0 0.0
        %1543 = vmatprep.subr.mxu0 0.0
        %1544 = vmatpush1.msra.mxu0 0.0
        %1545 = vmatprep.subr.mxu0 0.0
        %1546 = vmatpush1.msra.mxu0 0.0
        %1547 = vmatprep.subr.mxu0 0.0
        %1548 = vmatpush1.msra.mxu0 0.0
        %1549 = vmatprep.subr.mxu0 0.0
        %1550 = vmatpush1.msra.mxu0 0.0
        %1551 = vmatprep.subr.mxu0 0.0
        %1552 = vmatpush1.msra.mxu0 0.0
        %1553 = vmatprep.subr.mxu0 0.0
        %1554 = vmatpush1.msra.mxu0 0.0
        %1555 = vmatprep.subr.mxu0 0.0
        %1556 = vmatpush1.msra.mxu0 0.0
        %1557 = vmatprep.subr.mxu0 0.0
        %1558 = vmatpush1.msra.mxu0 0.0
        %1559 = vmatprep.subr.mxu0 0.0
        %1560 = vmatpush1.msra.mxu0 0.0
        %1561 = vmatprep.subr.mxu0 0.0
        %1562 = vmatpush1.msra.mxu0 0.0
        %1563 = vmatprep.subr.mxu0 0.0
        %1564 = vmatpush1.msra.mxu0 0.0
        %1565 = vmatprep.subr.mxu0 0.0
        %1566 = vmatpush1.msra.mxu0 0.0
        %1567 = vmatprep.subr.mxu0 0.0
        %1568 = vmatpush1.msra.mxu0 0.0
        %1569 = vmatprep.subr.mxu0 0.0
        %1570 = vmatpush1.msra.mxu0 0.0
        %1571 = vmatprep.subr.mxu0 0.0
        %1572 = vmatpush1.msra.mxu0 0.0
        %1573 = vmatprep.subr.mxu0 0.0
        %1574 = vmatpush1.msra.mxu0 0.0
        %1575 = vmatprep.subr.mxu0 0.0
        %1576 = vmatpush1.msra.mxu0 0.0
        %1577 = vmatprep.subr.mxu0 0.0
        %1578 = vmatpush1.msra.mxu0 0.0
        %1579 = vmatprep.subr.mxu0 0.0
        %1580 = vmatpush1.msra.mxu0 0.0
        %1581 = vmatprep.mubr.f32.mxu0 0.0
        %1582 = vmatmul.mubr.f32.gmra.mrb[0].mxu0 %v1515
        %v1583 = vpop.f32.mrb[0].mxu0
        %v1584 = vadd.f32 0.0, %v1583
        %v1585 = vpop.f32.mrb[0].mxu0
        %1586 = vdwg.mxu0
        %v1587 = vmul.f32 %v1584, 0.35355338
        %v1588 = vadd.f32 %v1587, %v630
        %v1589 = vsel %vm1012, %v1588, -inf
        %1590 = vmax.xlane.f32.xlu0 %v1589
        %v1591 = vpop.xlane.xlu0 %1590
        %v1592 = vsub.f32 %v1588, %v1591
        %v1593 = vmul.f32 %v1592, 1.442695
        %v1594 = vpow.pop %v1593
        %v1595 = vsel %vm1012, %v1594, 0.0
        %1596 = vadd.xlane.f32.xlu0 %v1595
        %v1597 = vpop.xlane.xlu0 %1596
        %v1598 = vrcp.pop %v1597
        %v1599 = vmul.f32 %v1594, %v1598
        %v1600 = vpack.c.bf16 %v977, %v977
        %v1601 = vpack.c.bf16 %v1599, %v1599
        %v1603 = vsel %vm1012, %v1600, 0
        %v1606 = vsel %vm1012, %v1601, 0
        %1608 = vmatprep.subr.bf16.mxu0 0
        %1609 = vmatpush1.bf16.xpose.msra.mxu0 %v1606
        %1610 = vmatprep.subr.bf16.mxu0 0
        %1611 = vmatpush1.bf16.xpose.msra.mxu0 0
        %1612 = vmatprep.subr.bf16.mxu0 0
        %1613 = vmatpush1.bf16.xpose.msra.mxu0 0
        %1614 = vmatprep.subr.bf16.mxu0 0
        %1615 = vmatpush1.bf16.xpose.msra.mxu0 0
        %1616 = vmatprep.subr.bf16.mxu0 0
        %1617 = vmatpush1.bf16.xpose.msra.mxu0 0
        %1618 = vmatprep.subr.bf16.mxu0 0
        %1619 = vmatpush1.bf16.xpose.msra.mxu0 0
        %1620 = vmatprep.subr.bf16.mxu0 0
        %1621 = vmatpush1.bf16.xpose.msra.mxu0 0
        %1622 = vmatprep.subr.bf16.mxu0 0
        %1623 = vmatpush1.bf16.xpose.msra.mxu0 0
        %1624 = vmatprep.subr.bf16.mxu0 0
        %1625 = vmatpush1.bf16.xpose.msra.mxu0 0
        %1626 = vmatprep.subr.bf16.mxu0 0
        %1627 = vmatpush1.bf16.xpose.msra.mxu0 0
        %1628 = vmatprep.subr.bf16.mxu0 0
        %1629 = vmatpush1.bf16.xpose.msra.mxu0 0
        %1630 = vmatprep.subr.bf16.mxu0 0
        %1631 = vmatpush1.bf16.xpose.msra.mxu0 0
        %1632 = vmatprep.subr.bf16.mxu0 0
        %1633 = vmatpush1.bf16.xpose.msra.mxu0 0
        %1634 = vmatprep.subr.bf16.mxu0 0
        %1635 = vmatpush1.bf16.xpose.msra.mxu0 0
        %1636 = vmatprep.subr.bf16.mxu0 0
        %1637 = vmatpush1.bf16.xpose.msra.mxu0 0
        %1638 = vmatprep.subr.bf16.mxu0 0
        %1639 = vmatpush1.bf16.xpose.msra.mxu0 0
        %1640 = vmatprep.mubr.bf16.mxu0 0
        %1641 = vmatmul.mubr.bf16.gmra.mrb[0].mxu0 %v1603
        %v1642 = vpop.f32.mrb[0].mxu0
        %v1643 = vadd.f32 0.0, %v1642
        %v1644 = vpop.f32.mrb[0].mxu0
        %v1645 = vpop.f32.mrb[0].mxu0
        %v1646 = vpop.f32.mrb[0].mxu0
        %1647 = vdwg.mxu0
        %1648 = vst.msk [vmem:[#allocation2 + $0x18] sm:$0xff] %vm1012, %v1643
        %v1649 = vld [vmem:[#allocation2] sm:$0xff]
        %v1650 = vld [vmem:[#allocation2 + $0x8] sm:$0xff]
        %v1651 = vld [vmem:[#allocation2 + $0x10] sm:$0xff]
        %v1652 = vld [vmem:[#allocation2 + $0x18] sm:$0xff]
        %v1653 = vld [vmem:[%s9] sm:$0xff]
        %v1654 = vld [vmem:[%s9 + $0x8] sm:$0xff]
        %v1655 = vld [vmem:[%s9 + $0x10] sm:$0xff]
        %v1656 = vld [vmem:[%s9 + $0x18] sm:$0xff]
        %v1657 = vld [vmem:[%s10] sm:$0x1]
        %v1659 = vlaneseq
        %v1660 = vshrl.u32 %v1659, 7
        %v1661 = vsub.s32 0, %v1660
        %v1662 = vrot.slane %v1657, %v1661
        %1664 = vxpose.xlu0.b32.start [1/16] %v1649, 128
        %1665 = vxpose.xlu0.b32.cont [2/16] %v1650, 128
        %1666 = vxpose.xlu0.b32.cont [3/16] %v1651, 128
        %1667 = vxpose.xlu0.b32.cont [4/16] %v1652, 128
        %1668 = vxpose.xlu0.b32.cont [5/16] 0.0, 128
        %1669 = vxpose.xlu0.b32.cont [6/16] 0.0, 128
        %1670 = vxpose.xlu0.b32.cont [7/16] 0.0, 128
        %1671 = vxpose.xlu0.b32.cont [8/16] 0.0, 128
        %1672 = vxpose.xlu0.b32.cont [9/16] 0.0, 128
        %1673 = vxpose.xlu0.b32.cont [10/16] 0.0, 128
        %1674 = vxpose.xlu0.b32.cont [11/16] 0.0, 128
        %1675 = vxpose.xlu0.b32.cont [12/16] 0.0, 128
        %1676 = vxpose.xlu0.b32.cont [13/16] 0.0, 128
        %1677 = vxpose.xlu0.b32.cont [14/16] 0.0, 128
        %1678 = vxpose.xlu0.b32.cont [15/16] 0.0, 128
        %1679 = vxpose.xlu0.b32.end [16/16] 0.0, 128
        %v1680 = vpop.trf.xlu0
        %v1681 = vpop.trf.xlu0
        %v1682 = vpop.trf.xlu0
        %v1683 = vpop.trf.xlu0
        %v1684 = vpop.trf.xlu0
        %v1685 = vpop.trf.xlu0
        %v1686 = vpop.trf.xlu0
        %v1687 = vpop.trf.xlu0
        %v1688 = vpop.trf.xlu0
        %v1689 = vpop.trf.xlu0
        %v1690 = vpop.trf.xlu0
        %v1691 = vpop.trf.xlu0
        %v1692 = vpop.trf.xlu0
        %v1693 = vpop.trf.xlu0
        %v1694 = vpop.trf.xlu0
        %v1695 = vpop.trf.xlu0
        %v1697 = vsel %vm734, %v1680, 0
        %1699 = vmatprep.subr.mxu0 0.0
        %1700 = vmatpush1.msra.mxu0 %v1653
        %1701 = vmatprep.subr.mxu0 0.0
        %1702 = vmatpush1.msra.mxu0 %v1654
        %1703 = vmatprep.subr.mxu0 0.0
        %1704 = vmatpush1.msra.mxu0 %v1655
        %1705 = vmatprep.subr.mxu0 0.0
        %1706 = vmatpush1.msra.mxu0 %v1656
        %1707 = vmatprep.subr.mxu0 0.0
        %1708 = vmatpush1.msra.mxu0 0.0
        %1709 = vmatprep.subr.mxu0 0.0
        %1710 = vmatpush1.msra.mxu0 0.0
        %1711 = vmatprep.subr.mxu0 0.0
        %1712 = vmatpush1.msra.mxu0 0.0
        %1713 = vmatprep.subr.mxu0 0.0
        %1714 = vmatpush1.msra.mxu0 0.0
        %1715 = vmatprep.subr.mxu0 0.0
        %1716 = vmatpush1.msra.mxu0 0.0
        %1717 = vmatprep.subr.mxu0 0.0
        %1718 = vmatpush1.msra.mxu0 0.0
        %1719 = vmatprep.subr.mxu0 0.0
        %1720 = vmatpush1.msra.mxu0 0.0
        %1721 = vmatprep.subr.mxu0 0.0
        %1722 = vmatpush1.msra.mxu0 0.0
        %1723 = vmatprep.subr.mxu0 0.0
        %1724 = vmatpush1.msra.mxu0 0.0
        %1725 = vmatprep.subr.mxu0 0.0
        %1726 = vmatpush1.msra.mxu0 0.0
        %1727 = vmatprep.subr.mxu0 0.0
        %1728 = vmatpush1.msra.mxu0 0.0
        %1729 = vmatprep.subr.mxu0 0.0
        %1730 = vmatpush1.msra.mxu0 0.0
        %1731 = vmatprep.subr.mxu0 0.0
        %1732 = vmatpush1.msra.mxu0 0.0
        %1733 = vmatprep.subr.mxu0 0.0
        %1734 = vmatpush1.msra.mxu0 0.0
        %1735 = vmatprep.subr.mxu0 0.0
        %1736 = vmatpush1.msra.mxu0 0.0
        %1737 = vmatprep.subr.mxu0 0.0
        %1738 = vmatpush1.msra.mxu0 0.0
        %1739 = vmatprep.subr.mxu0 0.0
        %1740 = vmatpush1.msra.mxu0 0.0
        %1741 = vmatprep.subr.mxu0 0.0
        %1742 = vmatpush1.msra.mxu0 0.0
        %1743 = vmatprep.subr.mxu0 0.0
        %1744 = vmatpush1.msra.mxu0 0.0
        %1745 = vmatprep.subr.mxu0 0.0
        %1746 = vmatpush1.msra.mxu0 0.0
        %1747 = vmatprep.subr.mxu0 0.0
        %1748 = vmatpush1.msra.mxu0 0.0
        %1749 = vmatprep.subr.mxu0 0.0
        %1750 = vmatpush1.msra.mxu0 0.0
        %1751 = vmatprep.subr.mxu0 0.0
        %1752 = vmatpush1.msra.mxu0 0.0
        %1753 = vmatprep.subr.mxu0 0.0
        %1754 = vmatpush1.msra.mxu0 0.0
        %1755 = vmatprep.subr.mxu0 0.0
        %1756 = vmatpush1.msra.mxu0 0.0
        %1757 = vmatprep.subr.mxu0 0.0
        %1758 = vmatpush1.msra.mxu0 0.0
        %1759 = vmatprep.subr.mxu0 0.0
        %1760 = vmatpush1.msra.mxu0 0.0
        %1761 = vmatprep.subr.mxu0 0.0
        %1762 = vmatpush1.msra.mxu0 0.0
        %1763 = vmatprep.mubr.f32.mxu0 0.0
        %1764 = vmatmul.mubr.f32.gmra.mrb[0].mxu0 %v1697
        %v1765 = vpop.f32.mrb[0].mxu0
        %v1766 = vadd.f32 %v1662, %v1765
        %v1767 = vpop.f32.mrb[0].mxu0
        %1768 = vdwg.mxu0
        %v1769 = vadd.f32 %v1766, %v762
        %v1770 = vld [vmem:[%s11] sm:$0x1]
        %v1771 = vld [vmem:[%s12] sm:$0x1]
        %v1772 = vsel %vm734, %v1769, 0.0
        %1773 = vadd.xlane.f32.xlu0 %v1772
        %v1774 = vpop.xlane.xlu0 %1773
        %v1775 = vmul.f32 %v1774, %v738
        %v1776 = vsub.f32 %v1769, %v1775
        %v1777 = vmul.f32 %v1776, %v1776
        %v1778 = vsel %vm734, %v1777, 0.0
        %1779 = vadd.xlane.f32.xlu0 %v1778
        %v1780 = vpop.xlane.xlu0 %1779
        %v1781 = vmul.f32 %v1780, %v738
        %v1782 = vadd.f32 %v1781, 1e-12
        %v1783 = vrsqrt.pop %v1782
        %v1784 = vmul.f32 %v1776, %v1783
        %v1786 = vlaneseq
        %v1787 = vshrl.u32 %v1786, 7
        %v1788 = vsub.s32 0, %v1787
        %v1789 = vrot.slane %v1770, %v1788
        %v1791 = vmul.f32 %v1784, %v1789
        %v1793 = vlaneseq
        %v1794 = vshrl.u32 %v1793, 7
        %v1795 = vsub.s32 0, %v1794
        %v1796 = vrot.slane %v1771, %v1795
        %v1798 = vadd.f32 %v1791, %v1796
        %v1799 = vpack.c.bf16 %v1798, %v1798
        %v1800 = vld [vmem:[%s13] sm:$0xf]
        %v1801 = vld [vmem:[%s13 + $0x4] sm:$0xf]
        %v1802 = vld [vmem:[%s13 + $0x8] sm:$0xf]
        %v1803 = vld [vmem:[%s13 + $0xc] sm:$0xf]
        %v1804 = vld [vmem:[%s14] sm:$0x1]
        %v1806 = vlaneseq
        %v1807 = vshrl.u32 %v1806, 7
        %v1808 = vsub.s32 0, %v1807
        %v1809 = vrot.slane %v1804, %v1808
        %v1815 = vunpack.c.l.b16 %v1800
        %v1816 = vunpack.c.l.b16 %v1801
        %v1817 = vunpack.c.l.b16 %v1802
        %v1818 = vunpack.c.l.b16 %v1803
        %v1819 = vpack.c.b16 %v1816, %v1815
        %v1820 = vpack.c.b16 %v1818, %v1817
        %v1824 = vsel %vm734, %v1799, 0
        %1826 = vmatprep.subr.bf16.mxu0 0
        %1827 = vmatpush1.bf16.msra.mxu0 %v1819
        %1828 = vmatprep.subr.bf16.mxu0 0
        %1829 = vmatpush1.bf16.msra.mxu0 %v1820
        %1830 = vmatprep.subr.bf16.mxu0 0
        %1831 = vmatpush1.bf16.msra.mxu0 0
        %1832 = vmatprep.subr.bf16.mxu0 0
        %1833 = vmatpush1.bf16.msra.mxu0 0
        %1834 = vmatprep.subr.bf16.mxu0 0
        %1835 = vmatpush1.bf16.msra.mxu0 0
        %1836 = vmatprep.subr.bf16.mxu0 0
        %1837 = vmatpush1.bf16.msra.mxu0 0
        %1838 = vmatprep.subr.bf16.mxu0 0
        %1839 = vmatpush1.bf16.msra.mxu0 0
        %1840 = vmatprep.subr.bf16.mxu0 0
        %1841 = vmatpush1.bf16.msra.mxu0 0
        %1842 = vmatprep.subr.bf16.mxu0 0
        %1843 = vmatpush1.bf16.msra.mxu0 0
        %1844 = vmatprep.subr.bf16.mxu0 0
        %1845 = vmatpush1.bf16.msra.mxu0 0
        %1846 = vmatprep.subr.bf16.mxu0 0
        %1847 = vmatpush1.bf16.msra.mxu0 0
        %1848 = vmatprep.subr.bf16.mxu0 0
        %1849 = vmatpush1.bf16.msra.mxu0 0
        %1850 = vmatprep.subr.bf16.mxu0 0
        %1851 = vmatpush1.bf16.msra.mxu0 0
        %1852 = vmatprep.subr.bf16.mxu0 0
        %1853 = vmatpush1.bf16.msra.mxu0 0
        %1854 = vmatprep.subr.bf16.mxu0 0
        %1855 = vmatpush1.bf16.msra.mxu0 0
        %1856 = vmatprep.subr.bf16.mxu0 0
        %1857 = vmatpush1.bf16.msra.mxu0 0
        %1858 = vmatprep.mubr.bf16.mxu0 0
        %1859 = vmatmul.mubr.bf16.gmra.mrb[0].mxu0 %v1824
        %v1860 = vpop.f32.mrb[0].mxu0
        %v1861 = vadd.f32 %v1809, %v1860
        %v1862 = vpop.f32.mrb[0].mxu0
        %v1863 = vpop.f32.mrb[0].mxu0
        %v1864 = vpop.f32.mrb[0].mxu0
        %1865 = vdwg.mxu0
        %v1866 = vmul.f32 %v1861, 0.5
        %v1867 = vmul.f32 %v1861, 0.044715
        %v1868 = vmul.f32 %v1867, %v1861
        %v1869 = vmul.f32 %v1868, %v1861
        %v1870 = vadd.f32 %v1861, %v1869
        %v1871 = vmul.f32 %v1870, 0.7978846
        %v1872 = vtanh.pop %v1871
        %v1873 = vadd.f32 %v1872, 1.0
        %v1874 = vmul.f32 %v1866, %v1873
        %v1875 = vpack.c.bf16 %v1874, %v1874
        %v1876 = vld [vmem:[%s15] sm:$0xf]
        %v1877 = vld [vmem:[%s15 + $0x4] sm:$0xf]
        %v1878 = vld [vmem:[%s15 + $0x8] sm:$0xf]
        %v1879 = vld [vmem:[%s15 + $0xc] sm:$0xf]
        %v1880 = vld [vmem:[%s15 + $0x10] sm:$0xf]
        %v1881 = vld [vmem:[%s15 + $0x14] sm:$0xf]
        %v1882 = vld [vmem:[%s15 + $0x18] sm:$0xf]
        %v1883 = vld [vmem:[%s15 + $0x1c] sm:$0xf]
        %v1884 = vld [vmem:[%s16] sm:$0x1]
        %v1886 = vlaneseq
        %v1887 = vshrl.u32 %v1886, 7
        %v1888 = vsub.s32 0, %v1887
        %v1889 = vrot.slane %v1884, %v1888
        %v1899 = vunpack.c.l.b16 %v1876
        %v1900 = vunpack.c.l.b16 %v1877
        %v1901 = vunpack.c.l.b16 %v1878
        %v1902 = vunpack.c.l.b16 %v1879
        %v1903 = vunpack.c.l.b16 %v1880
        %v1904 = vunpack.c.l.b16 %v1881
        %v1905 = vunpack.c.l.b16 %v1882
        %v1906 = vunpack.c.l.b16 %v1883
        %v1907 = vpack.c.b16 %v1900, %v1899
        %v1908 = vpack.c.b16 %v1902, %v1901
        %v1909 = vpack.c.b16 %v1904, %v1903
        %v1910 = vpack.c.b16 %v1906, %v1905
        %vm1915 = vcmask 523264
        %v1917 = vsel %vm1915, %v1875, 0
        %1919 = vmatprep.subr.bf16.mxu0 0
        %1920 = vmatpush1.bf16.msra.mxu0 %v1907
        %1921 = vmatprep.subr.bf16.mxu0 0
        %1922 = vmatpush1.bf16.msra.mxu0 %v1908
        %1923 = vmatprep.subr.bf16.mxu0 0
        %1924 = vmatpush1.bf16.msra.mxu0 %v1909
        %1925 = vmatprep.subr.bf16.mxu0 0
        %1926 = vmatpush1.bf16.msra.mxu0 %v1910
        %1927 = vmatprep.subr.bf16.mxu0 0
        %1928 = vmatpush1.bf16.msra.mxu0 0
        %1929 = vmatprep.subr.bf16.mxu0 0
        %1930 = vmatpush1.bf16.msra.mxu0 0
        %1931 = vmatprep.subr.bf16.mxu0 0
        %1932 = vmatpush1.bf16.msra.mxu0 0
        %1933 = vmatprep.subr.bf16.mxu0 0
        %1934 = vmatpush1.bf16.msra.mxu0 0
        %1935 = vmatprep.subr.bf16.mxu0 0
        %1936 = vmatpush1.bf16.msra.mxu0 0
        %1937 = vmatprep.subr.bf16.mxu0 0
        %1938 = vmatpush1.bf16.msra.mxu0 0
        %1939 = vmatprep.subr.bf16.mxu0 0
        %1940 = vmatpush1.bf16.msra.mxu0 0
        %1941 = vmatprep.subr.bf16.mxu0 0
        %1942 = vmatpush1.bf16.msra.mxu0 0
        %1943 = vmatprep.subr.bf16.mxu0 0
        %1944 = vmatpush1.bf16.msra.mxu0 0
        %1945 = vmatprep.subr.bf16.mxu0 0
        %1946 = vmatpush1.bf16.msra.mxu0 0
        %1947 = vmatprep.subr.bf16.mxu0 0
        %1948 = vmatpush1.bf16.msra.mxu0 0
        %1949 = vmatprep.subr.bf16.mxu0 0
        %1950 = vmatpush1.bf16.msra.mxu0 0
        %1951 = vmatprep.mubr.bf16.mxu0 0
        %1952 = vmatmul.mubr.bf16.gmra.mrb[0].mxu0 %v1917
        %v1953 = vpop.f32.mrb[0].mxu0
        %v1954 = vadd.f32 %v1889, %v1953
        %v1955 = vpop.f32.mrb[0].mxu0
        %v1956 = vpop.f32.mrb[0].mxu0
        %v1957 = vpop.f32.mrb[0].mxu0
        %1958 = vdwg.mxu0
        %v1959 = vadd.f32 %v1954, %v1798
        %v1960 = vld [vmem:[%s17] sm:$0x1]
        %v1961 = vld [vmem:[%s18] sm:$0x1]
        %v1962 = vsel %vm734, %v1959, 0.0
        %1963 = vadd.xlane.f32.xlu0 %v1962
        %v1964 = vpop.xlane.xlu0 %1963
        %v1965 = vmul.f32 %v1964, %v738
        %v1966 = vsub.f32 %v1959, %v1965
        %v1967 = vmul.f32 %v1966, %v1966
        %v1968 = vsel %vm734, %v1967, 0.0
        %1969 = vadd.xlane.f32.xlu0 %v1968
        %v1970 = vpop.xlane.xlu0 %1969
        %v1971 = vmul.f32 %v1970, %v738
        %v1972 = vadd.f32 %v1971, 1e-12
        %v1973 = vrsqrt.pop %v1972
        %v1974 = vmul.f32 %v1966, %v1973
        %v1976 = vlaneseq
        %v1977 = vshrl.u32 %v1976, 7
        %v1978 = vsub.s32 0, %v1977
        %v1979 = vrot.slane %v1960, %v1978
        %v1981 = vmul.f32 %v1974, %v1979
        %v1983 = vlaneseq
        %v1984 = vshrl.u32 %v1983, 7
        %v1985 = vsub.s32 0, %v1984
        %v1986 = vrot.slane %v1961, %v1985
        %v1988 = vadd.f32 %v1981, %v1986
        %v1989 = vpack.c.bf16 %v1988, %v1988
        %s1990 = scalar_lea.vmem %s7, 48
        %v1991 = vld [vmem:[%s1990] sm:$0xf]
        %v1992 = vld [vmem:[%s1990 + $0x4] sm:$0xf]
        %v1993 = vld [vmem:[%s1990 + $0x8] sm:$0xf]
        %v1994 = vld [vmem:[%s1990 + $0xc] sm:$0xf]
        %v1995 = vld [vmem:[%s1990 + $0x10] sm:$0xf]
        %v1996 = vld [vmem:[%s1990 + $0x14] sm:$0xf]
        %v1997 = vld [vmem:[%s1990 + $0x18] sm:$0xf]
        %v1998 = vld [vmem:[%s1990 + $0x1c] sm:$0xf]
        %v1999 = vld [vmem:[%s1990 + $0x20] sm:$0xf]
        %v2000 = vld [vmem:[%s1990 + $0x24] sm:$0xf]
        %v2001 = vld [vmem:[%s1990 + $0x28] sm:$0xf]
        %v2002 = vld [vmem:[%s1990 + $0x2c] sm:$0xf]
        %s2003 = scalar_lea.vmem %s8, 96
        %v2004 = vld [vmem:[%s2003] sm:$0xff]
        %v2005 = vld [vmem:[%s2003 + $0x8] sm:$0xff]
        %v2006 = vld [vmem:[%s2003 + $0x10] sm:$0xff]
        %v2007 = vld [vmem:[%s2003 + $0x18] sm:$0xff]
        %v2008 = vld [vmem:[%s2003 + $0x20] sm:$0xff]
        %v2009 = vld [vmem:[%s2003 + $0x28] sm:$0xff]
        %v2010 = vld [vmem:[%s2003 + $0x30] sm:$0xff]
        %v2011 = vld [vmem:[%s2003 + $0x38] sm:$0xff]
        %v2012 = vld [vmem:[%s2003 + $0x40] sm:$0xff]
        %v2013 = vld [vmem:[%s2003 + $0x48] sm:$0xff]
        %v2014 = vld [vmem:[%s2003 + $0x50] sm:$0xff]
        %v2015 = vld [vmem:[%s2003 + $0x58] sm:$0xff]
        %2017 = vset.pattern.permute.xlu0 0
        %2018 = vperm.xlu0 %2017, %v2004
        %v2019 = vpop.permute.xlu0 %2018
        %2022 = vset.pattern.permute.xlu0 0
        %2023 = vperm.xlu0 %2022, %v2005
        %v2024 = vpop.permute.xlu0 %2023
        %2027 = vset.pattern.permute.xlu0 0
        %2028 = vperm.xlu0 %2027, %v2006
        %v2029 = vpop.permute.xlu0 %2028
        %2032 = vset.pattern.permute.xlu0 0
        %2033 = vperm.xlu0 %2032, %v2007
        %v2034 = vpop.permute.xlu0 %2033
        %2037 = vset.pattern.permute.xlu0 0
        %2038 = vperm.xlu0 %2037, %v2008
        %v2039 = vpop.permute.xlu0 %2038
        %2042 = vset.pattern.permute.xlu0 0
        %2043 = vperm.xlu0 %2042, %v2009
        %v2044 = vpop.permute.xlu0 %2043
        %2047 = vset.pattern.permute.xlu0 0
        %2048 = vperm.xlu0 %2047, %v2010
        %v2049 = vpop.permute.xlu0 %2048
        %2052 = vset.pattern.permute.xlu0 0
        %2053 = vperm.xlu0 %2052, %v2011
        %v2054 = vpop.permute.xlu0 %2053
        %2057 = vset.pattern.permute.xlu0 0
        %2058 = vperm.xlu0 %2057, %v2012
        %v2059 = vpop.permute.xlu0 %2058
        %2062 = vset.pattern.permute.xlu0 0
        %2063 = vperm.xlu0 %2062, %v2013
        %v2064 = vpop.permute.xlu0 %2063
        %2067 = vset.pattern.permute.xlu0 0
        %2068 = vperm.xlu0 %2067, %v2014
        %v2069 = vpop.permute.xlu0 %2068
        %2072 = vset.pattern.permute.xlu0 0
        %2073 = vperm.xlu0 %2072, %v2015
        %v2074 = vpop.permute.xlu0 %2073
        %v2088 = vunpack.c.l.b16 %v1991
        %v2089 = vunpack.c.l.b16 %v1992
        %v2090 = vunpack.c.l.b16 %v1993
        %v2091 = vunpack.c.l.b16 %v1994
        %v2092 = vunpack.c.l.b16 %v1995
        %v2093 = vunpack.c.l.b16 %v1996
        %v2094 = vunpack.c.l.b16 %v1997
        %v2095 = vunpack.c.l.b16 %v1998
        %v2096 = vunpack.c.l.b16 %v1999
        %v2097 = vunpack.c.l.b16 %v2000
        %v2098 = vunpack.c.l.b16 %v2001
        %v2099 = vunpack.c.l.b16 %v2002
        %v2100 = vpack.c.b16 %v2089, %v2088
        %v2101 = vpack.c.b16 %v2091, %v2090
        %v2102 = vpack.c.b16 %v2093, %v2092
        %v2103 = vpack.c.b16 %v2095, %v2094
        %v2104 = vpack.c.b16 %v2097, %v2096
        %v2105 = vpack.c.b16 %v2099, %v2098
        %v2107 = vsel %vm734, %v2100, 0
        %v2110 = vsel %vm734, %v2101, 0
        %v2113 = vsel %vm734, %v2102, 0
        %v2116 = vsel %vm734, %v2103, 0
        %v2119 = vsel %vm734, %v2104, 0
        %v2122 = vsel %vm734, %v2105, 0
        %v2125 = vsel %vm734, %v1989, 0
        %2127 = vmatprep.subr.bf16.mxu0 0
        %2128 = vmatpush1.bf16.xpose.msra.mxu0 %v2125
        %2129 = vmatprep.subr.bf16.mxu0 0
        %2130 = vmatpush1.bf16.xpose.msra.mxu0 0
        %2131 = vmatprep.subr.bf16.mxu0 0
        %2132 = vmatpush1.bf16.xpose.msra.mxu0 0
        %2133 = vmatprep.subr.bf16.mxu0 0
        %2134 = vmatpush1.bf16.xpose.msra.mxu0 0
        %2135 = vmatprep.subr.bf16.mxu0 0
        %2136 = vmatpush1.bf16.xpose.msra.mxu0 0
        %2137 = vmatprep.subr.bf16.mxu0 0
        %2138 = vmatpush1.bf16.xpose.msra.mxu0 0
        %2139 = vmatprep.subr.bf16.mxu0 0
        %2140 = vmatpush1.bf16.xpose.msra.mxu0 0
        %2141 = vmatprep.subr.bf16.mxu0 0
        %2142 = vmatpush1.bf16.xpose.msra.mxu0 0
        %2143 = vmatprep.subr.bf16.mxu0 0
        %2144 = vmatpush1.bf16.xpose.msra.mxu0 0
        %2145 = vmatprep.subr.bf16.mxu0 0
        %2146 = vmatpush1.bf16.xpose.msra.mxu0 0
        %2147 = vmatprep.subr.bf16.mxu0 0
        %2148 = vmatpush1.bf16.xpose.msra.mxu0 0
        %2149 = vmatprep.subr.bf16.mxu0 0
        %2150 = vmatpush1.bf16.xpose.msra.mxu0 0
        %2151 = vmatprep.subr.bf16.mxu0 0
        %2152 = vmatpush1.bf16.xpose.msra.mxu0 0
        %2153 = vmatprep.subr.bf16.mxu0 0
        %2154 = vmatpush1.bf16.xpose.msra.mxu0 0
        %2155 = vmatprep.subr.bf16.mxu0 0
        %2156 = vmatpush1.bf16.xpose.msra.mxu0 0
        %2157 = vmatprep.subr.bf16.mxu0 0
        %2158 = vmatpush1.bf16.xpose.msra.mxu0 0
        %2159 = vmatprep.mubr.bf16.mxu0 0
        %2160 = vmatmul.mubr.bf16.gmra.mrb[0].mxu0 %v2107
        %v2161 = vpop.f32.mrb[0].mxu0
        %v2162 = vadd.f32 %v2019, %v2161
        %v2163 = vpop.f32.mrb[0].mxu0
        %v2164 = vpop.f32.mrb[0].mxu0
        %v2165 = vadd.f32 %v2024, %v2164
        %v2166 = vpop.f32.mrb[0].mxu0
        %2167 = vmatprep.mubr.bf16.mxu0 0
        %2168 = vmatmul.mubr.bf16.gmra.mrb[0].mxu0 %v2110
        %v2169 = vpop.f32.mrb[0].mxu0
        %v2170 = vadd.f32 %v2029, %v2169
        %v2171 = vpop.f32.mrb[0].mxu0
        %v2172 = vpop.f32.mrb[0].mxu0
        %v2173 = vadd.f32 %v2034, %v2172
        %v2174 = vpop.f32.mrb[0].mxu0
        %2175 = vmatprep.mubr.bf16.mxu0 0
        %2176 = vmatmul.mubr.bf16.gmra.mrb[0].mxu0 %v2113
        %v2177 = vpop.f32.mrb[0].mxu0
        %v2178 = vadd.f32 %v2039, %v2177
        %v2179 = vpop.f32.mrb[0].mxu0
        %v2180 = vpop.f32.mrb[0].mxu0
        %v2181 = vadd.f32 %v2044, %v2180
        %v2182 = vpop.f32.mrb[0].mxu0
        %2183 = vmatprep.mubr.bf16.mxu0 0
        %2184 = vmatmul.mubr.bf16.gmra.mrb[0].mxu0 %v2116
        %v2185 = vpop.f32.mrb[0].mxu0
        %v2186 = vadd.f32 %v2049, %v2185
        %v2187 = vpop.f32.mrb[0].mxu0
        %v2188 = vpop.f32.mrb[0].mxu0
        %v2189 = vadd.f32 %v2054, %v2188
        %v2190 = vpop.f32.mrb[0].mxu0
        %2191 = vmatprep.mubr.bf16.mxu0 0
        %2192 = vmatmul.mubr.bf16.gmra.mrb[0].mxu0 %v2119
        %v2193 = vpop.f32.mrb[0].mxu0
        %v2194 = vadd.f32 %v2059, %v2193
        %v2195 = vpop.f32.mrb[0].mxu0
        %v2196 = vpop.f32.mrb[0].mxu0
        %v2197 = vadd.f32 %v2064, %v2196
        %v2198 = vpop.f32.mrb[0].mxu0
        %2199 = vmatprep.mubr.bf16.mxu0 0
        %2200 = vmatmul.mubr.bf16.gmra.mrb[0].mxu0 %v2122
        %v2201 = vpop.f32.mrb[0].mxu0
        %v2202 = vadd.f32 %v2069, %v2201
        %v2203 = vpop.f32.mrb[0].mxu0
        %v2204 = vpop.f32.mrb[0].mxu0
        %v2205 = vadd.f32 %v2074, %v2204
        %v2206 = vpop.f32.mrb[0].mxu0
        %2207 = vdwg.mxu0
        %2208 = vxpose.xlu0.b32.start [1/16] %v2162, 128
        %2209 = vxpose.xlu0.b32.cont [2/16] 0.0, 128
        %2210 = vxpose.xlu0.b32.cont [3/16] 0.0, 128
        %2211 = vxpose.xlu0.b32.cont [4/16] 0.0, 128
        %2212 = vxpose.xlu0.b32.cont [5/16] 0.0, 128
        %2213 = vxpose.xlu0.b32.cont [6/16] 0.0, 128
        %2214 = vxpose.xlu0.b32.cont [7/16] 0.0, 128
        %2215 = vxpose.xlu0.b32.cont [8/16] 0.0, 128
        %2216 = vxpose.xlu0.b32.cont [9/16] 0.0, 128
        %2217 = vxpose.xlu0.b32.cont [10/16] 0.0, 128
        %2218 = vxpose.xlu0.b32.cont [11/16] 0.0, 128
        %2219 = vxpose.xlu0.b32.cont [12/16] 0.0, 128
        %2220 = vxpose.xlu0.b32.cont [13/16] 0.0, 128
        %2221 = vxpose.xlu0.b32.cont [14/16] 0.0, 128
        %2222 = vxpose.xlu0.b32.cont [15/16] 0.0, 128
        %2223 = vxpose.xlu0.b32.end [16/16] 0.0, 128
        %v2224 = vpop.trf.xlu0
        %v2225 = vpop.trf.xlu0
        %v2226 = vpop.trf.xlu0
        %v2227 = vpop.trf.xlu0
        %v2228 = vpop.trf.xlu0
        %v2229 = vpop.trf.xlu0
        %v2230 = vpop.trf.xlu0
        %v2231 = vpop.trf.xlu0
        %v2232 = vpop.trf.xlu0
        %v2233 = vpop.trf.xlu0
        %v2234 = vpop.trf.xlu0
        %v2235 = vpop.trf.xlu0
        %v2236 = vpop.trf.xlu0
        %v2237 = vpop.trf.xlu0
        %v2238 = vpop.trf.xlu0
        %v2239 = vpop.trf.xlu0
        %v2241 = vsel %vm1012, %v2224, 0
        %2243 = vmatprep.subr.mxu0 0.0
        %2244 = vmatpush1.msra.mxu0 %v2178
        %2245 = vmatprep.subr.mxu0 0.0
        %2246 = vmatpush1.msra.mxu0 0.0
        %2247 = vmatprep.subr.mxu0 0.0
        %2248 = vmatpush1.msra.mxu0 0.0
        %2249 = vmatprep.subr.mxu0 0.0
        %2250 = vmatpush1.msra.mxu0 0.0
        %2251 = vmatprep.subr.mxu0 0.0
        %2252 = vmatpush1.msra.mxu0 0.0
        %2253 = vmatprep.subr.mxu0 0.0
        %2254 = vmatpush1.msra.mxu0 0.0
        %2255 = vmatprep.subr.mxu0 0.0
        %2256 = vmatpush1.msra.mxu0 0.0
        %2257 = vmatprep.subr.mxu0 0.0
        %2258 = vmatpush1.msra.mxu0 0.0
        %2259 = vmatprep.subr.mxu0 0.0
        %2260 = vmatpush1.msra.mxu0 0.0
        %2261 = vmatprep.subr.mxu0 0.0
        %2262 = vmatpush1.msra.mxu0 0.0
        %2263 = vmatprep.subr.mxu0 0.0
        %2264 = vmatpush1.msra.mxu0 0.0
        %2265 = vmatprep.subr.mxu0 0.0
        %2266 = vmatpush1.msra.mxu0 0.0
        %2267 = vmatprep.subr.mxu0 0.0
        %2268 = vmatpush1.msra.mxu0 0.0
        %2269 = vmatprep.subr.mxu0 0.0
        %2270 = vmatpush1.msra.mxu0 0.0
        %2271 = vmatprep.subr.mxu0 0.0
        %2272 = vmatpush1.msra.mxu0 0.0
        %2273 = vmatprep.subr.mxu0 0.0
        %2274 = vmatpush1.msra.mxu0 0.0
        %2275 = vmatprep.subr.mxu0 0.0
        %2276 = vmatpush1.msra.mxu0 0.0
        %2277 = vmatprep.subr.mxu0 0.0
        %2278 = vmatpush1.msra.mxu0 0.0
        %2279 = vmatprep.subr.mxu0 0.0
        %2280 = vmatpush1.msra.mxu0 0.0
        %2281 = vmatprep.subr.mxu0 0.0
        %2282 = vmatpush1.msra.mxu0 0.0
        %2283 = vmatprep.subr.mxu0 0.0
        %2284 = vmatpush1.msra.mxu0 0.0
        %2285 = vmatprep.subr.mxu0 0.0
        %2286 = vmatpush1.msra.mxu0 0.0
        %2287 = vmatprep.subr.mxu0 0.0
        %2288 = vmatpush1.msra.mxu0 0.0
        %2289 = vmatprep.subr.mxu0 0.0
        %2290 = vmatpush1.msra.mxu0 0.0
        %2291 = vmatprep.subr.mxu0 0.0
        %2292 = vmatpush1.msra.mxu0 0.0
        %2293 = vmatprep.subr.mxu0 0.0
        %2294 = vmatpush1.msra.mxu0 0.0
        %2295 = vmatprep.subr.mxu0 0.0
        %2296 = vmatpush1.msra.mxu0 0.0
        %2297 = vmatprep.subr.mxu0 0.0
        %2298 = vmatpush1.msra.mxu0 0.0
        %2299 = vmatprep.subr.mxu0 0.0
        %2300 = vmatpush1.msra.mxu0 0.0
        %2301 = vmatprep.subr.mxu0 0.0
        %2302 = vmatpush1.msra.mxu0 0.0
        %2303 = vmatprep.subr.mxu0 0.0
        %2304 = vmatpush1.msra.mxu0 0.0
        %2305 = vmatprep.subr.mxu0 0.0
        %2306 = vmatpush1.msra.mxu0 0.0
        %2307 = vmatprep.mubr.f32.mxu0 0.0
        %2308 = vmatmul.mubr.f32.gmra.mrb[0].mxu0 %v2241
        %v2309 = vpop.f32.mrb[0].mxu0
        %v2310 = vadd.f32 0.0, %v2309
        %v2311 = vpop.f32.mrb[0].mxu0
        %2312 = vdwg.mxu0
        %v2313 = vmul.f32 %v2310, 0.35355338
        %v2314 = vadd.f32 %v2313, %v630
        %v2315 = vsel %vm1012, %v2314, -inf
        %2316 = vmax.xlane.f32.xlu0 %v2315
        %v2317 = vpop.xlane.xlu0 %2316
        %v2318 = vsub.f32 %v2314, %v2317
        %v2319 = vmul.f32 %v2318, 1.442695
        %v2320 = vpow.pop %v2319
        %v2321 = vsel %vm1012, %v2320, 0.0
        %2322 = vadd.xlane.f32.xlu0 %v2321
        %v2323 = vpop.xlane.xlu0 %2322
        %v2324 = vrcp.pop %v2323
        %v2325 = vmul.f32 %v2320, %v2324
        %v2326 = vpack.c.bf16 %v2194, %v2194
        %v2327 = vpack.c.bf16 %v2325, %v2325
        %v2329 = vsel %vm1012, %v2326, 0
        %v2332 = vsel %vm1012, %v2327, 0
        %2334 = vmatprep.subr.bf16.mxu0 0
        %2335 = vmatpush1.bf16.xpose.msra.mxu0 %v2332
        %2336 = vmatprep.subr.bf16.mxu0 0
        %2337 = vmatpush1.bf16.xpose.msra.mxu0 0
        %2338 = vmatprep.subr.bf16.mxu0 0
        %2339 = vmatpush1.bf16.xpose.msra.mxu0 0
        %2340 = vmatprep.subr.bf16.mxu0 0
        %2341 = vmatpush1.bf16.xpose.msra.mxu0 0
        %2342 = vmatprep.subr.bf16.mxu0 0
        %2343 = vmatpush1.bf16.xpose.msra.mxu0 0
        %2344 = vmatprep.subr.bf16.mxu0 0
        %2345 = vmatpush1.bf16.xpose.msra.mxu0 0
        %2346 = vmatprep.subr.bf16.mxu0 0
        %2347 = vmatpush1.bf16.xpose.msra.mxu0 0
        %2348 = vmatprep.subr.bf16.mxu0 0
        %2349 = vmatpush1.bf16.xpose.msra.mxu0 0
        %2350 = vmatprep.subr.bf16.mxu0 0
        %2351 = vmatpush1.bf16.xpose.msra.mxu0 0
        %2352 = vmatprep.subr.bf16.mxu0 0
        %2353 = vmatpush1.bf16.xpose.msra.mxu0 0
        %2354 = vmatprep.subr.bf16.mxu0 0
        %2355 = vmatpush1.bf16.xpose.msra.mxu0 0
        %2356 = vmatprep.subr.bf16.mxu0 0
        %2357 = vmatpush1.bf16.xpose.msra.mxu0 0
        %2358 = vmatprep.subr.bf16.mxu0 0
        %2359 = vmatpush1.bf16.xpose.msra.mxu0 0
        %2360 = vmatprep.subr.bf16.mxu0 0
        %2361 = vmatpush1.bf16.xpose.msra.mxu0 0
        %2362 = vmatprep.subr.bf16.mxu0 0
        %2363 = vmatpush1.bf16.xpose.msra.mxu0 0
        %2364 = vmatprep.subr.bf16.mxu0 0
        %2365 = vmatpush1.bf16.xpose.msra.mxu0 0
        %2366 = vmatprep.mubr.bf16.mxu0 0
        %2367 = vmatmul.mubr.bf16.gmra.mrb[0].mxu0 %v2329
        %v2368 = vpop.f32.mrb[0].mxu0
        %v2369 = vadd.f32 0.0, %v2368
        %v2370 = vpop.f32.mrb[0].mxu0
        %v2371 = vpop.f32.mrb[0].mxu0
        %v2372 = vpop.f32.mrb[0].mxu0
        %2373 = vdwg.mxu0
        %2374 = vst.msk [vmem:[#allocation2] sm:$0xff] %vm1012, %v2369
        %2375 = vxpose.xlu0.b32.start [1/16] %v2165, 128
        %2376 = vxpose.xlu0.b32.cont [2/16] 0.0, 128
        %2377 = vxpose.xlu0.b32.cont [3/16] 0.0, 128
        %2378 = vxpose.xlu0.b32.cont [4/16] 0.0, 128
        %2379 = vxpose.xlu0.b32.cont [5/16] 0.0, 128
        %2380 = vxpose.xlu0.b32.cont [6/16] 0.0, 128
        %2381 = vxpose.xlu0.b32.cont [7/16] 0.0, 128
        %2382 = vxpose.xlu0.b32.cont [8/16] 0.0, 128
        %2383 = vxpose.xlu0.b32.cont [9/16] 0.0, 128
        %2384 = vxpose.xlu0.b32.cont [10/16] 0.0, 128
        %2385 = vxpose.xlu0.b32.cont [11/16] 0.0, 128
        %2386 = vxpose.xlu0.b32.cont [12/16] 0.0, 128
        %2387 = vxpose.xlu0.b32.cont [13/16] 0.0, 128
        %2388 = vxpose.xlu0.b32.cont [14/16] 0.0, 128
        %2389 = vxpose.xlu0.b32.cont [15/16] 0.0, 128
        %2390 = vxpose.xlu0.b32.end [16/16] 0.0, 128
        %v2391 = vpop.trf.xlu0
        %v2392 = vpop.trf.xlu0
        %v2393 = vpop.trf.xlu0
        %v2394 = vpop.trf.xlu0
        %v2395 = vpop.trf.xlu0
        %v2396 = vpop.trf.xlu0
        %v2397 = vpop.trf.xlu0
        %v2398 = vpop.trf.xlu0
        %v2399 = vpop.trf.xlu0
        %v2400 = vpop.trf.xlu0
        %v2401 = vpop.trf.xlu0
        %v2402 = vpop.trf.xlu0
        %v2403 = vpop.trf.xlu0
        %v2404 = vpop.trf.xlu0
        %v2405 = vpop.trf.xlu0
        %v2406 = vpop.trf.xlu0
        %v2408 = vsel %vm1012, %v2391, 0
        %2410 = vmatprep.subr.mxu0 0.0
        %2411 = vmatpush1.msra.mxu0 %v2181
        %2412 = vmatprep.subr.mxu0 0.0
        %2413 = vmatpush1.msra.mxu0 0.0
        %2414 = vmatprep.subr.mxu0 0.0
        %2415 = vmatpush1.msra.mxu0 0.0
        %2416 = vmatprep.subr.mxu0 0.0
        %2417 = vmatpush1.msra.mxu0 0.0
        %2418 = vmatprep.subr.mxu0 0.0
        %2419 = vmatpush1.msra.mxu0 0.0
        %2420 = vmatprep.subr.mxu0 0.0
        %2421 = vmatpush1.msra.mxu0 0.0
        %2422 = vmatprep.subr.mxu0 0.0
        %2423 = vmatpush1.msra.mxu0 0.0
        %2424 = vmatprep.subr.mxu0 0.0
        %2425 = vmatpush1.msra.mxu0 0.0
        %2426 = vmatprep.subr.mxu0 0.0
        %2427 = vmatpush1.msra.mxu0 0.0
        %2428 = vmatprep.subr.mxu0 0.0
        %2429 = vmatpush1.msra.mxu0 0.0
        %2430 = vmatprep.subr.mxu0 0.0
        %2431 = vmatpush1.msra.mxu0 0.0
        %2432 = vmatprep.subr.mxu0 0.0
        %2433 = vmatpush1.msra.mxu0 0.0
        %2434 = vmatprep.subr.mxu0 0.0
        %2435 = vmatpush1.msra.mxu0 0.0
        %2436 = vmatprep.subr.mxu0 0.0
        %2437 = vmatpush1.msra.mxu0 0.0
        %2438 = vmatprep.subr.mxu0 0.0
        %2439 = vmatpush1.msra.mxu0 0.0
        %2440 = vmatprep.subr.mxu0 0.0
        %2441 = vmatpush1.msra.mxu0 0.0
        %2442 = vmatprep.subr.mxu0 0.0
        %2443 = vmatpush1.msra.mxu0 0.0
        %2444 = vmatprep.subr.mxu0 0.0
        %2445 = vmatpush1.msra.mxu0 0.0
        %2446 = vmatprep.subr.mxu0 0.0
        %2447 = vmatpush1.msra.mxu0 0.0
        %2448 = vmatprep.subr.mxu0 0.0
        %2449 = vmatpush1.msra.mxu0 0.0
        %2450 = vmatprep.subr.mxu0 0.0
        %2451 = vmatpush1.msra.mxu0 0.0
        %2452 = vmatprep.subr.mxu0 0.0
        %2453 = vmatpush1.msra.mxu0 0.0
        %2454 = vmatprep.subr.mxu0 0.0
        %2455 = vmatpush1.msra.mxu0 0.0
        %2456 = vmatprep.subr.mxu0 0.0
        %2457 = vmatpush1.msra.mxu0 0.0
        %2458 = vmatprep.subr.mxu0 0.0
        %2459 = vmatpush1.msra.mxu0 0.0
        %2460 = vmatprep.subr.mxu0 0.0
        %2461 = vmatpush1.msra.mxu0 0.0
        %2462 = vmatprep.subr.mxu0 0.0
        %2463 = vmatpush1.msra.mxu0 0.0
        %2464 = vmatprep.subr.mxu0 0.0
        %2465 = vmatpush1.msra.mxu0 0.0
        %2466 = vmatprep.subr.mxu0 0.0
        %2467 = vmatpush1.msra.mxu0 0.0
        %2468 = vmatprep.subr.mxu0 0.0
        %2469 = vmatpush1.msra.mxu0 0.0
        %2470 = vmatprep.subr.mxu0 0.0
        %2471 = vmatpush1.msra.mxu0 0.0
        %2472 = vmatprep.subr.mxu0 0.0
        %2473 = vmatpush1.msra.mxu0 0.0
        %2474 = vmatprep.mubr.f32.mxu0 0.0
        %2475 = vmatmul.mubr.f32.gmra.mrb[0].mxu0 %v2408
        %v2476 = vpop.f32.mrb[0].mxu0
        %v2477 = vadd.f32 0.0, %v2476
        %v2478 = vpop.f32.mrb[0].mxu0
        %2479 = vdwg.mxu0
        %v2480 = vmul.f32 %v2477, 0.35355338
        %v2481 = vadd.f32 %v2480, %v630
        %v2482 = vsel %vm1012, %v2481, -inf
        %2483 = vmax.xlane.f32.xlu0 %v2482
        %v2484 = vpop.xlane.xlu0 %2483
        %v2485 = vsub.f32 %v2481, %v2484
        %v2486 = vmul.f32 %v2485, 1.442695
        %v2487 = vpow.pop %v2486
        %v2488 = vsel %vm1012, %v2487, 0.0
        %2489 = vadd.xlane.f32.xlu0 %v2488
        %v2490 = vpop.xlane.xlu0 %2489
        %v2491 = vrcp.pop %v2490
        %v2492 = vmul.f32 %v2487, %v2491
        %v2493 = vpack.c.bf16 %v2197, %v2197
        %v2494 = vpack.c.bf16 %v2492, %v2492
        %v2496 = vsel %vm1012, %v2493, 0
        %v2499 = vsel %vm1012, %v2494, 0
        %2501 = vmatprep.subr.bf16.mxu0 0
        %2502 = vmatpush1.bf16.xpose.msra.mxu0 %v2499
        %2503 = vmatprep.subr.bf16.mxu0 0
        %2504 = vmatpush1.bf16.xpose.msra.mxu0 0
        %2505 = vmatprep.subr.bf16.mxu0 0
        %2506 = vmatpush1.bf16.xpose.msra.mxu0 0
        %2507 = vmatprep.subr.bf16.mxu0 0
        %2508 = vmatpush1.bf16.xpose.msra.mxu0 0
        %2509 = vmatprep.subr.bf16.mxu0 0
        %2510 = vmatpush1.bf16.xpose.msra.mxu0 0
        %2511 = vmatprep.subr.bf16.mxu0 0
        %2512 = vmatpush1.bf16.xpose.msra.mxu0 0
        %2513 = vmatprep.subr.bf16.mxu0 0
        %2514 = vmatpush1.bf16.xpose.msra.mxu0 0
        %2515 = vmatprep.subr.bf16.mxu0 0
        %2516 = vmatpush1.bf16.xpose.msra.mxu0 0
        %2517 = vmatprep.subr.bf16.mxu0 0
        %2518 = vmatpush1.bf16.xpose.msra.mxu0 0
        %2519 = vmatprep.subr.bf16.mxu0 0
        %2520 = vmatpush1.bf16.xpose.msra.mxu0 0
        %2521 = vmatprep.subr.bf16.mxu0 0
        %2522 = vmatpush1.bf16.xpose.msra.mxu0 0
        %2523 = vmatprep.subr.bf16.mxu0 0
        %2524 = vmatpush1.bf16.xpose.msra.mxu0 0
        %2525 = vmatprep.subr.bf16.mxu0 0
        %2526 = vmatpush1.bf16.xpose.msra.mxu0 0
        %2527 = vmatprep.subr.bf16.mxu0 0
        %2528 = vmatpush1.bf16.xpose.msra.mxu0 0
        %2529 = vmatprep.subr.bf16.mxu0 0
        %2530 = vmatpush1.bf16.xpose.msra.mxu0 0
        %2531 = vmatprep.subr.bf16.mxu0 0
        %2532 = vmatpush1.bf16.xpose.msra.mxu0 0
        %2533 = vmatprep.mubr.bf16.mxu0 0
        %2534 = vmatmul.mubr.bf16.gmra.mrb[0].mxu0 %v2496
        %v2535 = vpop.f32.mrb[0].mxu0
        %v2536 = vadd.f32 0.0, %v2535
        %v2537 = vpop.f32.mrb[0].mxu0
        %v2538 = vpop.f32.mrb[0].mxu0
        %v2539 = vpop.f32.mrb[0].mxu0
        %2540 = vdwg.mxu0
        %2541 = vst.msk [vmem:[#allocation2 + $0x8] sm:$0xff] %vm1012, %v2536
        %2542 = vxpose.xlu0.b32.start [1/16] %v2170, 128
        %2543 = vxpose.xlu0.b32.cont [2/16] 0.0, 128
        %2544 = vxpose.xlu0.b32.cont [3/16] 0.0, 128
        %2545 = vxpose.xlu0.b32.cont [4/16] 0.0, 128
        %2546 = vxpose.xlu0.b32.cont [5/16] 0.0, 128
        %2547 = vxpose.xlu0.b32.cont [6/16] 0.0, 128
        %2548 = vxpose.xlu0.b32.cont [7/16] 0.0, 128
        %2549 = vxpose.xlu0.b32.cont [8/16] 0.0, 128
        %2550 = vxpose.xlu0.b32.cont [9/16] 0.0, 128
        %2551 = vxpose.xlu0.b32.cont [10/16] 0.0, 128
        %2552 = vxpose.xlu0.b32.cont [11/16] 0.0, 128
        %2553 = vxpose.xlu0.b32.cont [12/16] 0.0, 128
        %2554 = vxpose.xlu0.b32.cont [13/16] 0.0, 128
        %2555 = vxpose.xlu0.b32.cont [14/16] 0.0, 128
        %2556 = vxpose.xlu0.b32.cont [15/16] 0.0, 128
        %2557 = vxpose.xlu0.b32.end [16/16] 0.0, 128
        %v2558 = vpop.trf.xlu0
        %v2559 = vpop.trf.xlu0
        %v2560 = vpop.trf.xlu0
        %v2561 = vpop.trf.xlu0
        %v2562 = vpop.trf.xlu0
        %v2563 = vpop.trf.xlu0
        %v2564 = vpop.trf.xlu0
        %v2565 = vpop.trf.xlu0
        %v2566 = vpop.trf.xlu0
        %v2567 = vpop.trf.xlu0
        %v2568 = vpop.trf.xlu0
        %v2569 = vpop.trf.xlu0
        %v2570 = vpop.trf.xlu0
        %v2571 = vpop.trf.xlu0
        %v2572 = vpop.trf.xlu0
        %v2573 = vpop.trf.xlu0
        %v2575 = vsel %vm1012, %v2558, 0
        %2577 = vmatprep.subr.mxu0 0.0
        %2578 = vmatpush1.msra.mxu0 %v2186
        %2579 = vmatprep.subr.mxu0 0.0
        %2580 = vmatpush1.msra.mxu0 0.0
        %2581 = vmatprep.subr.mxu0 0.0
        %2582 = vmatpush1.msra.mxu0 0.0
        %2583 = vmatprep.subr.mxu0 0.0
        %2584 = vmatpush1.msra.mxu0 0.0
        %2585 = vmatprep.subr.mxu0 0.0
        %2586 = vmatpush1.msra.mxu0 0.0
        %2587 = vmatprep.subr.mxu0 0.0
        %2588 = vmatpush1.msra.mxu0 0.0
        %2589 = vmatprep.subr.mxu0 0.0
        %2590 = vmatpush1.msra.mxu0 0.0
        %2591 = vmatprep.subr.mxu0 0.0
        %2592 = vmatpush1.msra.mxu0 0.0
        %2593 = vmatprep.subr.mxu0 0.0
        %2594 = vmatpush1.msra.mxu0 0.0
        %2595 = vmatprep.subr.mxu0 0.0
        %2596 = vmatpush1.msra.mxu0 0.0
        %2597 = vmatprep.subr.mxu0 0.0
        %2598 = vmatpush1.msra.mxu0 0.0
        %2599 = vmatprep.subr.mxu0 0.0
        %2600 = vmatpush1.msra.mxu0 0.0
        %2601 = vmatprep.subr.mxu0 0.0
        %2602 = vmatpush1.msra.mxu0 0.0
        %2603 = vmatprep.subr.mxu0 0.0
        %2604 = vmatpush1.msra.mxu0 0.0
        %2605 = vmatprep.subr.mxu0 0.0
        %2606 = vmatpush1.msra.mxu0 0.0
        %2607 = vmatprep.subr.mxu0 0.0
        %2608 = vmatpush1.msra.mxu0 0.0
        %2609 = vmatprep.subr.mxu0 0.0
        %2610 = vmatpush1.msra.mxu0 0.0
        %2611 = vmatprep.subr.mxu0 0.0
        %2612 = vmatpush1.msra.mxu0 0.0
        %2613 = vmatprep.subr.mxu0 0.0
        %2614 = vmatpush1.msra.mxu0 0.0
        %2615 = vmatprep.subr.mxu0 0.0
        %2616 = vmatpush1.msra.mxu0 0.0
        %2617 = vmatprep.subr.mxu0 0.0
        %2618 = vmatpush1.msra.mxu0 0.0
        %2619 = vmatprep.subr.mxu0 0.0
        %2620 = vmatpush1.msra.mxu0 0.0
        %2621 = vmatprep.subr.mxu0 0.0
        %2622 = vmatpush1.msra.mxu0 0.0
        %2623 = vmatprep.subr.mxu0 0.0
        %2624 = vmatpush1.msra.mxu0 0.0
        %2625 = vmatprep.subr.mxu0 0.0
        %2626 = vmatpush1.msra.mxu0 0.0
        %2627 = vmatprep.subr.mxu0 0.0
        %2628 = vmatpush1.msra.mxu0 0.0
        %2629 = vmatprep.subr.mxu0 0.0
        %2630 = vmatpush1.msra.mxu0 0.0
        %2631 = vmatprep.subr.mxu0 0.0
        %2632 = vmatpush1.msra.mxu0 0.0
        %2633 = vmatprep.subr.mxu0 0.0
        %2634 = vmatpush1.msra.mxu0 0.0
        %2635 = vmatprep.subr.mxu0 0.0
        %2636 = vmatpush1.msra.mxu0 0.0
        %2637 = vmatprep.subr.mxu0 0.0
        %2638 = vmatpush1.msra.mxu0 0.0
        %2639 = vmatprep.subr.mxu0 0.0
        %2640 = vmatpush1.msra.mxu0 0.0
        %2641 = vmatprep.mubr.f32.mxu0 0.0
        %2642 = vmatmul.mubr.f32.gmra.mrb[0].mxu0 %v2575
        %v2643 = vpop.f32.mrb[0].mxu0
        %v2644 = vadd.f32 0.0, %v2643
        %v2645 = vpop.f32.mrb[0].mxu0
        %2646 = vdwg.mxu0
        %v2647 = vmul.f32 %v2644, 0.35355338
        %v2648 = vadd.f32 %v2647, %v630
        %v2649 = vsel %vm1012, %v2648, -inf
        %2650 = vmax.xlane.f32.xlu0 %v2649
        %v2651 = vpop.xlane.xlu0 %2650
        %v2652 = vsub.f32 %v2648, %v2651
        %v2653 = vmul.f32 %v2652, 1.442695
        %v2654 = vpow.pop %v2653
        %v2655 = vsel %vm1012, %v2654, 0.0
        %2656 = vadd.xlane.f32.xlu0 %v2655
        %v2657 = vpop.xlane.xlu0 %2656
        %v2658 = vrcp.pop %v2657
        %v2659 = vmul.f32 %v2654, %v2658
        %v2660 = vpack.c.bf16 %v2202, %v2202
        %v2661 = vpack.c.bf16 %v2659, %v2659
        %v2663 = vsel %vm1012, %v2660, 0
        %v2666 = vsel %vm1012, %v2661, 0
        %2668 = vmatprep.subr.bf16.mxu0 0
        %2669 = vmatpush1.bf16.xpose.msra.mxu0 %v2666
        %2670 = vmatprep.subr.bf16.mxu0 0
        %2671 = vmatpush1.bf16.xpose.msra.mxu0 0
        %2672 = vmatprep.subr.bf16.mxu0 0
        %2673 = vmatpush1.bf16.xpose.msra.mxu0 0
        %2674 = vmatprep.subr.bf16.mxu0 0
        %2675 = vmatpush1.bf16.xpose.msra.mxu0 0
        %2676 = vmatprep.subr.bf16.mxu0 0
        %2677 = vmatpush1.bf16.xpose.msra.mxu0 0
        %2678 = vmatprep.subr.bf16.mxu0 0
        %2679 = vmatpush1.bf16.xpose.msra.mxu0 0
        %2680 = vmatprep.subr.bf16.mxu0 0
        %2681 = vmatpush1.bf16.xpose.msra.mxu0 0
        %2682 = vmatprep.subr.bf16.mxu0 0
        %2683 = vmatpush1.bf16.xpose.msra.mxu0 0
        %2684 = vmatprep.subr.bf16.mxu0 0
        %2685 = vmatpush1.bf16.xpose.msra.mxu0 0
        %2686 = vmatprep.subr.bf16.mxu0 0
        %2687 = vmatpush1.bf16.xpose.msra.mxu0 0
        %2688 = vmatprep.subr.bf16.mxu0 0
        %2689 = vmatpush1.bf16.xpose.msra.mxu0 0
        %2690 = vmatprep.subr.bf16.mxu0 0
        %2691 = vmatpush1.bf16.xpose.msra.mxu0 0
        %2692 = vmatprep.subr.bf16.mxu0 0
        %2693 = vmatpush1.bf16.xpose.msra.mxu0 0
        %2694 = vmatprep.subr.bf16.mxu0 0
        %2695 = vmatpush1.bf16.xpose.msra.mxu0 0
        %2696 = vmatprep.subr.bf16.mxu0 0
        %2697 = vmatpush1.bf16.xpose.msra.mxu0 0
        %2698 = vmatprep.subr.bf16.mxu0 0
        %2699 = vmatpush1.bf16.xpose.msra.mxu0 0
        %2700 = vmatprep.mubr.bf16.mxu0 0
        %2701 = vmatmul.mubr.bf16.gmra.mrb[0].mxu0 %v2663
        %v2702 = vpop.f32.mrb[0].mxu0
        %v2703 = vadd.f32 0.0, %v2702
        %v2704 = vpop.f32.mrb[0].mxu0
        %v2705 = vpop.f32.mrb[0].mxu0
        %v2706 = vpop.f32.mrb[0].mxu0
        %2707 = vdwg.mxu0
        %2708 = vst.msk [vmem:[#allocation2 + $0x10] sm:$0xff] %vm1012, %v2703
        %2709 = vxpose.xlu0.b32.start [1/16] %v2173, 128
        %2710 = vxpose.xlu0.b32.cont [2/16] 0.0, 128
        %2711 = vxpose.xlu0.b32.cont [3/16] 0.0, 128
        %2712 = vxpose.xlu0.b32.cont [4/16] 0.0, 128
        %2713 = vxpose.xlu0.b32.cont [5/16] 0.0, 128
        %2714 = vxpose.xlu0.b32.cont [6/16] 0.0, 128
        %2715 = vxpose.xlu0.b32.cont [7/16] 0.0, 128
        %2716 = vxpose.xlu0.b32.cont [8/16] 0.0, 128
        %2717 = vxpose.xlu0.b32.cont [9/16] 0.0, 128
        %2718 = vxpose.xlu0.b32.cont [10/16] 0.0, 128
        %2719 = vxpose.xlu0.b32.cont [11/16] 0.0, 128
        %2720 = vxpose.xlu0.b32.cont [12/16] 0.0, 128
        %2721 = vxpose.xlu0.b32.cont [13/16] 0.0, 128
        %2722 = vxpose.xlu0.b32.cont [14/16] 0.0, 128
        %2723 = vxpose.xlu0.b32.cont [15/16] 0.0, 128
        %2724 = vxpose.xlu0.b32.end [16/16] 0.0, 128
        %v2725 = vpop.trf.xlu0
        %v2726 = vpop.trf.xlu0
        %v2727 = vpop.trf.xlu0
        %v2728 = vpop.trf.xlu0
        %v2729 = vpop.trf.xlu0
        %v2730 = vpop.trf.xlu0
        %v2731 = vpop.trf.xlu0
        %v2732 = vpop.trf.xlu0
        %v2733 = vpop.trf.xlu0
        %v2734 = vpop.trf.xlu0
        %v2735 = vpop.trf.xlu0
        %v2736 = vpop.trf.xlu0
        %v2737 = vpop.trf.xlu0
        %v2738 = vpop.trf.xlu0
        %v2739 = vpop.trf.xlu0
        %v2740 = vpop.trf.xlu0
        %v2742 = vsel %vm1012, %v2725, 0
        %2744 = vmatprep.subr.mxu0 0.0
        %2745 = vmatpush1.msra.mxu0 %v2189
        %2746 = vmatprep.subr.mxu0 0.0
        %2747 = vmatpush1.msra.mxu0 0.0
        %2748 = vmatprep.subr.mxu0 0.0
        %2749 = vmatpush1.msra.mxu0 0.0
        %2750 = vmatprep.subr.mxu0 0.0
        %2751 = vmatpush1.msra.mxu0 0.0
        %2752 = vmatprep.subr.mxu0 0.0
        %2753 = vmatpush1.msra.mxu0 0.0
        %2754 = vmatprep.subr.mxu0 0.0
        %2755 = vmatpush1.msra.mxu0 0.0
        %2756 = vmatprep.subr.mxu0 0.0
        %2757 = vmatpush1.msra.mxu0 0.0
        %2758 = vmatprep.subr.mxu0 0.0
        %2759 = vmatpush1.msra.mxu0 0.0
        %2760 = vmatprep.subr.mxu0 0.0
        %2761 = vmatpush1.msra.mxu0 0.0
        %2762 = vmatprep.subr.mxu0 0.0
        %2763 = vmatpush1.msra.mxu0 0.0
        %2764 = vmatprep.subr.mxu0 0.0
        %2765 = vmatpush1.msra.mxu0 0.0
        %2766 = vmatprep.subr.mxu0 0.0
        %2767 = vmatpush1.msra.mxu0 0.0
        %2768 = vmatprep.subr.mxu0 0.0
        %2769 = vmatpush1.msra.mxu0 0.0
        %2770 = vmatprep.subr.mxu0 0.0
        %2771 = vmatpush1.msra.mxu0 0.0
        %2772 = vmatprep.subr.mxu0 0.0
        %2773 = vmatpush1.msra.mxu0 0.0
        %2774 = vmatprep.subr.mxu0 0.0
        %2775 = vmatpush1.msra.mxu0 0.0
        %2776 = vmatprep.subr.mxu0 0.0
        %2777 = vmatpush1.msra.mxu0 0.0
        %2778 = vmatprep.subr.mxu0 0.0
        %2779 = vmatpush1.msra.mxu0 0.0
        %2780 = vmatprep.subr.mxu0 0.0
        %2781 = vmatpush1.msra.mxu0 0.0
        %2782 = vmatprep.subr.mxu0 0.0
        %2783 = vmatpush1.msra.mxu0 0.0
        %2784 = vmatprep.subr.mxu0 0.0
        %2785 = vmatpush1.msra.mxu0 0.0
        %2786 = vmatprep.subr.mxu0 0.0
        %2787 = vmatpush1.msra.mxu0 0.0
        %2788 = vmatprep.subr.mxu0 0.0
        %2789 = vmatpush1.msra.mxu0 0.0
        %2790 = vmatprep.subr.mxu0 0.0
        %2791 = vmatpush1.msra.mxu0 0.0
        %2792 = vmatprep.subr.mxu0 0.0
        %2793 = vmatpush1.msra.mxu0 0.0
        %2794 = vmatprep.subr.mxu0 0.0
        %2795 = vmatpush1.msra.mxu0 0.0
        %2796 = vmatprep.subr.mxu0 0.0
        %2797 = vmatpush1.msra.mxu0 0.0
        %2798 = vmatprep.subr.mxu0 0.0
        %2799 = vmatpush1.msra.mxu0 0.0
        %2800 = vmatprep.subr.mxu0 0.0
        %2801 = vmatpush1.msra.mxu0 0.0
        %2802 = vmatprep.subr.mxu0 0.0
        %2803 = vmatpush1.msra.mxu0 0.0
        %2804 = vmatprep.subr.mxu0 0.0
        %2805 = vmatpush1.msra.mxu0 0.0
        %2806 = vmatprep.subr.mxu0 0.0
        %2807 = vmatpush1.msra.mxu0 0.0
        %2808 = vmatprep.mubr.f32.mxu0 0.0
        %2809 = vmatmul.mubr.f32.gmra.mrb[0].mxu0 %v2742
        %v2810 = vpop.f32.mrb[0].mxu0
        %v2811 = vadd.f32 0.0, %v2810
        %v2812 = vpop.f32.mrb[0].mxu0
        %2813 = vdwg.mxu0
        %v2814 = vmul.f32 %v2811, 0.35355338
        %v2815 = vadd.f32 %v2814, %v630
        %v2816 = vsel %vm1012, %v2815, -inf
        %2817 = vmax.xlane.f32.xlu0 %v2816
        %v2818 = vpop.xlane.xlu0 %2817
        %v2819 = vsub.f32 %v2815, %v2818
        %v2820 = vmul.f32 %v2819, 1.442695
        %v2821 = vpow.pop %v2820
        %v2822 = vsel %vm1012, %v2821, 0.0
        %2823 = vadd.xlane.f32.xlu0 %v2822
        %v2824 = vpop.xlane.xlu0 %2823
        %v2825 = vrcp.pop %v2824
        %v2826 = vmul.f32 %v2821, %v2825
        %v2827 = vpack.c.bf16 %v2205, %v2205
        %v2828 = vpack.c.bf16 %v2826, %v2826
        %v2830 = vsel %vm1012, %v2827, 0
        %v2833 = vsel %vm1012, %v2828, 0
        %2835 = vmatprep.subr.bf16.mxu0 0
        %2836 = vmatpush1.bf16.xpose.msra.mxu0 %v2833
        %2837 = vmatprep.subr.bf16.mxu0 0
        %2838 = vmatpush1.bf16.xpose.msra.mxu0 0
        %2839 = vmatprep.subr.bf16.mxu0 0
        %2840 = vmatpush1.bf16.xpose.msra.mxu0 0
        %2841 = vmatprep.subr.bf16.mxu0 0
        %2842 = vmatpush1.bf16.xpose.msra.mxu0 0
        %2843 = vmatprep.subr.bf16.mxu0 0
        %2844 = vmatpush1.bf16.xpose.msra.mxu0 0
        %2845 = vmatprep.subr.bf16.mxu0 0
        %2846 = vmatpush1.bf16.xpose.msra.mxu0 0
        %2847 = vmatprep.subr.bf16.mxu0 0
        %2848 = vmatpush1.bf16.xpose.msra.mxu0 0
        %2849 = vmatprep.subr.bf16.mxu0 0
        %2850 = vmatpush1.bf16.xpose.msra.mxu0 0
        %2851 = vmatprep.subr.bf16.mxu0 0
        %2852 = vmatpush1.bf16.xpose.msra.mxu0 0
        %2853 = vmatprep.subr.bf16.mxu0 0
        %2854 = vmatpush1.bf16.xpose.msra.mxu0 0
        %2855 = vmatprep.subr.bf16.mxu0 0
        %2856 = vmatpush1.bf16.xpose.msra.mxu0 0
        %2857 = vmatprep.subr.bf16.mxu0 0
        %2858 = vmatpush1.bf16.xpose.msra.mxu0 0
        %2859 = vmatprep.subr.bf16.mxu0 0
        %2860 = vmatpush1.bf16.xpose.msra.mxu0 0
        %2861 = vmatprep.subr.bf16.mxu0 0
        %2862 = vmatpush1.bf16.xpose.msra.mxu0 0
        %2863 = vmatprep.subr.bf16.mxu0 0
        %2864 = vmatpush1.bf16.xpose.msra.mxu0 0
        %2865 = vmatprep.subr.bf16.mxu0 0
        %2866 = vmatpush1.bf16.xpose.msra.mxu0 0
        %2867 = vmatprep.mubr.bf16.mxu0 0
        %2868 = vmatmul.mubr.bf16.gmra.mrb[0].mxu0 %v2830
        %v2869 = vpop.f32.mrb[0].mxu0
        %v2870 = vadd.f32 0.0, %v2869
        %v2871 = vpop.f32.mrb[0].mxu0
        %v2872 = vpop.f32.mrb[0].mxu0
        %v2873 = vpop.f32.mrb[0].mxu0
        %2874 = vdwg.mxu0
        %2875 = vst.msk [vmem:[#allocation2 + $0x18] sm:$0xff] %vm1012, %v2870
        %v2876 = vld [vmem:[#allocation2] sm:$0xff]
        %v2877 = vld [vmem:[#allocation2 + $0x8] sm:$0xff]
        %v2878 = vld [vmem:[#allocation2 + $0x10] sm:$0xff]
        %v2879 = vld [vmem:[#allocation2 + $0x18] sm:$0xff]
        %s2880 = scalar_lea.vmem %s9, 32
        %v2881 = vld [vmem:[%s2880] sm:$0xff]
        %v2882 = vld [vmem:[%s2880 + $0x8] sm:$0xff]
        %v2883 = vld [vmem:[%s2880 + $0x10] sm:$0xff]
        %v2884 = vld [vmem:[%s2880 + $0x18] sm:$0xff]
        %s2885 = scalar_lea.vmem %s10, 1
        %v2886 = vld [vmem:[%s2885] sm:$0x1]
        %v2888 = vlaneseq
        %v2889 = vshrl.u32 %v2888, 7
        %v2890 = vsub.s32 0, %v2889
        %v2891 = vrot.slane %v2886, %v2890
        %2893 = vxpose.xlu0.b32.start [1/16] %v2876, 128
        %2894 = vxpose.xlu0.b32.cont [2/16] %v2877, 128
        %2895 = vxpose.xlu0.b32.cont [3/16] %v2878, 128
        %2896 = vxpose.xlu0.b32.cont [4/16] %v2879, 128
        %2897 = vxpose.xlu0.b32.cont [5/16] 0.0, 128
        %2898 = vxpose.xlu0.b32.cont [6/16] 0.0, 128
        %2899 = vxpose.xlu0.b32.cont [7/16] 0.0, 128
        %2900 = vxpose.xlu0.b32.cont [8/16] 0.0, 128
        %2901 = vxpose.xlu0.b32.cont [9/16] 0.0, 128
        %2902 = vxpose.xlu0.b32.cont [10/16] 0.0, 128
        %2903 = vxpose.xlu0.b32.cont [11/16] 0.0, 128
        %2904 = vxpose.xlu0.b32.cont [12/16] 0.0, 128
        %2905 = vxpose.xlu0.b32.cont [13/16] 0.0, 128
        %2906 = vxpose.xlu0.b32.cont [14/16] 0.0, 128
        %2907 = vxpose.xlu0.b32.cont [15/16] 0.0, 128
        %2908 = vxpose.xlu0.b32.end [16/16] 0.0, 128
        %v2909 = vpop.trf.xlu0
        %v2910 = vpop.trf.xlu0
        %v2911 = vpop.trf.xlu0
        %v2912 = vpop.trf.xlu0
        %v2913 = vpop.trf.xlu0
        %v2914 = vpop.trf.xlu0
        %v2915 = vpop.trf.xlu0
        %v2916 = vpop.trf.xlu0
        %v2917 = vpop.trf.xlu0
        %v2918 = vpop.trf.xlu0
        %v2919 = vpop.trf.xlu0
        %v2920 = vpop.trf.xlu0
        %v2921 = vpop.trf.xlu0
        %v2922 = vpop.trf.xlu0
        %v2923 = vpop.trf.xlu0
        %v2924 = vpop.trf.xlu0
        %v2926 = vsel %vm734, %v2909, 0
        %2928 = vmatprep.subr.mxu0 0.0
        %2929 = vmatpush1.msra.mxu0 %v2881
        %2930 = vmatprep.subr.mxu0 0.0
        %2931 = vmatpush1.msra.mxu0 %v2882
        %2932 = vmatprep.subr.mxu0 0.0
        %2933 = vmatpush1.msra.mxu0 %v2883
        %2934 = vmatprep.subr.mxu0 0.0
        %2935 = vmatpush1.msra.mxu0 %v2884
        %2936 = vmatprep.subr.mxu0 0.0
        %2937 = vmatpush1.msra.mxu0 0.0
        %2938 = vmatprep.subr.mxu0 0.0
        %2939 = vmatpush1.msra.mxu0 0.0
        %2940 = vmatprep.subr.mxu0 0.0
        %2941 = vmatpush1.msra.mxu0 0.0
        %2942 = vmatprep.subr.mxu0 0.0
        %2943 = vmatpush1.msra.mxu0 0.0
        %2944 = vmatprep.subr.mxu0 0.0
        %2945 = vmatpush1.msra.mxu0 0.0
        %2946 = vmatprep.subr.mxu0 0.0
        %2947 = vmatpush1.msra.mxu0 0.0
        %2948 = vmatprep.subr.mxu0 0.0
        %2949 = vmatpush1.msra.mxu0 0.0
        %2950 = vmatprep.subr.mxu0 0.0
        %2951 = vmatpush1.msra.mxu0 0.0
        %2952 = vmatprep.subr.mxu0 0.0
        %2953 = vmatpush1.msra.mxu0 0.0
        %2954 = vmatprep.subr.mxu0 0.0
        %2955 = vmatpush1.msra.mxu0 0.0
        %2956 = vmatprep.subr.mxu0 0.0
        %2957 = vmatpush1.msra.mxu0 0.0
        %2958 = vmatprep.subr.mxu0 0.0
        %2959 = vmatpush1.msra.mxu0 0.0
        %2960 = vmatprep.subr.mxu0 0.0
        %2961 = vmatpush1.msra.mxu0 0.0
        %2962 = vmatprep.subr.mxu0 0.0
        %2963 = vmatpush1.msra.mxu0 0.0
        %2964 = vmatprep.subr.mxu0 0.0
        %2965 = vmatpush1.msra.mxu0 0.0
        %2966 = vmatprep.subr.mxu0 0.0
        %2967 = vmatpush1.msra.mxu0 0.0
        %2968 = vmatprep.subr.mxu0 0.0
        %2969 = vmatpush1.msra.mxu0 0.0
        %2970 = vmatprep.subr.mxu0 0.0
        %2971 = vmatpush1.msra.mxu0 0.0
        %2972 = vmatprep.subr.mxu0 0.0
        %2973 = vmatpush1.msra.mxu0 0.0
        %2974 = vmatprep.subr.mxu0 0.0
        %2975 = vmatpush1.msra.mxu0 0.0
        %2976 = vmatprep.subr.mxu0 0.0
        %2977 = vmatpush1.msra.mxu0 0.0
        %2978 = vmatprep.subr.mxu0 0.0
        %2979 = vmatpush1.msra.mxu0 0.0
        %2980 = vmatprep.subr.mxu0 0.0
        %2981 = vmatpush1.msra.mxu0 0.0
        %2982 = vmatprep.subr.mxu0 0.0
        %2983 = vmatpush1.msra.mxu0 0.0
        %2984 = vmatprep.subr.mxu0 0.0
        %2985 = vmatpush1.msra.mxu0 0.0
        %2986 = vmatprep.subr.mxu0 0.0
        %2987 = vmatpush1.msra.mxu0 0.0
        %2988 = vmatprep.subr.mxu0 0.0
        %2989 = vmatpush1.msra.mxu0 0.0
        %2990 = vmatprep.subr.mxu0 0.0
        %2991 = vmatpush1.msra.mxu0 0.0
        %2992 = vmatprep.mubr.f32.mxu0 0.0
        %2993 = vmatmul.mubr.f32.gmra.mrb[0].mxu0 %v2926
        %v2994 = vpop.f32.mrb[0].mxu0
        %v2995 = vadd.f32 %v2891, %v2994
        %v2996 = vpop.f32.mrb[0].mxu0
        %2997 = vdwg.mxu0
        %v2998 = vadd.f32 %v2995, %v1988
        %s2999 = scalar_lea.vmem %s11, 1
        %v3000 = vld [vmem:[%s2999] sm:$0x1]
        %s3001 = scalar_lea.vmem %s12, 1
        %v3002 = vld [vmem:[%s3001] sm:$0x1]
        %v3003 = vsel %vm734, %v2998, 0.0
        %3004 = vadd.xlane.f32.xlu0 %v3003
        %v3005 = vpop.xlane.xlu0 %3004
        %v3006 = vmul.f32 %v3005, %v738
        %v3007 = vsub.f32 %v2998, %v3006
        %v3008 = vmul.f32 %v3007, %v3007
        %v3009 = vsel %vm734, %v3008, 0.0
        %3010 = vadd.xlane.f32.xlu0 %v3009
        %v3011 = vpop.xlane.xlu0 %3010
        %v3012 = vmul.f32 %v3011, %v738
        %v3013 = vadd.f32 %v3012, 1e-12
        %v3014 = vrsqrt.pop %v3013
        %v3015 = vmul.f32 %v3007, %v3014
        %v3017 = vlaneseq
        %v3018 = vshrl.u32 %v3017, 7
        %v3019 = vsub.s32 0, %v3018
        %v3020 = vrot.slane %v3000, %v3019
        %v3022 = vmul.f32 %v3015, %v3020
        %v3024 = vlaneseq
        %v3025 = vshrl.u32 %v3024, 7
        %v3026 = vsub.s32 0, %v3025
        %v3027 = vrot.slane %v3002, %v3026
        %v3029 = vadd.f32 %v3022, %v3027
        %v3030 = vpack.c.bf16 %v3029, %v3029
        %s3031 = scalar_lea.vmem %s13, 16
        %v3032 = vld [vmem:[%s3031] sm:$0xf]
        %v3033 = vld [vmem:[%s3031 + $0x4] sm:$0xf]
        %v3034 = vld [vmem:[%s3031 + $0x8] sm:$0xf]
        %v3035 = vld [vmem:[%s3031 + $0xc] sm:$0xf]
        %s3036 = scalar_lea.vmem %s14, 1
        %v3037 = vld [vmem:[%s3036] sm:$0x1]
        %v3039 = vlaneseq
        %v3040 = vshrl.u32 %v3039, 7
        %v3041 = vsub.s32 0, %v3040
        %v3042 = vrot.slane %v3037, %v3041
        %v3048 = vunpack.c.l.b16 %v3032
        %v3049 = vunpack.c.l.b16 %v3033
        %v3050 = vunpack.c.l.b16 %v3034
        %v3051 = vunpack.c.l.b16 %v3035
        %v3052 = vpack.c.b16 %v3049, %v3048
        %v3053 = vpack.c.b16 %v3051, %v3050
        %v3057 = vsel %vm734, %v3030, 0
        %3059 = vmatprep.subr.bf16.mxu0 0
        %3060 = vmatpush1.bf16.msra.mxu0 %v3052
        %3061 = vmatprep.subr.bf16.mxu0 0
        %3062 = vmatpush1.bf16.msra.mxu0 %v3053
        %3063 = vmatprep.subr.bf16.mxu0 0
        %3064 = vmatpush1.bf16.msra.mxu0 0
        %3065 = vmatprep.subr.bf16.mxu0 0
        %3066 = vmatpush1.bf16.msra.mxu0 0
        %3067 = vmatprep.subr.bf16.mxu0 0
        %3068 = vmatpush1.bf16.msra.mxu0 0
        %3069 = vmatprep.subr.bf16.mxu0 0
        %3070 = vmatpush1.bf16.msra.mxu0 0
        %3071 = vmatprep.subr.bf16.mxu0 0
        %3072 = vmatpush1.bf16.msra.mxu0 0
        %3073 = vmatprep.subr.bf16.mxu0 0
        %3074 = vmatpush1.bf16.msra.mxu0 0
        %3075 = vmatprep.subr.bf16.mxu0 0
        %3076 = vmatpush1.bf16.msra.mxu0 0
        %3077 = vmatprep.subr.bf16.mxu0 0
        %3078 = vmatpush1.bf16.msra.mxu0 0
        %3079 = vmatprep.subr.bf16.mxu0 0
        %3080 = vmatpush1.bf16.msra.mxu0 0
        %3081 = vmatprep.subr.bf16.mxu0 0
        %3082 = vmatpush1.bf16.msra.mxu0 0
        %3083 = vmatprep.subr.bf16.mxu0 0
        %3084 = vmatpush1.bf16.msra.mxu0 0
        %3085 = vmatprep.subr.bf16.mxu0 0
        %3086 = vmatpush1.bf16.msra.mxu0 0
        %3087 = vmatprep.subr.bf16.mxu0 0
        %3088 = vmatpush1.bf16.msra.mxu0 0
        %3089 = vmatprep.subr.bf16.mxu0 0
        %3090 = vmatpush1.bf16.msra.mxu0 0
        %3091 = vmatprep.mubr.bf16.mxu0 0
        %3092 = vmatmul.mubr.bf16.gmra.mrb[0].mxu0 %v3057
        %v3093 = vpop.f32.mrb[0].mxu0
        %v3094 = vadd.f32 %v3042, %v3093
        %v3095 = vpop.f32.mrb[0].mxu0
        %v3096 = vpop.f32.mrb[0].mxu0
        %v3097 = vpop.f32.mrb[0].mxu0
        %3098 = vdwg.mxu0
        %v3099 = vmul.f32 %v3094, 0.5
        %v3100 = vmul.f32 %v3094, 0.044715
        %v3101 = vmul.f32 %v3100, %v3094
        %v3102 = vmul.f32 %v3101, %v3094
        %v3103 = vadd.f32 %v3094, %v3102
        %v3104 = vmul.f32 %v3103, 0.7978846
        %v3105 = vtanh.pop %v3104
        %v3106 = vadd.f32 %v3105, 1.0
        %v3107 = vmul.f32 %v3099, %v3106
        %v3108 = vpack.c.bf16 %v3107, %v3107
        %s3109 = scalar_lea.vmem %s15, 32
        %v3110 = vld [vmem:[%s3109] sm:$0xf]
        %v3111 = vld [vmem:[%s3109 + $0x4] sm:$0xf]
        %v3112 = vld [vmem:[%s3109 + $0x8] sm:$0xf]
        %v3113 = vld [vmem:[%s3109 + $0xc] sm:$0xf]
        %v3114 = vld [vmem:[%s3109 + $0x10] sm:$0xf]
        %v3115 = vld [vmem:[%s3109 + $0x14] sm:$0xf]
        %v3116 = vld [vmem:[%s3109 + $0x18] sm:$0xf]
        %v3117 = vld [vmem:[%s3109 + $0x1c] sm:$0xf]
        %s3118 = scalar_lea.vmem %s16, 1
        %v3119 = vld [vmem:[%s3118] sm:$0x1]
        %v3121 = vlaneseq
        %v3122 = vshrl.u32 %v3121, 7
        %v3123 = vsub.s32 0, %v3122
        %v3124 = vrot.slane %v3119, %v3123
        %v3134 = vunpack.c.l.b16 %v3110
        %v3135 = vunpack.c.l.b16 %v3111
        %v3136 = vunpack.c.l.b16 %v3112
        %v3137 = vunpack.c.l.b16 %v3113
        %v3138 = vunpack.c.l.b16 %v3114
        %v3139 = vunpack.c.l.b16 %v3115
        %v3140 = vunpack.c.l.b16 %v3116
        %v3141 = vunpack.c.l.b16 %v3117
        %v3142 = vpack.c.b16 %v3135, %v3134
        %v3143 = vpack.c.b16 %v3137, %v3136
        %v3144 = vpack.c.b16 %v3139, %v3138
        %v3145 = vpack.c.b16 %v3141, %v3140
        %v3151 = vsel %vm1915, %v3108, 0
        %3153 = vmatprep.subr.bf16.mxu0 0
        %3154 = vmatpush1.bf16.msra.mxu0 %v3142
        %3155 = vmatprep.subr.bf16.mxu0 0
        %3156 = vmatpush1.bf16.msra.mxu0 %v3143
        %3157 = vmatprep.subr.bf16.mxu0 0
        %3158 = vmatpush1.bf16.msra.mxu0 %v3144
        %3159 = vmatprep.subr.bf16.mxu0 0
        %3160 = vmatpush1.bf16.msra.mxu0 %v3145
        %3161 = vmatprep.subr.bf16.mxu0 0
        %3162 = vmatpush1.bf16.msra.mxu0 0
        %3163 = vmatprep.subr.bf16.mxu0 0
        %3164 = vmatpush1.bf16.msra.mxu0 0
        %3165 = vmatprep.subr.bf16.mxu0 0
        %3166 = vmatpush1.bf16.msra.mxu0 0
        %3167 = vmatprep.subr.bf16.mxu0 0
        %3168 = vmatpush1.bf16.msra.mxu0 0
        %3169 = vmatprep.subr.bf16.mxu0 0
        %3170 = vmatpush1.bf16.msra.mxu0 0
        %3171 = vmatprep.subr.bf16.mxu0 0
        %3172 = vmatpush1.bf16.msra.mxu0 0
        %3173 = vmatprep.subr.bf16.mxu0 0
        %3174 = vmatpush1.bf16.msra.mxu0 0
        %3175 = vmatprep.subr.bf16.mxu0 0
        %3176 = vmatpush1.bf16.msra.mxu0 0
        %3177 = vmatprep.subr.bf16.mxu0 0
        %3178 = vmatpush1.bf16.msra.mxu0 0
        %3179 = vmatprep.subr.bf16.mxu0 0
        %3180 = vmatpush1.bf16.msra.mxu0 0
        %3181 = vmatprep.subr.bf16.mxu0 0
        %3182 = vmatpush1.bf16.msra.mxu0 0
        %3183 = vmatprep.subr.bf16.mxu0 0
        %3184 = vmatpush1.bf16.msra.mxu0 0
        %3185 = vmatprep.mubr.bf16.mxu0 0
        %3186 = vmatmul.mubr.bf16.gmra.mrb[0].mxu0 %v3151
        %v3187 = vpop.f32.mrb[0].mxu0
        %v3188 = vadd.f32 %v3124, %v3187
        %v3189 = vpop.f32.mrb[0].mxu0
        %v3190 = vpop.f32.mrb[0].mxu0
        %v3191 = vpop.f32.mrb[0].mxu0
        %3192 = vdwg.mxu0
        %v3193 = vadd.f32 %v3188, %v3029
        %s3194 = scalar_lea.vmem %s17, 1
        %v3195 = vld [vmem:[%s3194] sm:$0x1]
        %s3196 = scalar_lea.vmem %s18, 1
        %v3197 = vld [vmem:[%s3196] sm:$0x1]
        %v3198 = vsel %vm734, %v3193, 0.0
        %3199 = vadd.xlane.f32.xlu0 %v3198
        %v3200 = vpop.xlane.xlu0 %3199
        %v3201 = vmul.f32 %v3200, %v738
        %v3202 = vsub.f32 %v3193, %v3201
        %v3203 = vmul.f32 %v3202, %v3202
        %v3204 = vsel %vm734, %v3203, 0.0
        %3205 = vadd.xlane.f32.xlu0 %v3204
        %v3206 = vpop.xlane.xlu0 %3205
        %v3207 = vmul.f32 %v3206, %v738
        %v3208 = vadd.f32 %v3207, 1e-12
        %v3209 = vrsqrt.pop %v3208
        %v3210 = vmul.f32 %v3202, %v3209
        %v3212 = vlaneseq
        %v3213 = vshrl.u32 %v3212, 7
        %v3214 = vsub.s32 0, %v3213
        %v3215 = vrot.slane %v3195, %v3214
        %v3217 = vmul.f32 %v3210, %v3215
        %v3219 = vlaneseq
        %v3220 = vshrl.u32 %v3219, 7
        %v3221 = vsub.s32 0, %v3220
        %v3222 = vrot.slane %v3197, %v3221
        %v3224 = vadd.f32 %v3217, %v3222
        %vm3225 = vcmask 253952
        %3226 = vst.msk [vmem:[%s537] sm:$0x1] %vm3225, %v3224
        %s3227 = sand.u32 %s408, 1
        %s3228 = scalar_lea.sflag [#allocation7], %s3227
        %s3229 = sand.u32 %s408, 1
        %s3230 = scalar_lea.vmem [#allocation6], %s3229
        // Predicated region
        $region89: #{mybert_forward.1} parent=87 // pred_check
          %p3231 = pneg %p418
        $region90: #{mybert_forward.1} parent=87 // pred_check_branch
          %3233 = sbr.rel (%p3231) target = $region92
        $region91: #{mybert_forward.1} parent=87 // pred_region
          %s3235 = ssub.s32 16, 16
          %3236 = vsyncadd %s3228, %s3235
          %s3237 = smul.addr %s43, 16
          %s3238 = scalar_lea.hbm %s19, %s3237
          %s3240 = sshll.u32 %s3230, 4
          %s3241 = int_to_ptr.vmem [resolvable:$true] %s3240
          %3243 = dma.vmem_to_hbm [thread:$0]  %s3241, 16, %s3238, %s3228
        $region92: #{mybert_forward.1} parent=87 // pred_fallthru
          _
      $region88: #{mybert_forward.1} parent=5 // pred_fallthru
        _
      %p3244 = scmp.le.s32.totalorder 2, %s38
      // Predicated region
      $region93: #{mybert_forward.1} parent=5 // pred_check
        %p3245 = pneg %p3244
      $region94: #{mybert_forward.1} parent=5 // pred_check_branch
        %3247 = sbr.rel (%p3245) target = $region96
      $region95: #{mybert_forward.1} parent=5 // pred_region
        %s3248 = ssub.s32 %s38, 2
        // Predicated region
        $region97: #{mybert_forward.1} parent=95 // pred_check
          %p3249 = pneg %p424
        $region98: #{mybert_forward.1} parent=95 // pred_check_branch
          %3251 = sbr.rel (%p3249) target = $region100
        $region99: #{mybert_forward.1} parent=95 // pred_region
          %s3252 = sand.u32 %s409, 1
          %s3253 = scalar_lea.sflag [#allocation7], %s3252
          %s3254 = sand.u32 %s409, 1
          %s3255 = scalar_lea.vmem [#allocation6], %s3254
          %3256 = dma.done %s3253, 16
        $region100: #{mybert_forward.1} parent=95 // pred_fallthru
          _
      $region96: #{mybert_forward.1} parent=5 // pred_fallthru
        _
    $region6: #{mybert_forward.1} parent=1 // loop_footer
      %s42 = sadd.s32 1, %s38
    $region7: #{mybert_forward.1} parent=1 // loop_footer_branch
      %37 = sbr.rel target = $region3
    $region8: #{mybert_forward.1} parent=1 // loop_exit
      _
    %3257 = vsyncpa [#allocation7], 1
    %s3258 = scalar_lea.sflag [#allocation7], 1
    %3259 = vsyncpa %s3258, 1

</llo_original>
